<compile_context>
chip_gen: v7x
topology: tpu7x:2x2x1
jax: 0.10.0
libtpu: 0.0.40
codegen_flags: <defaults>
</compile_context>

<pallas_src>
import functools
import math

import numpy as np
import jax
import jax.numpy as jnp
from jax import lax
from jax.experimental import pallas as pl
from jax.experimental.pallas import tpu as pltpu


# ---------------------------------------------------------------------------
# Fused bottleneck kernel (one pallas_call per block, grid = batch)
# ---------------------------------------------------------------------------

def _bottleneck_kernel(*refs, p_out, width, downsample):
    if downsample:
        (x_ref, xs_ref, dm_ref, w1_ref, b1_ref, t_ref, w2_ref, b2_ref,
         w3_ref, b3_ref, cw1_ref, cw2_ref, ksa_ref, wd_ref, bd_ref,
         o_ref) = refs
    else:
        (x_ref, dm_ref, w1_ref, b1_ref, t_ref, w2_ref, b2_ref,
         w3_ref, b3_ref, cw1_ref, cw2_ref, ksa_ref, o_ref) = refs
        xs_ref = wd_ref = bd_ref = None

    bf16 = jnp.bfloat16
    f32 = jnp.float32

    x = x_ref[0]                                         # (HWin, Cin) f32

    # conv1 (1x1) + folded BN + ReLU
    h1 = jnp.dot(x.astype(bf16), w1_ref[...], preferred_element_type=f32)
    h1 = jnp.maximum(h1 + b1_ref[...], 0.0)              # (HWin, width)

    # conv2 (3x3, stride, pad=1): gather the 9 taps (incl. stride-decimation
    # and zero padding) with one 0/1 matmul, then accumulate per-tap channel
    # matmuls in f32.
    g = jnp.dot(t_ref[...], h1.astype(bf16),
                preferred_element_type=f32)              # (9*P, width)
    h2 = jnp.zeros((p_out, width), f32)
    for k in range(9):
        gk = g[k * p_out:(k + 1) * p_out, :]
        h2 = h2 + jnp.dot(gk.astype(bf16), w2_ref[k],
                          preferred_element_type=f32)
    h2 = jnp.maximum(h2 + b2_ref[...], 0.0)              # (P, width)

    # conv3 (1x1) + folded BN (no ReLU before attention)
    out = jnp.dot(h2.astype(bf16), w3_ref[...], preferred_element_type=f32)
    out = out + b3_ref[...]                              # (P, outc)

    # Channel attention: global avg/max pool + shared MLP + sigmoid gate.
    avg = jnp.mean(out, axis=0, keepdims=True)           # (1, outc)
    mx = jnp.max(out, axis=0, keepdims=True)             # (1, outc)

    def mlp(v):
        h = jnp.dot(v.astype(bf16), cw1_ref[...], preferred_element_type=f32)
        h = jnp.maximum(h, 0.0)
        return jnp.dot(h.astype(bf16), cw2_ref[...], preferred_element_type=f32)

    gate = jax.nn.sigmoid(mlp(avg) + mlp(mx))            # (1, outc)
    out_ca = out * gate                                  # (P, outc)

    # Spatial attention: per-pixel channel mean/max, then the 7x7 conv folded
    # into two PxP matrices (K[0] for the mean channel, K[1] for the max).
    ch_avg = jnp.mean(out_ca, axis=1, keepdims=True)     # (P, 1)
    ch_max = jnp.max(out_ca, axis=1, keepdims=True)      # (P, 1)
    sa_logit = (jnp.dot(ksa_ref[0], ch_avg.astype(bf16),
                        preferred_element_type=f32)
                + jnp.dot(ksa_ref[1], ch_max.astype(bf16),
                          preferred_element_type=f32))   # (P, 1)
    sa = jax.nn.sigmoid(sa_logit)

    dm = dm_ref[0]                                       # (P, 1)

    # Residual path (1x1 strided conv + folded BN when downsampling).
    if downsample:
        xs = xs_ref[0]                                   # (P, Cin)
        res = jnp.dot(xs.astype(bf16), wd_ref[...],
                      preferred_element_type=f32) + bd_ref[...]
    else:
        res = x                                          # (P, 2*outc)

    # cat([sigmoid(SA)*x, dis_map*x]) + residual, ReLU; one lane-dense store.
    y = jnp.concatenate([out_ca * sa, out_ca * dm], axis=-1) + res
    o_ref[0] = jnp.maximum(y, 0.0)


def _const_spec(w):
    nd = w.ndim
    return pl.BlockSpec(w.shape, lambda n: (0,) * nd)


def bottleneck_forward(x_nhwc, dm_nhwc, p):
    """One fused Pallas call for one Bottleneck block (NHWC in/out)."""
    N, H, W, Cin = x_nhwc.shape
    Ho, Wo = p["Ho"], p["Wo"]
    P = Ho * Wo
    C2 = 2 * p["outc"]

    x_flat = x_nhwc.reshape(N, H * W, Cin)
    dm_flat = nearest_resize(dm_nhwc, Ho, Wo).reshape(N, P, 1)

    args = [x_flat]
    in_specs = [pl.BlockSpec((1, H * W, Cin), lambda n: (n, 0, 0))]
    if p["downsample"]:
        ds = p["downstride"]
        xs_flat = x_nhwc[:, ::ds, ::ds, :].reshape(N, P, Cin)
        args.append(xs_flat)
        in_specs.append(pl.BlockSpec((1, P, Cin), lambda n: (n, 0, 0)))
    args.append(dm_flat)
    in_specs.append(pl.BlockSpec((1, P, 1), lambda n: (n, 0, 0)))

    wnames = ["w1", "b1", "T", "w2", "b2", "w3", "b3", "cw1", "cw2", "Ksa"]
    if p["downsample"]:
        wnames += ["wd", "bd"]
    for name in wnames:
        w = p[name]
        args.append(w)
        in_specs.append(_const_spec(w))

    kernel = functools.partial(_bottleneck_kernel, p_out=P, width=p["width"],
                               downsample=p["downsample"])
    out = pl.pallas_call(
        kernel,
        out_shape=jax.ShapeDtypeStruct((N, P, C2), jnp.float32),
        grid=(N,),
        in_specs=in_specs,
        out_specs=pl.BlockSpec((1, P, C2), lambda n: (n, 0, 0)),
        compiler_params=pltpu.CompilerParams(
            dimension_semantics=("parallel",)),
    )(*args)
    return out.reshape(N, Ho, Wo, C2)


def layer3_forward(x_nchw, dis_map_nchw, blocks):
    x = jnp.transpose(x_nchw, (0, 2, 3, 1))              # NCHW -> NHWC
    dm = jnp.transpose(dis_map_nchw, (0, 2, 3, 1))
    for p in blocks:
        x = bottleneck_forward(x, dm, p)
    return jnp.transpose(x, (0, 3, 1, 2))                # NHWC -> NCHW


# ---------------------------------------------------------------------------
# Plain-JAX glue: nearest resize, parameter construction (done ONCE at init)
# ---------------------------------------------------------------------------

def nearest_resize(dm, Ho, Wo):
    """PyTorch F.interpolate(mode='nearest'): idx = floor(i * in/out)."""
    N, Hd, Wd, _ = dm.shape
    hi = jnp.floor(jnp.arange(Ho) * (Hd / Ho)).astype(jnp.int32)
    wi = jnp.floor(jnp.arange(Wo) * (Wd / Wo)).astype(jnp.int32)
    return dm[:, hi][:, :, wi]


def _conv_weight(key, cout, cin, kh, kw):
    fan_in = cin * kh * kw
    return jax.random.normal(key, (cout, cin, kh, kw), jnp.float32) / math.sqrt(fan_in)


def _oihw_to_hwio(w):
    return jnp.transpose(w, (2, 3, 1, 0))


def _init_bn(key, c):
    k1, k2, k3, k4 = jax.random.split(key, 4)
    gamma = 1.0 + 0.1 * jax.random.normal(k1, (c,), jnp.float32)
    beta = 0.1 * jax.random.normal(k2, (c,), jnp.float32)
    mean = 0.1 * jax.random.normal(k3, (c,), jnp.float32)
    var = 1.0 + 0.1 * jax.random.uniform(k4, (c,), jnp.float32)
    return gamma, beta, mean, var


def _fold_bn_hwio(w_hwio, bn, eps=1e-5):
    gamma, beta, mean, var = bn
    s = gamma / jnp.sqrt(var + eps)
    return w_hwio * s, beta - mean * s


def _make_tap_matrix(H, W, stride):
    """0/1 matrix (9*Ho*Wo, H*W) encoding the 9 taps of a 3x3/pad-1 conv,
    including stride decimation and zero padding (all-zero rows)."""
    Ho = (H - 1) // stride + 1
    Wo = (W - 1) // stride + 1
    P = Ho * Wo
    T = np.zeros((9, P, H * W), np.float32)
    for ki in range(3):
        for kj in range(3):
            k = ki * 3 + kj
            for yo in range(Ho):
                for xo in range(Wo):
                    yi = yo * stride + ki - 1
                    xi = xo * stride + kj - 1
                    if 0 <= yi < H and 0 <= xi < W:
                        T[k, yo * Wo + xo, yi * W + xi] = 1.0
    return T.reshape(9 * P, H * W), Ho, Wo


def _make_sa_matrices(Ho, Wo, sa_w_hwio):
    """Fold the 7x7 (2->1 ch, pad 3) spatial-attention conv into two PxP
    matrices: out = K[0] @ mean_map + K[1] @ max_map."""
    P = Ho * Wo
    w = np.asarray(sa_w_hwio)                            # (7, 7, 2, 1)
    K = np.zeros((2, P, P), np.float32)
    for yo in range(Ho):
        for xo in range(Wo):
            po = yo * Wo + xo
            for ky in range(7):
                for kx in range(7):
                    yi = yo + ky - 3
                    xi = xo + kx - 3
                    if 0 <= yi < Ho and 0 <= xi < Wo:
                        K[:, po, yi * Wo + xi] = w[ky, kx, :, 0]
    return K


def make_bottleneck(key, inplanes, planes, H, W, stride=1, downsample=False,
                    downstride=2):
    width = planes                       # base_width=64, groups=1
    outc = planes * 4
    ks = jax.random.split(key, 11)
    bf16 = jnp.bfloat16

    w1_hwio, b1 = _fold_bn_hwio(
        _oihw_to_hwio(_conv_weight(ks[0], width, inplanes, 1, 1)),
        _init_bn(ks[1], width))
    w2_hwio, b2 = _fold_bn_hwio(
        _oihw_to_hwio(_conv_weight(ks[2], width, width, 3, 3)),
        _init_bn(ks[3], width))
    w3_hwio, b3 = _fold_bn_hwio(
        _oihw_to_hwio(_conv_weight(ks[4], outc, width, 1, 1)),
        _init_bn(ks[5], outc))
    cw1_hwio = _oihw_to_hwio(_conv_weight(ks[6], outc // 16, outc, 1, 1))
    cw2_hwio = _oihw_to_hwio(_conv_weight(ks[7], outc, outc // 16, 1, 1))
    sa_hwio = _oihw_to_hwio(_conv_weight(ks[8], 1, 2, 7, 7))

    T, Ho, Wo = _make_tap_matrix(H, W, stride)
    Ksa = _make_sa_matrices(Ho, Wo, sa_hwio)

    p = dict(
        H=H, W=W, Ho=Ho, Wo=Wo, width=width, outc=outc,
        stride=stride, downsample=downsample, downstride=downstride,
        # Kernel-side weights: matmul layout, bf16, built once at init.
        w1=w1_hwio[0, 0].astype(bf16), b1=b1.reshape(1, -1),
        w2=w2_hwio.reshape(9, width, width).astype(bf16), b2=b2.reshape(1, -1),
        w3=w3_hwio[0, 0].astype(bf16), b3=b3.reshape(1, -1),
        cw1=cw1_hwio[0, 0].astype(bf16), cw2=cw2_hwio[0, 0].astype(bf16),
        T=jnp.asarray(T, dtype=bf16), Ksa=jnp.asarray(Ksa, dtype=bf16),
        # Reference-side weights: conv (HWIO) layout for lax.conv validation.
        w1_c=w1_hwio.astype(bf16), w2_c=w2_hwio.astype(bf16),
        w3_c=w3_hwio.astype(bf16), sa_c=sa_hwio.astype(bf16),
        cw1_c=cw1_hwio.astype(bf16), cw2_c=cw2_hwio.astype(bf16),
    )
    if downsample:
        wd_hwio, bd = _fold_bn_hwio(
            _oihw_to_hwio(_conv_weight(ks[9], outc * 2, inplanes, 1, 1)),
            _init_bn(ks[10], outc * 2))
        p["wd"] = wd_hwio[0, 0].astype(bf16)
        p["bd"] = bd.reshape(1, -1)
        p["wd_c"] = wd_hwio.astype(bf16)
    return p


# ---------------------------------------------------------------------------
# Pure-JAX reference (lax.conv) with the same bf16-operand / f32-accumulate
# arithmetic, used only to validate the Pallas path in __main__.
# ---------------------------------------------------------------------------

def _conv_ref(x, w_hwio, stride=1, pad=0):
    return lax.conv_general_dilated(
        x.astype(jnp.bfloat16), w_hwio,
        window_strides=(stride, stride),
        padding=[(pad, pad), (pad, pad)],
        dimension_numbers=("NHWC", "HWIO", "NHWC"),
        preferred_element_type=jnp.float32)


def bottleneck_ref(x, dm_full, p):
    h1 = jnp.maximum(_conv_ref(x, p["w1_c"]) + p["b1"][0], 0.0)
    h2 = jnp.maximum(_conv_ref(h1, p["w2_c"], stride=p["stride"], pad=1)
                     + p["b2"][0], 0.0)
    out = _conv_ref(h2, p["w3_c"]) + p["b3"][0]
    _, Ho, Wo, _ = out.shape
    dm = nearest_resize(dm_full, Ho, Wo)

    avg = jnp.mean(out, axis=(1, 2))
    mx = jnp.max(out, axis=(1, 2))

    def mlp(v):
        h = jnp.maximum(jnp.dot(v.astype(jnp.bfloat16), p["cw1_c"][0, 0],
                                preferred_element_type=jnp.float32), 0.0)
        return jnp.dot(h.astype(jnp.bfloat16), p["cw2_c"][0, 0],
                       preferred_element_type=jnp.float32)

    gate = jax.nn.sigmoid(mlp(avg) + mlp(mx))[:, None, None, :]
    out_ca = out * gate

    am = jnp.concatenate([jnp.mean(out_ca, axis=-1, keepdims=True),
                          jnp.max(out_ca, axis=-1, keepdims=True)], axis=-1)
    sa = jax.nn.sigmoid(_conv_ref(am, p["sa_c"], pad=3))

    if p["downsample"]:
        res = _conv_ref(x, p["wd_c"], stride=p["downstride"]) + p["bd"][0]
    else:
        res = x
    y = jnp.concatenate([out_ca * sa, out_ca * dm], axis=-1) + res
    return jnp.maximum(y, 0.0)


def layer3_ref(x_nchw, dis_map_nchw, blocks):
    x = jnp.transpose(x_nchw, (0, 2, 3, 1))
    dm = jnp.transpose(dis_map_nchw, (0, 2, 3, 1))
    for p in blocks:
        x = bottleneck_ref(x, dm, p)
    return jnp.transpose(x, (0, 3, 1, 2))


# ---------------------------------------------------------------------------
# Example run
# ---------------------------------------------------------------------------

if __name__ == "__main__":
    inplanes = 32
    key = jax.random.PRNGKey(0)
    k_x, k_dm, k_par = jax.random.split(key, 3)

    # Layer3 expects x with inplanes*2 channels; dis_map is a 1-channel map.
    x = jax.random.normal(k_x, (2, inplanes * 2, 16, 16), dtype=jnp.float32)
    dis_map = jax.random.uniform(k_dm, (2, 1, 16, 16), dtype=jnp.float32)

    bkeys = jax.random.split(k_par, 6)
    blocks = [make_bottleneck(bkeys[0], inplanes * 2, inplanes // 2,
                              H=16, W=16, stride=2, downsample=True)]
    for i in range(1, 6):
        blocks.append(make_bottleneck(bkeys[i], inplanes * 4, inplanes // 2,
                                      H=8, W=8, stride=1, downsample=False))

    y = layer3_forward(x, dis_map, blocks)
    y = jax.block_until_ready(y)
    assert y.shape == (2, inplanes * 4, 8, 8), y.shape
    assert bool(jnp.all(jnp.isfinite(y)))

    # Validate the fused Pallas path against a lax.conv reference that uses
    # the same bf16-operand / f32-accumulate arithmetic.
    y_ref = jax.block_until_ready(layer3_ref(x, dis_map, blocks))
    max_err = float(jnp.max(jnp.abs(y - y_ref)))
    assert bool(jnp.allclose(y, y_ref, rtol=2e-2, atol=2e-2)), max_err

    print("KERNEL_OK")
</pallas_src>

<mosaic_0001>
module attributes {stable_mosaic.version = 11 : i64} {
  func.func @_bottleneck_kernel(%arg0: i32, %arg1: memref<1x256x64xf32, #tpu.memory_space<vmem>>, %arg2: memref<1x64x64xf32, #tpu.memory_space<vmem>>, %arg3: memref<1x64x1xf32, #tpu.memory_space<vmem>>, %arg4: memref<64x16xbf16, #tpu.memory_space<vmem>>, %arg5: memref<1x16xf32, #tpu.memory_space<vmem>>, %arg6: memref<576x256xbf16, #tpu.memory_space<vmem>>, %arg7: memref<9x16x16xbf16, #tpu.memory_space<vmem>>, %arg8: memref<1x16xf32, #tpu.memory_space<vmem>>, %arg9: memref<16x64xbf16, #tpu.memory_space<vmem>>, %arg10: memref<1x64xf32, #tpu.memory_space<vmem>>, %arg11: memref<64x4xbf16, #tpu.memory_space<vmem>>, %arg12: memref<4x64xbf16, #tpu.memory_space<vmem>>, %arg13: memref<2x64x64xbf16, #tpu.memory_space<vmem>>, %arg14: memref<64x128xbf16, #tpu.memory_space<vmem>>, %arg15: memref<1x128xf32, #tpu.memory_space<vmem>>, %arg16: memref<1x64x128xf32, #tpu.memory_space<vmem>>) attributes {dimension_semantics = [#tpu.dimension_semantics<parallel>], iteration_bounds = array<i64: 2>, scalar_prefetch = 0 : i64, scratch_operands = 0 : i64, tpu.core_type = #tpu.core_type<tc>, window_params = [{transform_indices = @transform_0, window_bounds = array<i64: 1, 256, 64>}, {transform_indices = @transform_1, window_bounds = array<i64: 1, 64, 64>}, {transform_indices = @transform_2, window_bounds = array<i64: 1, 64, 1>}, {pipeline_mode = #tpu.pipeline_mode<synchronous>, transform_indices = @transform_3, window_bounds = array<i64: 64, 16>}, {pipeline_mode = #tpu.pipeline_mode<synchronous>, transform_indices = @transform_4, window_bounds = array<i64: 1, 16>}, {pipeline_mode = #tpu.pipeline_mode<synchronous>, transform_indices = @transform_5, window_bounds = array<i64: 576, 256>}, {pipeline_mode = #tpu.pipeline_mode<synchronous>, transform_indices = @transform_6, window_bounds = array<i64: 9, 16, 16>}, {pipeline_mode = #tpu.pipeline_mode<synchronous>, transform_indices = @transform_7, window_bounds = array<i64: 1, 16>}, {pipeline_mode = #tpu.pipeline_mode<synchronous>, transform_indices = @transform_8, window_bounds = array<i64: 16, 64>}, {pipeline_mode = #tpu.pipeline_mode<synchronous>, transform_indices = @transform_9, window_bounds = array<i64: 1, 64>}, {pipeline_mode = #tpu.pipeline_mode<synchronous>, transform_indices = @transform_10, window_bounds = array<i64: 64, 4>}, {pipeline_mode = #tpu.pipeline_mode<synchronous>, transform_indices = @transform_11, window_bounds = array<i64: 4, 64>}, {pipeline_mode = #tpu.pipeline_mode<synchronous>, transform_indices = @transform_12, window_bounds = array<i64: 2, 64, 64>}, {pipeline_mode = #tpu.pipeline_mode<synchronous>, transform_indices = @transform_13, window_bounds = array<i64: 64, 128>}, {pipeline_mode = #tpu.pipeline_mode<synchronous>, transform_indices = @transform_14, window_bounds = array<i64: 1, 128>}, {transform_indices = @transform_15, window_bounds = array<i64: 1, 64, 128>}]} {
    %c0 = arith.constant 0 : index
    %c0_0 = arith.constant 0 : index
    %c0_1 = arith.constant 0 : index
    %0 = vector.load %arg1[%c0, %c0_0, %c0_1] : memref<1x256x64xf32, #tpu.memory_space<vmem>>, vector<1x256x64xf32>
    %1 = vector.shape_cast %0 : vector<1x256x64xf32> to vector<256x64xf32>
    %2 = arith.truncf %1 : vector<256x64xf32> to vector<256x64xbf16>
    %c0_2 = arith.constant 0 : index
    %c0_3 = arith.constant 0 : index
    %3 = vector.load %arg4[%c0_2, %c0_3] : memref<64x16xbf16, #tpu.memory_space<vmem>>, vector<64x16xbf16>
    %cst = arith.constant dense<0.000000e+00> : vector<256x16xf32>
    %4 = tpu.matmul %2, %3, %cst {dimension_numbers = #tpu.dot_dimension_numbers<[1], [0], [0], [1], [0, 0, 1, 1], [], []>} : vector<256x64xbf16>, vector<64x16xbf16>, vector<256x16xf32> -> vector<256x16xf32>
    %c0_4 = arith.constant 0 : index
    %c0_5 = arith.constant 0 : index
    %5 = vector.load %arg5[%c0_4, %c0_5] : memref<1x16xf32, #tpu.memory_space<vmem>>, vector<1x16xf32>
    %6 = vector.broadcast %5 : vector<1x16xf32> to vector<256x16xf32>
    %7 = arith.addf %4, %6 : vector<256x16xf32>
    %cst_6 = arith.constant 0.000000e+00 : f32
    %8 = vector.broadcast %cst_6 : f32 to vector<256x16xf32>
    %9 = arith.maximumf %7, %8 : vector<256x16xf32>
    %c0_7 = arith.constant 0 : index
    %c0_8 = arith.constant 0 : index
    %10 = vector.load %arg6[%c0_7, %c0_8] : memref<576x256xbf16, #tpu.memory_space<vmem>>, vector<576x256xbf16>
    %11 = arith.truncf %9 : vector<256x16xf32> to vector<256x16xbf16>
    %cst_9 = arith.constant dense<0.000000e+00> : vector<576x16xf32>
    %12 = tpu.matmul %10, %11, %cst_9 {dimension_numbers = #tpu.dot_dimension_numbers<[1], [0], [0], [1], [0, 0, 1, 1], [], []>} : vector<576x256xbf16>, vector<256x16xbf16>, vector<576x16xf32> -> vector<576x16xf32>
    %cst_10 = arith.constant 0.000000e+00 : f32
    %13 = vector.broadcast %cst_10 : f32 to vector<64x16xf32>
    %14 = vector.extract_strided_slice %12 {offsets = [0, 0], sizes = [64, 16], strides = [1, 1]} : vector<576x16xf32> to vector<64x16xf32>
    %15 = arith.truncf %14 : vector<64x16xf32> to vector<64x16xbf16>
    %c0_11 = arith.constant 0 : index
    %c0_12 = arith.constant 0 : index
    %c0_13 = arith.constant 0 : index
    %16 = vector.load %arg7[%c0_11, %c0_12, %c0_13] : memref<9x16x16xbf16, #tpu.memory_space<vmem>>, vector<1x16x16xbf16>
    %17 = vector.shape_cast %16 : vector<1x16x16xbf16> to vector<16x16xbf16>
    %cst_14 = arith.constant dense<0.000000e+00> : vector<64x16xf32>
    %18 = tpu.matmul %15, %17, %cst_14 {dimension_numbers = #tpu.dot_dimension_numbers<[1], [0], [0], [1], [0, 0, 1, 1], [], []>} : vector<64x16xbf16>, vector<16x16xbf16>, vector<64x16xf32> -> vector<64x16xf32>
    %19 = arith.addf %13, %18 : vector<64x16xf32>
    %20 = vector.extract_strided_slice %12 {offsets = [64, 0], sizes = [64, 16], strides = [1, 1]} : vector<576x16xf32> to vector<64x16xf32>
    %21 = arith.truncf %20 : vector<64x16xf32> to vector<64x16xbf16>
    %c1 = arith.constant 1 : index
    %c0_15 = arith.constant 0 : index
    %c0_16 = arith.constant 0 : index
    %22 = vector.load %arg7[%c1, %c0_15, %c0_16] : memref<9x16x16xbf16, #tpu.memory_space<vmem>>, vector<1x16x16xbf16>
    %23 = vector.shape_cast %22 : vector<1x16x16xbf16> to vector<16x16xbf16>
    %cst_17 = arith.constant dense<0.000000e+00> : vector<64x16xf32>
    %24 = tpu.matmul %21, %23, %cst_17 {dimension_numbers = #tpu.dot_dimension_numbers<[1], [0], [0], [1], [0, 0, 1, 1], [], []>} : vector<64x16xbf16>, vector<16x16xbf16>, vector<64x16xf32> -> vector<64x16xf32>
    %25 = arith.addf %19, %24 : vector<64x16xf32>
    %26 = vector.extract_strided_slice %12 {offsets = [128, 0], sizes = [64, 16], strides = [1, 1]} : vector<576x16xf32> to vector<64x16xf32>
    %27 = arith.truncf %26 : vector<64x16xf32> to vector<64x16xbf16>
    %c2 = arith.constant 2 : index
    %c0_18 = arith.constant 0 : index
    %c0_19 = arith.constant 0 : index
    %28 = vector.load %arg7[%c2, %c0_18, %c0_19] : memref<9x16x16xbf16, #tpu.memory_space<vmem>>, vector<1x16x16xbf16>
    %29 = vector.shape_cast %28 : vector<1x16x16xbf16> to vector<16x16xbf16>
    %cst_20 = arith.constant dense<0.000000e+00> : vector<64x16xf32>
    %30 = tpu.matmul %27, %29, %cst_20 {dimension_numbers = #tpu.dot_dimension_numbers<[1], [0], [0], [1], [0, 0, 1, 1], [], []>} : vector<64x16xbf16>, vector<16x16xbf16>, vector<64x16xf32> -> vector<64x16xf32>
    %31 = arith.addf %25, %30 : vector<64x16xf32>
    %32 = vector.extract_strided_slice %12 {offsets = [192, 0], sizes = [64, 16], strides = [1, 1]} : vector<576x16xf32> to vector<64x16xf32>
    %33 = arith.truncf %32 : vector<64x16xf32> to vector<64x16xbf16>
    %c3 = arith.constant 3 : index
    %c0_21 = arith.constant 0 : index
    %c0_22 = arith.constant 0 : index
    %34 = vector.load %arg7[%c3, %c0_21, %c0_22] : memref<9x16x16xbf16, #tpu.memory_space<vmem>>, vector<1x16x16xbf16>
    %35 = vector.shape_cast %34 : vector<1x16x16xbf16> to vector<16x16xbf16>
    %cst_23 = arith.constant dense<0.000000e+00> : vector<64x16xf32>
    %36 = tpu.matmul %33, %35, %cst_23 {dimension_numbers = #tpu.dot_dimension_numbers<[1], [0], [0], [1], [0, 0, 1, 1], [], []>} : vector<64x16xbf16>, vector<16x16xbf16>, vector<64x16xf32> -> vector<64x16xf32>
    %37 = arith.addf %31, %36 : vector<64x16xf32>
    %38 = vector.extract_strided_slice %12 {offsets = [256, 0], sizes = [64, 16], strides = [1, 1]} : vector<576x16xf32> to vector<64x16xf32>
    %39 = arith.truncf %38 : vector<64x16xf32> to vector<64x16xbf16>
    %c4 = arith.constant 4 : index
    %c0_24 = arith.constant 0 : index
    %c0_25 = arith.constant 0 : index
    %40 = vector.load %arg7[%c4, %c0_24, %c0_25] : memref<9x16x16xbf16, #tpu.memory_space<vmem>>, vector<1x16x16xbf16>
    %41 = vector.shape_cast %40 : vector<1x16x16xbf16> to vector<16x16xbf16>
    %cst_26 = arith.constant dense<0.000000e+00> : vector<64x16xf32>
    %42 = tpu.matmul %39, %41, %cst_26 {dimension_numbers = #tpu.dot_dimension_numbers<[1], [0], [0], [1], [0, 0, 1, 1], [], []>} : vector<64x16xbf16>, vector<16x16xbf16>, vector<64x16xf32> -> vector<64x16xf32>
    %43 = arith.addf %37, %42 : vector<64x16xf32>
    %44 = vector.extract_strided_slice %12 {offsets = [320, 0], sizes = [64, 16], strides = [1, 1]} : vector<576x16xf32> to vector<64x16xf32>
    %45 = arith.truncf %44 : vector<64x16xf32> to vector<64x16xbf16>
    %c5 = arith.constant 5 : index
    %c0_27 = arith.constant 0 : index
    %c0_28 = arith.constant 0 : index
    %46 = vector.load %arg7[%c5, %c0_27, %c0_28] : memref<9x16x16xbf16, #tpu.memory_space<vmem>>, vector<1x16x16xbf16>
    %47 = vector.shape_cast %46 : vector<1x16x16xbf16> to vector<16x16xbf16>
    %cst_29 = arith.constant dense<0.000000e+00> : vector<64x16xf32>
    %48 = tpu.matmul %45, %47, %cst_29 {dimension_numbers = #tpu.dot_dimension_numbers<[1], [0], [0], [1], [0, 0, 1, 1], [], []>} : vector<64x16xbf16>, vector<16x16xbf16>, vector<64x16xf32> -> vector<64x16xf32>
    %49 = arith.addf %43, %48 : vector<64x16xf32>
    %50 = vector.extract_strided_slice %12 {offsets = [384, 0], sizes = [64, 16], strides = [1, 1]} : vector<576x16xf32> to vector<64x16xf32>
    %51 = arith.truncf %50 : vector<64x16xf32> to vector<64x16xbf16>
    %c6 = arith.constant 6 : index
    %c0_30 = arith.constant 0 : index
    %c0_31 = arith.constant 0 : index
    %52 = vector.load %arg7[%c6, %c0_30, %c0_31] : memref<9x16x16xbf16, #tpu.memory_space<vmem>>, vector<1x16x16xbf16>
    %53 = vector.shape_cast %52 : vector<1x16x16xbf16> to vector<16x16xbf16>
    %cst_32 = arith.constant dense<0.000000e+00> : vector<64x16xf32>
    %54 = tpu.matmul %51, %53, %cst_32 {dimension_numbers = #tpu.dot_dimension_numbers<[1], [0], [0], [1], [0, 0, 1, 1], [], []>} : vector<64x16xbf16>, vector<16x16xbf16>, vector<64x16xf32> -> vector<64x16xf32>
    %55 = arith.addf %49, %54 : vector<64x16xf32>
    %56 = vector.extract_strided_slice %12 {offsets = [448, 0], sizes = [64, 16], strides = [1, 1]} : vector<576x16xf32> to vector<64x16xf32>
    %57 = arith.truncf %56 : vector<64x16xf32> to vector<64x16xbf16>
    %c7 = arith.constant 7 : index
    %c0_33 = arith.constant 0 : index
    %c0_34 = arith.constant 0 : index
    %58 = vector.load %arg7[%c7, %c0_33, %c0_34] : memref<9x16x16xbf16, #tpu.memory_space<vmem>>, vector<1x16x16xbf16>
    %59 = vector.shape_cast %58 : vector<1x16x16xbf16> to vector<16x16xbf16>
    %cst_35 = arith.constant dense<0.000000e+00> : vector<64x16xf32>
    %60 = tpu.matmul %57, %59, %cst_35 {dimension_numbers = #tpu.dot_dimension_numbers<[1], [0], [0], [1], [0, 0, 1, 1], [], []>} : vector<64x16xbf16>, vector<16x16xbf16>, vector<64x16xf32> -> vector<64x16xf32>
    %61 = arith.addf %55, %60 : vector<64x16xf32>
    %62 = vector.extract_strided_slice %12 {offsets = [512, 0], sizes = [64, 16], strides = [1, 1]} : vector<576x16xf32> to vector<64x16xf32>
    %63 = arith.truncf %62 : vector<64x16xf32> to vector<64x16xbf16>
    %c8 = arith.constant 8 : index
    %c0_36 = arith.constant 0 : index
    %c0_37 = arith.constant 0 : index
    %64 = vector.load %arg7[%c8, %c0_36, %c0_37] : memref<9x16x16xbf16, #tpu.memory_space<vmem>>, vector<1x16x16xbf16>
    %65 = vector.shape_cast %64 : vector<1x16x16xbf16> to vector<16x16xbf16>
    %cst_38 = arith.constant dense<0.000000e+00> : vector<64x16xf32>
    %66 = tpu.matmul %63, %65, %cst_38 {dimension_numbers = #tpu.dot_dimension_numbers<[1], [0], [0], [1], [0, 0, 1, 1], [], []>} : vector<64x16xbf16>, vector<16x16xbf16>, vector<64x16xf32> -> vector<64x16xf32>
    %67 = arith.addf %61, %66 : vector<64x16xf32>
    %c0_39 = arith.constant 0 : index
    %c0_40 = arith.constant 0 : index
    %68 = vector.load %arg8[%c0_39, %c0_40] : memref<1x16xf32, #tpu.memory_space<vmem>>, vector<1x16xf32>
    %69 = vector.broadcast %68 : vector<1x16xf32> to vector<64x16xf32>
    %70 = arith.addf %67, %69 : vector<64x16xf32>
    %cst_41 = arith.constant 0.000000e+00 : f32
    %71 = vector.broadcast %cst_41 : f32 to vector<64x16xf32>
    %72 = arith.maximumf %70, %71 : vector<64x16xf32>
    %73 = arith.truncf %72 : vector<64x16xf32> to vector<64x16xbf16>
    %c0_42 = arith.constant 0 : index
    %c0_43 = arith.constant 0 : index
    %74 = vector.load %arg9[%c0_42, %c0_43] : memref<16x64xbf16, #tpu.memory_space<vmem>>, vector<16x64xbf16>
    %cst_44 = arith.constant dense<0.000000e+00> : vector<64x64xf32>
    %75 = tpu.matmul %73, %74, %cst_44 {dimension_numbers = #tpu.dot_dimension_numbers<[1], [0], [0], [1], [0, 0, 1, 1], [], []>} : vector<64x16xbf16>, vector<16x64xbf16>, vector<64x64xf32> -> vector<64x64xf32>
    %c0_45 = arith.constant 0 : index
    %c0_46 = arith.constant 0 : index
    %76 = vector.load %arg10[%c0_45, %c0_46] : memref<1x64xf32, #tpu.memory_space<vmem>>, vector<1x64xf32>
    %77 = vector.broadcast %76 : vector<1x64xf32> to vector<64x64xf32>
    %78 = arith.addf %75, %77 : vector<64x64xf32>
    %cst_47 = arith.constant dense<0.000000e+00> : vector<64xf32>
    %79 = vector.multi_reduction <add>, %78, %cst_47 [0] : vector<64x64xf32> to vector<64xf32>
    %80 = vector.shape_cast %79 : vector<64xf32> to vector<1x64xf32>
    %cst_48 = arith.constant 6.400000e+01 : f32
    %81 = vector.broadcast %cst_48 : f32 to vector<1x64xf32>
    %82 = arith.divf %80, %81 : vector<1x64xf32>
    %cst_49 = arith.constant dense<0xFF800000> : vector<64xf32>
    %83 = vector.multi_reduction <maximumf>, %78, %cst_49 [0] : vector<64x64xf32> to vector<64xf32>
    %84 = vector.shape_cast %83 : vector<64xf32> to vector<1x64xf32>
    %85 = arith.truncf %82 : vector<1x64xf32> to vector<1x64xbf16>
    %c0_50 = arith.constant 0 : index
    %c0_51 = arith.constant 0 : index
    %86 = vector.load %arg11[%c0_50, %c0_51] : memref<64x4xbf16, #tpu.memory_space<vmem>>, vector<64x4xbf16>
    %cst_52 = arith.constant dense<0.000000e+00> : vector<1x4xf32>
    %87 = tpu.matmul %85, %86, %cst_52 {dimension_numbers = #tpu.dot_dimension_numbers<[1], [0], [0], [1], [0, 0, 1, 1], [], []>} : vector<1x64xbf16>, vector<64x4xbf16>, vector<1x4xf32> -> vector<1x4xf32>
    %cst_53 = arith.constant 0.000000e+00 : f32
    %88 = vector.broadcast %cst_53 : f32 to vector<1x4xf32>
    %89 = arith.maximumf %87, %88 : vector<1x4xf32>
    %90 = arith.truncf %89 : vector<1x4xf32> to vector<1x4xbf16>
    %c0_54 = arith.constant 0 : index
    %c0_55 = arith.constant 0 : index
    %91 = vector.load %arg12[%c0_54, %c0_55] : memref<4x64xbf16, #tpu.memory_space<vmem>>, vector<4x64xbf16>
    %cst_56 = arith.constant dense<0.000000e+00> : vector<1x64xf32>
    %92 = tpu.matmul %90, %91, %cst_56 {dimension_numbers = #tpu.dot_dimension_numbers<[1], [0], [0], [1], [0, 0, 1, 1], [], []>} : vector<1x4xbf16>, vector<4x64xbf16>, vector<1x64xf32> -> vector<1x64xf32>
    %93 = arith.truncf %84 : vector<1x64xf32> to vector<1x64xbf16>
    %c0_57 = arith.constant 0 : index
    %c0_58 = arith.constant 0 : index
    %94 = vector.load %arg11[%c0_57, %c0_58] : memref<64x4xbf16, #tpu.memory_space<vmem>>, vector<64x4xbf16>
    %cst_59 = arith.constant dense<0.000000e+00> : vector<1x4xf32>
    %95 = tpu.matmul %93, %94, %cst_59 {dimension_numbers = #tpu.dot_dimension_numbers<[1], [0], [0], [1], [0, 0, 1, 1], [], []>} : vector<1x64xbf16>, vector<64x4xbf16>, vector<1x4xf32> -> vector<1x4xf32>
    %cst_60 = arith.constant 0.000000e+00 : f32
    %96 = vector.broadcast %cst_60 : f32 to vector<1x4xf32>
    %97 = arith.maximumf %95, %96 : vector<1x4xf32>
    %98 = arith.truncf %97 : vector<1x4xf32> to vector<1x4xbf16>
    %c0_61 = arith.constant 0 : index
    %c0_62 = arith.constant 0 : index
    %99 = vector.load %arg12[%c0_61, %c0_62] : memref<4x64xbf16, #tpu.memory_space<vmem>>, vector<4x64xbf16>
    %cst_63 = arith.constant dense<0.000000e+00> : vector<1x64xf32>
    %100 = tpu.matmul %98, %99, %cst_63 {dimension_numbers = #tpu.dot_dimension_numbers<[1], [0], [0], [1], [0, 0, 1, 1], [], []>} : vector<1x4xbf16>, vector<4x64xbf16>, vector<1x64xf32> -> vector<1x64xf32>
    %101 = arith.addf %92, %100 : vector<1x64xf32>
    %102 = arith.negf %101 : vector<1x64xf32>
    %103 = math.exp %102 : vector<1x64xf32>
    %cst_64 = arith.constant 1.000000e+00 : f32
    %104 = vector.broadcast %cst_64 : f32 to vector<1x64xf32>
    %105 = arith.addf %104, %103 : vector<1x64xf32>
    %106 = arith.divf %104, %105 : vector<1x64xf32>
    %107 = vector.broadcast %106 : vector<1x64xf32> to vector<64x64xf32>
    %108 = arith.mulf %78, %107 : vector<64x64xf32>
    %cst_65 = arith.constant dense<0.000000e+00> : vector<64xf32>
    %109 = vector.multi_reduction <add>, %108, %cst_65 [1] : vector<64x64xf32> to vector<64xf32>
    %110 = vector.shape_cast %109 : vector<64xf32> to vector<64x1xf32>
    %cst_66 = arith.constant 6.400000e+01 : f32
    %111 = vector.broadcast %cst_66 : f32 to vector<64x1xf32>
    %112 = arith.divf %110, %111 : vector<64x1xf32>
    %cst_67 = arith.constant dense<0xFF800000> : vector<64xf32>
    %113 = vector.multi_reduction <maximumf>, %108, %cst_67 [1] : vector<64x64xf32> to vector<64xf32>
    %114 = vector.shape_cast %113 : vector<64xf32> to vector<64x1xf32>
    %c0_68 = arith.constant 0 : index
    %c0_69 = arith.constant 0 : index
    %c0_70 = arith.constant 0 : index
    %115 = vector.load %arg13[%c0_68, %c0_69, %c0_70] : memref<2x64x64xbf16, #tpu.memory_space<vmem>>, vector<1x64x64xbf16>
    %116 = vector.shape_cast %115 : vector<1x64x64xbf16> to vector<64x64xbf16>
    %117 = arith.truncf %112 : vector<64x1xf32> to vector<64x1xbf16>
    %cst_71 = arith.constant dense<0.000000e+00> : vector<64x1xf32>
    %118 = tpu.matmul %116, %117, %cst_71 {dimension_numbers = #tpu.dot_dimension_numbers<[1], [0], [0], [1], [0, 0, 1, 1], [], []>} : vector<64x64xbf16>, vector<64x1xbf16>, vector<64x1xf32> -> vector<64x1xf32>
    %c1_72 = arith.constant 1 : index
    %c0_73 = arith.constant 0 : index
    %c0_74 = arith.constant 0 : index
    %119 = vector.load %arg13[%c1_72, %c0_73, %c0_74] : memref<2x64x64xbf16, #tpu.memory_space<vmem>>, vector<1x64x64xbf16>
    %120 = vector.shape_cast %119 : vector<1x64x64xbf16> to vector<64x64xbf16>
    %121 = arith.truncf %114 : vector<64x1xf32> to vector<64x1xbf16>
    %cst_75 = arith.constant dense<0.000000e+00> : vector<64x1xf32>
    %122 = tpu.matmul %120, %121, %cst_75 {dimension_numbers = #tpu.dot_dimension_numbers<[1], [0], [0], [1], [0, 0, 1, 1], [], []>} : vector<64x64xbf16>, vector<64x1xbf16>, vector<64x1xf32> -> vector<64x1xf32>
    %123 = arith.addf %118, %122 : vector<64x1xf32>
    %124 = arith.negf %123 : vector<64x1xf32>
    %125 = math.exp %124 : vector<64x1xf32>
    %cst_76 = arith.constant 1.000000e+00 : f32
    %126 = vector.broadcast %cst_76 : f32 to vector<64x1xf32>
    %127 = arith.addf %126, %125 : vector<64x1xf32>
    %128 = arith.divf %126, %127 : vector<64x1xf32>
    %c0_77 = arith.constant 0 : index
    %c0_78 = arith.constant 0 : index
    %c0_79 = arith.constant 0 : index
    %129 = vector.load %arg3[%c0_77, %c0_78, %c0_79] : memref<1x64x1xf32, #tpu.memory_space<vmem>>, vector<1x64x1xf32>
    %130 = vector.shape_cast %129 : vector<1x64x1xf32> to vector<64x1xf32>
    %c0_80 = arith.constant 0 : index
    %c0_81 = arith.constant 0 : index
    %c0_82 = arith.constant 0 : index
    %131 = vector.load %arg2[%c0_80, %c0_81, %c0_82] : memref<1x64x64xf32, #tpu.memory_space<vmem>>, vector<1x64x64xf32>
    %132 = vector.shape_cast %131 : vector<1x64x64xf32> to vector<64x64xf32>
    %133 = arith.truncf %132 : vector<64x64xf32> to vector<64x64xbf16>
    %c0_83 = arith.constant 0 : index
    %c0_84 = arith.constant 0 : index
    %134 = vector.load %arg14[%c0_83, %c0_84] : memref<64x128xbf16, #tpu.memory_space<vmem>>, vector<64x128xbf16>
    %cst_85 = arith.constant dense<0.000000e+00> : vector<64x128xf32>
    %135 = tpu.matmul %133, %134, %cst_85 {dimension_numbers = #tpu.dot_dimension_numbers<[1], [0], [0], [1], [0, 0, 1, 1], [], []>} : vector<64x64xbf16>, vector<64x128xbf16>, vector<64x128xf32> -> vector<64x128xf32>
    %c0_86 = arith.constant 0 : index
    %c0_87 = arith.constant 0 : index
    %136 = vector.load %arg15[%c0_86, %c0_87] : memref<1x128xf32, #tpu.memory_space<vmem>>, vector<1x128xf32>
    %137 = vector.broadcast %136 : vector<1x128xf32> to vector<64x128xf32>
    %138 = arith.addf %135, %137 : vector<64x128xf32>
    %139 = vector.broadcast %128 : vector<64x1xf32> to vector<64x64xf32>
    %140 = arith.mulf %108, %139 : vector<64x64xf32>
    %141 = vector.broadcast %130 : vector<64x1xf32> to vector<64x64xf32>
    %142 = arith.mulf %108, %141 : vector<64x64xf32>
    %143 = tpu.concatenate %140, %142 in 1 : vector<64x64xf32>, vector<64x64xf32> -> vector<64x128xf32>
    %144 = arith.addf %143, %138 : vector<64x128xf32>
    %cst_88 = arith.constant 0.000000e+00 : f32
    %145 = vector.broadcast %cst_88 : f32 to vector<64x128xf32>
    %146 = arith.maximumf %144, %145 : vector<64x128xf32>
    %c0_89 = arith.constant 0 : index
    %c0_90 = arith.constant 0 : index
    %c0_91 = arith.constant 0 : index
    %147 = vector.load %arg16[%c0_89, %c0_90, %c0_91] : memref<1x64x128xf32, #tpu.memory_space<vmem>>, vector<1x64x128xf32>
    %148 = vector.shape_cast %147 : vector<1x64x128xf32> to vector<64x128xf32>
    %149 = vector.shape_cast %146 : vector<64x128xf32> to vector<1x64x128xf32>
    tpu.vector_store %arg16[%c0_89, %c0_90, %c0_91], %149 {strides = array<i32>} : memref<1x64x128xf32, #tpu.memory_space<vmem>>, vector<1x64x128xf32>,
    return
  }
  func.func @transform_0(%arg0: i32) -> (i32, i32, i32) {
    %c0_i32 = arith.constant 0 : i32
    %c0_i32_0 = arith.constant 0 : i32
    %c0_i32_1 = arith.constant 0 : i32
    return %arg0, %c0_i32, %c0_i32_0 : i32, i32, i32
  }
  func.func @transform_1(%arg0: i32) -> (i32, i32, i32) {
    %c0_i32 = arith.constant 0 : i32
    %c0_i32_0 = arith.constant 0 : i32
    %c0_i32_1 = arith.constant 0 : i32
    return %arg0, %c0_i32, %c0_i32_0 : i32, i32, i32
  }
  func.func @transform_2(%arg0: i32) -> (i32, i32, i32) {
    %c0_i32 = arith.constant 0 : i32
    %c0_i32_0 = arith.constant 0 : i32
    %c0_i32_1 = arith.constant 0 : i32
    return %arg0, %c0_i32, %c0_i32_0 : i32, i32, i32
  }
  func.func @transform_3(%arg0: i32) -> (i32, i32) {
    %c0_i32 = arith.constant 0 : i32
    %c0_i32_0 = arith.constant 0 : i32
    %c0_i32_1 = arith.constant 0 : i32
    return %c0_i32, %c0_i32_0 : i32, i32
  }
  func.func @transform_4(%arg0: i32) -> (i32, i32) {
    %c0_i32 = arith.constant 0 : i32
    %c0_i32_0 = arith.constant 0 : i32
    %c0_i32_1 = arith.constant 0 : i32
    return %c0_i32, %c0_i32_0 : i32, i32
  }
  func.func @transform_5(%arg0: i32) -> (i32, i32) {
    %c0_i32 = arith.constant 0 : i32
    %c0_i32_0 = arith.constant 0 : i32
    %c0_i32_1 = arith.constant 0 : i32
    return %c0_i32, %c0_i32_0 : i32, i32
  }
  func.func @transform_6(%arg0: i32) -> (i32, i32, i32) {
    %c0_i32 = arith.constant 0 : i32
    %c0_i32_0 = arith.constant 0 : i32
    %c0_i32_1 = arith.constant 0 : i32
    %c0_i32_2 = arith.constant 0 : i32
    return %c0_i32, %c0_i32_0, %c0_i32_1 : i32, i32, i32
  }
  func.func @transform_7(%arg0: i32) -> (i32, i32) {
    %c0_i32 = arith.constant 0 : i32
    %c0_i32_0 = arith.constant 0 : i32
    %c0_i32_1 = arith.constant 0 : i32
    return %c0_i32, %c0_i32_0 : i32, i32
  }
  func.func @transform_8(%arg0: i32) -> (i32, i32) {
    %c0_i32 = arith.constant 0 : i32
    %c0_i32_0 = arith.constant 0 : i32
    %c0_i32_1 = arith.constant 0 : i32
    return %c0_i32, %c0_i32_0 : i32, i32
  }
  func.func @transform_9(%arg0: i32) -> (i32, i32) {
    %c0_i32 = arith.constant 0 : i32
    %c0_i32_0 = arith.constant 0 : i32
    %c0_i32_1 = arith.constant 0 : i32
    return %c0_i32, %c0_i32_0 : i32, i32
  }
  func.func @transform_10(%arg0: i32) -> (i32, i32) {
    %c0_i32 = arith.constant 0 : i32
    %c0_i32_0 = arith.constant 0 : i32
    %c0_i32_1 = arith.constant 0 : i32
    return %c0_i32, %c0_i32_0 : i32, i32
  }
  func.func @transform_11(%arg0: i32) -> (i32, i32) {
    %c0_i32 = arith.constant 0 : i32
    %c0_i32_0 = arith.constant 0 : i32
    %c0_i32_1 = arith.constant 0 : i32
    return %c0_i32, %c0_i32_0 : i32, i32
  }
  func.func @transform_12(%arg0: i32) -> (i32, i32, i32) {
    %c0_i32 = arith.constant 0 : i32
    %c0_i32_0 = arith.constant 0 : i32
    %c0_i32_1 = arith.constant 0 : i32
    %c0_i32_2 = arith.constant 0 : i32
    return %c0_i32, %c0_i32_0, %c0_i32_1 : i32, i32, i32
  }
  func.func @transform_13(%arg0: i32) -> (i32, i32) {
    %c0_i32 = arith.constant 0 : i32
    %c0_i32_0 = arith.constant 0 : i32
    %c0_i32_1 = arith.constant 0 : i32
    return %c0_i32, %c0_i32_0 : i32, i32
  }
  func.func @transform_14(%arg0: i32) -> (i32, i32) {
    %c0_i32 = arith.constant 0 : i32
    %c0_i32_0 = arith.constant 0 : i32
    %c0_i32_1 = arith.constant 0 : i32
    return %c0_i32, %c0_i32_0 : i32, i32
  }
  func.func @transform_15(%arg0: i32) -> (i32, i32, i32) {
    %c0_i32 = arith.constant 0 : i32
    %c0_i32_0 = arith.constant 0 : i32
    %c0_i32_1 = arith.constant 0 : i32
    return %arg0, %c0_i32, %c0_i32_0 : i32, i32, i32
  }
}

</mosaic_0001>

<llo_original>
// kernel: tpu_custom_call.1
$region0: #{tpu_custom_call.1}
  #allocation0 [shape = 'u32[]', space=smem, size = 0x4, offset = 0x4, fixed_abs, tag = 'smem constant byte address 0x4 - core index']
  #allocation1 [shape = 'u32[144,128]{1,0:T(1,128)}', space=vmem, size = 0x12000, scoped, tag = 'internal scratch']
  %s0 = inlined_call_operand.vmem [shape: f32[2,256,64], index: 0, kind: input, shape index: {}]
  %s1 = inlined_call_operand.vmem [shape: f32[2,64,64], index: 1, kind: input, shape index: {}]
  %s2 = inlined_call_operand.vmem [shape: f32[2,64,1], index: 2, kind: input, shape index: {}]
  %s3 = inlined_call_operand.vmem [shape: bf16[64,16], index: 3, kind: input, shape index: {}]
  %s4 = inlined_call_operand.vmem [shape: f32[1,16], index: 4, kind: input, shape index: {}]
  %s5 = inlined_call_operand.vmem [shape: bf16[576,256], index: 5, kind: input, shape index: {}]
  %s6 = inlined_call_operand.vmem [shape: bf16[9,16,16], index: 6, kind: input, shape index: {}]
  %s7 = inlined_call_operand.vmem [shape: f32[1,16], index: 7, kind: input, shape index: {}]
  %s8 = inlined_call_operand.vmem [shape: bf16[16,64], index: 8, kind: input, shape index: {}]
  %s9 = inlined_call_operand.vmem [shape: f32[1,64], index: 9, kind: input, shape index: {}]
  %s10 = inlined_call_operand.vmem [shape: bf16[64,4], index: 10, kind: input, shape index: {}]
  %s11 = inlined_call_operand.vmem [shape: bf16[4,64], index: 11, kind: input, shape index: {}]
  %s12 = inlined_call_operand.vmem [shape: bf16[2,64,64], index: 12, kind: input, shape index: {}]
  %s13 = inlined_call_operand.vmem [shape: bf16[64,128], index: 13, kind: input, shape index: {}]
  %s14 = inlined_call_operand.vmem [shape: f32[1,128], index: 14, kind: input, shape index: {}]
  %s15 = inlined_call_operand.hbm [shape: f32[2,64,128], index: 15, kind: output, shape index: {}]
  %s16 = sld [smem:[#allocation0]]
  $region93: #{tpu_custom_call.1} parent=0
    _
  %s18 = ssub.s32 1, %s16
  %s19 = scalar_select 0, %s18, %s16
  $region1: #{tpu_custom_call.1} parent=0
    #allocation2 [shape = 'u8[65536]{0}', space=vmem, size = 0x10000, scoped, tag = 'output window, operand 0']
    #allocation3 [shape = 's32[2]{0}', space=sflag, size = 0x8, scoped, tag = 'scoped memory for tpu_custom_call.1']
    %20 = vsyncpa [#allocation3], 0
    %s21 = scalar_lea.sflag [#allocation3], 1
    %22 = vsyncpa %s21, 0
    loop: start=0, step=1, limit=4
    $region2: #{tpu_custom_call.1} parent=1 // loop_pre_header
      _
    $region3: #{tpu_custom_call.1} parent=1 // loop_header
      %s24 = sphi 0, %s28
      %p25 = scmp.ge.s32.totalorder %s24, 4
      %s34 = sphi 0, %s36
      %s37 = sphi 0, %s34
      %s38 = sphi 0, %s37
      %s54 = sphi 0, %s38
      %s60 = sphi 0, %s62
      %s63 = sphi 0, %s60
      %s64 = sphi 0, %s63
      %s80 = sphi 0, %s64
      %s86 = sphi 0, %s88
      %s89 = sphi 0, %s86
      %s90 = sphi 0, %s89
      %s106 = sphi 0, %s90
      %s110 = sphi 0, %s110
      %s112 = sphi 0, %s110
      %s113 = sphi 0, %s112
      %s127 = sphi 0, %s113
      %s131 = sphi 0, %s131
      %s133 = sphi 0, %s131
      %s134 = sphi 0, %s133
      %s148 = sphi 0, %s134
      %s152 = sphi 0, %s152
      %s154 = sphi 0, %s152
      %s155 = sphi 0, %s154
      %s169 = sphi 0, %s155
      %s173 = sphi 0, %s173
      %s175 = sphi 0, %s173
      %s176 = sphi 0, %s175
      %s190 = sphi 0, %s176
      %s194 = sphi 0, %s194
      %s196 = sphi 0, %s194
      %s197 = sphi 0, %s196
      %s211 = sphi 0, %s197
      %s215 = sphi 0, %s215
      %s217 = sphi 0, %s215
      %s218 = sphi 0, %s217
      %s232 = sphi 0, %s218
      %s236 = sphi 0, %s236
      %s238 = sphi 0, %s236
      %s239 = sphi 0, %s238
      %s253 = sphi 0, %s239
      %s257 = sphi 0, %s257
      %s259 = sphi 0, %s257
      %s260 = sphi 0, %s259
      %s274 = sphi 0, %s260
      %s278 = sphi 0, %s278
      %s280 = sphi 0, %s278
      %s281 = sphi 0, %s280
      %s295 = sphi 0, %s281
      %s299 = sphi 0, %s299
      %s301 = sphi 0, %s299
      %s302 = sphi 0, %s301
      %s316 = sphi 0, %s302
      %s320 = sphi 0, %s320
      %s322 = sphi 0, %s320
      %s323 = sphi 0, %s322
      %s337 = sphi 0, %s323
      %s341 = sphi 0, %s341
      %s343 = sphi 0, %s341
      %s344 = sphi 0, %s343
      %s358 = sphi 0, %s344
      %s364 = sphi 0, %s366
      %s367 = sphi 0, %s364
      %s368 = sphi 0, %s367
      %s384 = sphi 0, %s368
    $region4: #{tpu_custom_call.1} parent=1 // loop_header_branch
      %27 = sbr.rel (%p25) target = $region8
    $region5: #{tpu_custom_call.1} parent=1 // loop_body
      %s29 = ssub.s32 %s24, 1
      %s30 = ssub.s32 %s24, 2
      %s31 = sadd.s32 %s24, 1
      %s32 = ssub.s32 %s24, %s31
      %p33 = scmp.eq.s32.totalorder %s32, 0
      %s35 = sadd.s32 %s34, 1
      %s36 = scalar_select %p33, %s34, %s35
      %p39 = pneg %p33
      %p40 = scmp.eq.s32.totalorder %s24, 1
      %p41 = por %p39, %p40
      %p42 = scmp.ne.s32.totalorder %s34, %s37
      %p43 = scmp.eq.s32.totalorder %s24, 0
      %p44 = por %p42, %p43
      %p45 = scmp.ne.s32.totalorder %s34, %s37
      %p46 = scmp.eq.s32.totalorder %s29, 1
      %p47 = por %p45, %p46
      %p48 = scmp.ne.s32.totalorder %s37, %s38
      %p49 = scmp.eq.s32.totalorder %s29, 0
      %p50 = por %p48, %p49
      %p51 = scmp.ne.s32.totalorder %s37, %s38
      %p52 = scmp.eq.s32.totalorder %s30, 1
      %p53 = por %p51, %p52
      %p55 = scmp.ne.s32.totalorder %s38, %s54
      %p56 = scmp.eq.s32.totalorder %s30, 0
      %p57 = por %p55, %p56
      %s58 = ssub.s32 %s24, %s31
      %p59 = scmp.eq.s32.totalorder %s58, 0
      %s61 = sadd.s32 %s60, 1
      %s62 = scalar_select %p59, %s60, %s61
      %p65 = pneg %p59
      %p66 = scmp.eq.s32.totalorder %s24, 1
      %p67 = por %p65, %p66
      %p68 = scmp.ne.s32.totalorder %s60, %s63
      %p69 = scmp.eq.s32.totalorder %s24, 0
      %p70 = por %p68, %p69
      %p71 = scmp.ne.s32.totalorder %s60, %s63
      %p72 = scmp.eq.s32.totalorder %s29, 1
      %p73 = por %p71, %p72
      %p74 = scmp.ne.s32.totalorder %s63, %s64
      %p75 = scmp.eq.s32.totalorder %s29, 0
      %p76 = por %p74, %p75
      %p77 = scmp.ne.s32.totalorder %s63, %s64
      %p78 = scmp.eq.s32.totalorder %s30, 1
      %p79 = por %p77, %p78
      %p81 = scmp.ne.s32.totalorder %s64, %s80
      %p82 = scmp.eq.s32.totalorder %s30, 0
      %p83 = por %p81, %p82
      %s84 = ssub.s32 %s24, %s31
      %p85 = scmp.eq.s32.totalorder %s84, 0
      %s87 = sadd.s32 %s86, 1
      %s88 = scalar_select %p85, %s86, %s87
      %p91 = pneg %p85
      %p92 = scmp.eq.s32.totalorder %s24, 1
      %p93 = por %p91, %p92
      %p94 = scmp.ne.s32.totalorder %s86, %s89
      %p95 = scmp.eq.s32.totalorder %s24, 0
      %p96 = por %p94, %p95
      %p97 = scmp.ne.s32.totalorder %s86, %s89
      %p98 = scmp.eq.s32.totalorder %s29, 1
      %p99 = por %p97, %p98
      %p100 = scmp.ne.s32.totalorder %s89, %s90
      %p101 = scmp.eq.s32.totalorder %s29, 0
      %p102 = por %p100, %p101
      %p103 = scmp.ne.s32.totalorder %s89, %s90
      %p104 = scmp.eq.s32.totalorder %s30, 1
      %p105 = por %p103, %p104
      %p107 = scmp.ne.s32.totalorder %s90, %s106
      %p108 = scmp.eq.s32.totalorder %s30, 0
      %p109 = por %p107, %p108
      %s111 = sadd.s32 %s110, 1
      %p114 = scmp.eq.s32.totalorder %s24, 1
      %p115 = scmp.ne.s32.totalorder %s110, %s112
      %p116 = scmp.eq.s32.totalorder %s24, 0
      %p117 = por %p115, %p116
      %p118 = scmp.ne.s32.totalorder %s110, %s112
      %p119 = scmp.eq.s32.totalorder %s29, 1
      %p120 = por %p118, %p119
      %p121 = scmp.ne.s32.totalorder %s112, %s113
      %p122 = scmp.eq.s32.totalorder %s29, 0
      %p123 = por %p121, %p122
      %p124 = scmp.ne.s32.totalorder %s112, %s113
      %p125 = scmp.eq.s32.totalorder %s30, 1
      %p126 = por %p124, %p125
      %p128 = scmp.ne.s32.totalorder %s113, %s127
      %p129 = scmp.eq.s32.totalorder %s30, 0
      %p130 = por %p128, %p129
      %s132 = sadd.s32 %s131, 1
      %p135 = scmp.eq.s32.totalorder %s24, 1
      %p136 = scmp.ne.s32.totalorder %s131, %s133
      %p137 = scmp.eq.s32.totalorder %s24, 0
      %p138 = por %p136, %p137
      %p139 = scmp.ne.s32.totalorder %s131, %s133
      %p140 = scmp.eq.s32.totalorder %s29, 1
      %p141 = por %p139, %p140
      %p142 = scmp.ne.s32.totalorder %s133, %s134
      %p143 = scmp.eq.s32.totalorder %s29, 0
      %p144 = por %p142, %p143
      %p145 = scmp.ne.s32.totalorder %s133, %s134
      %p146 = scmp.eq.s32.totalorder %s30, 1
      %p147 = por %p145, %p146
      %p149 = scmp.ne.s32.totalorder %s134, %s148
      %p150 = scmp.eq.s32.totalorder %s30, 0
      %p151 = por %p149, %p150
      %s153 = sadd.s32 %s152, 1
      %p156 = scmp.eq.s32.totalorder %s24, 1
      %p157 = scmp.ne.s32.totalorder %s152, %s154
      %p158 = scmp.eq.s32.totalorder %s24, 0
      %p159 = por %p157, %p158
      %p160 = scmp.ne.s32.totalorder %s152, %s154
      %p161 = scmp.eq.s32.totalorder %s29, 1
      %p162 = por %p160, %p161
      %p163 = scmp.ne.s32.totalorder %s154, %s155
      %p164 = scmp.eq.s32.totalorder %s29, 0
      %p165 = por %p163, %p164
      %p166 = scmp.ne.s32.totalorder %s154, %s155
      %p167 = scmp.eq.s32.totalorder %s30, 1
      %p168 = por %p166, %p167
      %p170 = scmp.ne.s32.totalorder %s155, %s169
      %p171 = scmp.eq.s32.totalorder %s30, 0
      %p172 = por %p170, %p171
      %s174 = sadd.s32 %s173, 1
      %p177 = scmp.eq.s32.totalorder %s24, 1
      %p178 = scmp.ne.s32.totalorder %s173, %s175
      %p179 = scmp.eq.s32.totalorder %s24, 0
      %p180 = por %p178, %p179
      %p181 = scmp.ne.s32.totalorder %s173, %s175
      %p182 = scmp.eq.s32.totalorder %s29, 1
      %p183 = por %p181, %p182
      %p184 = scmp.ne.s32.totalorder %s175, %s176
      %p185 = scmp.eq.s32.totalorder %s29, 0
      %p186 = por %p184, %p185
      %p187 = scmp.ne.s32.totalorder %s175, %s176
      %p188 = scmp.eq.s32.totalorder %s30, 1
      %p189 = por %p187, %p188
      %p191 = scmp.ne.s32.totalorder %s176, %s190
      %p192 = scmp.eq.s32.totalorder %s30, 0
      %p193 = por %p191, %p192
      %s195 = sadd.s32 %s194, 1
      %p198 = scmp.eq.s32.totalorder %s24, 1
      %p199 = scmp.ne.s32.totalorder %s194, %s196
      %p200 = scmp.eq.s32.totalorder %s24, 0
      %p201 = por %p199, %p200
      %p202 = scmp.ne.s32.totalorder %s194, %s196
      %p203 = scmp.eq.s32.totalorder %s29, 1
      %p204 = por %p202, %p203
      %p205 = scmp.ne.s32.totalorder %s196, %s197
      %p206 = scmp.eq.s32.totalorder %s29, 0
      %p207 = por %p205, %p206
      %p208 = scmp.ne.s32.totalorder %s196, %s197
      %p209 = scmp.eq.s32.totalorder %s30, 1
      %p210 = por %p208, %p209
      %p212 = scmp.ne.s32.totalorder %s197, %s211
      %p213 = scmp.eq.s32.totalorder %s30, 0
      %p214 = por %p212, %p213
      %s216 = sadd.s32 %s215, 1
      %p219 = scmp.eq.s32.totalorder %s24, 1
      %p220 = scmp.ne.s32.totalorder %s215, %s217
      %p221 = scmp.eq.s32.totalorder %s24, 0
      %p222 = por %p220, %p221
      %p223 = scmp.ne.s32.totalorder %s215, %s217
      %p224 = scmp.eq.s32.totalorder %s29, 1
      %p225 = por %p223, %p224
      %p226 = scmp.ne.s32.totalorder %s217, %s218
      %p227 = scmp.eq.s32.totalorder %s29, 0
      %p228 = por %p226, %p227
      %p229 = scmp.ne.s32.totalorder %s217, %s218
      %p230 = scmp.eq.s32.totalorder %s30, 1
      %p231 = por %p229, %p230
      %p233 = scmp.ne.s32.totalorder %s218, %s232
      %p234 = scmp.eq.s32.totalorder %s30, 0
      %p235 = por %p233, %p234
      %s237 = sadd.s32 %s236, 1
      %p240 = scmp.eq.s32.totalorder %s24, 1
      %p241 = scmp.ne.s32.totalorder %s236, %s238
      %p242 = scmp.eq.s32.totalorder %s24, 0
      %p243 = por %p241, %p242
      %p244 = scmp.ne.s32.totalorder %s236, %s238
      %p245 = scmp.eq.s32.totalorder %s29, 1
      %p246 = por %p244, %p245
      %p247 = scmp.ne.s32.totalorder %s238, %s239
      %p248 = scmp.eq.s32.totalorder %s29, 0
      %p249 = por %p247, %p248
      %p250 = scmp.ne.s32.totalorder %s238, %s239
      %p251 = scmp.eq.s32.totalorder %s30, 1
      %p252 = por %p250, %p251
      %p254 = scmp.ne.s32.totalorder %s239, %s253
      %p255 = scmp.eq.s32.totalorder %s30, 0
      %p256 = por %p254, %p255
      %s258 = sadd.s32 %s257, 1
      %p261 = scmp.eq.s32.totalorder %s24, 1
      %p262 = scmp.ne.s32.totalorder %s257, %s259
      %p263 = scmp.eq.s32.totalorder %s24, 0
      %p264 = por %p262, %p263
      %p265 = scmp.ne.s32.totalorder %s257, %s259
      %p266 = scmp.eq.s32.totalorder %s29, 1
      %p267 = por %p265, %p266
      %p268 = scmp.ne.s32.totalorder %s259, %s260
      %p269 = scmp.eq.s32.totalorder %s29, 0
      %p270 = por %p268, %p269
      %p271 = scmp.ne.s32.totalorder %s259, %s260
      %p272 = scmp.eq.s32.totalorder %s30, 1
      %p273 = por %p271, %p272
      %p275 = scmp.ne.s32.totalorder %s260, %s274
      %p276 = scmp.eq.s32.totalorder %s30, 0
      %p277 = por %p275, %p276
      %s279 = sadd.s32 %s278, 1
      %p282 = scmp.eq.s32.totalorder %s24, 1
      %p283 = scmp.ne.s32.totalorder %s278, %s280
      %p284 = scmp.eq.s32.totalorder %s24, 0
      %p285 = por %p283, %p284
      %p286 = scmp.ne.s32.totalorder %s278, %s280
      %p287 = scmp.eq.s32.totalorder %s29, 1
      %p288 = por %p286, %p287
      %p289 = scmp.ne.s32.totalorder %s280, %s281
      %p290 = scmp.eq.s32.totalorder %s29, 0
      %p291 = por %p289, %p290
      %p292 = scmp.ne.s32.totalorder %s280, %s281
      %p293 = scmp.eq.s32.totalorder %s30, 1
      %p294 = por %p292, %p293
      %p296 = scmp.ne.s32.totalorder %s281, %s295
      %p297 = scmp.eq.s32.totalorder %s30, 0
      %p298 = por %p296, %p297
      %s300 = sadd.s32 %s299, 1
      %p303 = scmp.eq.s32.totalorder %s24, 1
      %p304 = scmp.ne.s32.totalorder %s299, %s301
      %p305 = scmp.eq.s32.totalorder %s24, 0
      %p306 = por %p304, %p305
      %p307 = scmp.ne.s32.totalorder %s299, %s301
      %p308 = scmp.eq.s32.totalorder %s29, 1
      %p309 = por %p307, %p308
      %p310 = scmp.ne.s32.totalorder %s301, %s302
      %p311 = scmp.eq.s32.totalorder %s29, 0
      %p312 = por %p310, %p311
      %p313 = scmp.ne.s32.totalorder %s301, %s302
      %p314 = scmp.eq.s32.totalorder %s30, 1
      %p315 = por %p313, %p314
      %p317 = scmp.ne.s32.totalorder %s302, %s316
      %p318 = scmp.eq.s32.totalorder %s30, 0
      %p319 = por %p317, %p318
      %s321 = sadd.s32 %s320, 1
      %p324 = scmp.eq.s32.totalorder %s24, 1
      %p325 = scmp.ne.s32.totalorder %s320, %s322
      %p326 = scmp.eq.s32.totalorder %s24, 0
      %p327 = por %p325, %p326
      %p328 = scmp.ne.s32.totalorder %s320, %s322
      %p329 = scmp.eq.s32.totalorder %s29, 1
      %p330 = por %p328, %p329
      %p331 = scmp.ne.s32.totalorder %s322, %s323
      %p332 = scmp.eq.s32.totalorder %s29, 0
      %p333 = por %p331, %p332
      %p334 = scmp.ne.s32.totalorder %s322, %s323
      %p335 = scmp.eq.s32.totalorder %s30, 1
      %p336 = por %p334, %p335
      %p338 = scmp.ne.s32.totalorder %s323, %s337
      %p339 = scmp.eq.s32.totalorder %s30, 0
      %p340 = por %p338, %p339
      %s342 = sadd.s32 %s341, 1
      %p345 = scmp.eq.s32.totalorder %s24, 1
      %p346 = scmp.ne.s32.totalorder %s341, %s343
      %p347 = scmp.eq.s32.totalorder %s24, 0
      %p348 = por %p346, %p347
      %p349 = scmp.ne.s32.totalorder %s341, %s343
      %p350 = scmp.eq.s32.totalorder %s29, 1
      %p351 = por %p349, %p350
      %p352 = scmp.ne.s32.totalorder %s343, %s344
      %p353 = scmp.eq.s32.totalorder %s29, 0
      %p354 = por %p352, %p353
      %p355 = scmp.ne.s32.totalorder %s343, %s344
      %p356 = scmp.eq.s32.totalorder %s30, 1
      %p357 = por %p355, %p356
      %p359 = scmp.ne.s32.totalorder %s344, %s358
      %p360 = scmp.eq.s32.totalorder %s30, 0
      %p361 = por %p359, %p360
      %s362 = ssub.s32 %s24, %s31
      %p363 = scmp.eq.s32.totalorder %s362, 0
      %s365 = sadd.s32 %s364, 1
      %s366 = scalar_select %p363, %s364, %s365
      %p369 = pneg %p363
      %p370 = scmp.eq.s32.totalorder %s24, 1
      %p371 = por %p369, %p370
      %p372 = scmp.ne.s32.totalorder %s364, %s367
      %p373 = scmp.eq.s32.totalorder %s24, 0
      %p374 = por %p372, %p373
      %p375 = scmp.ne.s32.totalorder %s364, %s367
      %p376 = scmp.eq.s32.totalorder %s29, 1
      %p377 = por %p375, %p376
      %p378 = scmp.ne.s32.totalorder %s367, %s368
      %p379 = scmp.eq.s32.totalorder %s29, 0
      %p380 = por %p378, %p379
      %p381 = scmp.ne.s32.totalorder %s367, %s368
      %p382 = scmp.eq.s32.totalorder %s30, 1
      %p383 = por %p381, %p382
      %p385 = scmp.ne.s32.totalorder %s368, %s384
      %p386 = scmp.eq.s32.totalorder %s30, 0
      %p387 = por %p385, %p386
      %p388 = scmp.le.s32.totalorder 1, %s24
      %p389 = scmp.lt.s32.totalorder %s24, 3
      %p390 = pnand %p388, %p389
      %p391 = pneg %p390
      // Predicated region
      $region9: #{tpu_custom_call.1} parent=5 // pred_check
        _
      $region10: #{tpu_custom_call.1} parent=5 // pred_check_branch
        %393 = sbr.rel (%p390) target = $region12
      $region11: #{tpu_custom_call.1} parent=5 // pred_region
        %s394 = ssub.s32 %s24, 1
        // Predicated region
        $region13: #{tpu_custom_call.1} parent=11 // pred_check
          %p395 = pneg %p123
        $region14: #{tpu_custom_call.1} parent=11 // pred_check_branch
          %397 = sbr.rel (%p395) target = $region16
        $region15: #{tpu_custom_call.1} parent=11 // pred_region
          _
        $region16: #{tpu_custom_call.1} parent=11 // pred_fallthru
          _
        // Predicated region
        $region17: #{tpu_custom_call.1} parent=11 // pred_check
          %p398 = pneg %p144
        $region18: #{tpu_custom_call.1} parent=11 // pred_check_branch
          %400 = sbr.rel (%p398) target = $region20
        $region19: #{tpu_custom_call.1} parent=11 // pred_region
          _
        $region20: #{tpu_custom_call.1} parent=11 // pred_fallthru
          _
        // Predicated region
        $region21: #{tpu_custom_call.1} parent=11 // pred_check
          %p401 = pneg %p165
        $region22: #{tpu_custom_call.1} parent=11 // pred_check_branch
          %403 = sbr.rel (%p401) target = $region24
        $region23: #{tpu_custom_call.1} parent=11 // pred_region
          _
        $region24: #{tpu_custom_call.1} parent=11 // pred_fallthru
          _
        // Predicated region
        $region25: #{tpu_custom_call.1} parent=11 // pred_check
          %p404 = pneg %p186
        $region26: #{tpu_custom_call.1} parent=11 // pred_check_branch
          %406 = sbr.rel (%p404) target = $region28
        $region27: #{tpu_custom_call.1} parent=11 // pred_region
          _
        $region28: #{tpu_custom_call.1} parent=11 // pred_fallthru
          _
        // Predicated region
        $region29: #{tpu_custom_call.1} parent=11 // pred_check
          %p407 = pneg %p207
        $region30: #{tpu_custom_call.1} parent=11 // pred_check_branch
          %409 = sbr.rel (%p407) target = $region32
        $region31: #{tpu_custom_call.1} parent=11 // pred_region
          _
        $region32: #{tpu_custom_call.1} parent=11 // pred_fallthru
          _
        // Predicated region
        $region33: #{tpu_custom_call.1} parent=11 // pred_check
          %p410 = pneg %p228
        $region34: #{tpu_custom_call.1} parent=11 // pred_check_branch
          %412 = sbr.rel (%p410) target = $region36
        $region35: #{tpu_custom_call.1} parent=11 // pred_region
          _
        $region36: #{tpu_custom_call.1} parent=11 // pred_fallthru
          _
        // Predicated region
        $region37: #{tpu_custom_call.1} parent=11 // pred_check
          %p413 = pneg %p249
        $region38: #{tpu_custom_call.1} parent=11 // pred_check_branch
          %415 = sbr.rel (%p413) target = $region40
        $region39: #{tpu_custom_call.1} parent=11 // pred_region
          _
        $region40: #{tpu_custom_call.1} parent=11 // pred_fallthru
          _
        // Predicated region
        $region41: #{tpu_custom_call.1} parent=11 // pred_check
          %p416 = pneg %p270
        $region42: #{tpu_custom_call.1} parent=11 // pred_check_branch
          %418 = sbr.rel (%p416) target = $region44
        $region43: #{tpu_custom_call.1} parent=11 // pred_region
          _
        $region44: #{tpu_custom_call.1} parent=11 // pred_fallthru
          _
        // Predicated region
        $region45: #{tpu_custom_call.1} parent=11 // pred_check
          %p419 = pneg %p291
        $region46: #{tpu_custom_call.1} parent=11 // pred_check_branch
          %421 = sbr.rel (%p419) target = $region48
        $region47: #{tpu_custom_call.1} parent=11 // pred_region
          _
        $region48: #{tpu_custom_call.1} parent=11 // pred_fallthru
          _
        // Predicated region
        $region49: #{tpu_custom_call.1} parent=11 // pred_check
          %p422 = pneg %p312
        $region50: #{tpu_custom_call.1} parent=11 // pred_check_branch
          %424 = sbr.rel (%p422) target = $region52
        $region51: #{tpu_custom_call.1} parent=11 // pred_region
          _
        $region52: #{tpu_custom_call.1} parent=11 // pred_fallthru
          _
        // Predicated region
        $region53: #{tpu_custom_call.1} parent=11 // pred_check
          %p425 = pneg %p333
        $region54: #{tpu_custom_call.1} parent=11 // pred_check_branch
          %427 = sbr.rel (%p425) target = $region56
        $region55: #{tpu_custom_call.1} parent=11 // pred_region
          _
        $region56: #{tpu_custom_call.1} parent=11 // pred_fallthru
          _
        // Predicated region
        $region57: #{tpu_custom_call.1} parent=11 // pred_check
          %p428 = pneg %p354
        $region58: #{tpu_custom_call.1} parent=11 // pred_check_branch
          %430 = sbr.rel (%p428) target = $region60
        $region59: #{tpu_custom_call.1} parent=11 // pred_region
          _
        $region60: #{tpu_custom_call.1} parent=11 // pred_fallthru
          _
      $region12: #{tpu_custom_call.1} parent=5 // pred_fallthru
        _
      %p431 = scmp.lt.s32.totalorder %s24, 2
      // Predicated region
      $region61: #{tpu_custom_call.1} parent=5 // pred_check
        %p432 = pneg %p431
      $region62: #{tpu_custom_call.1} parent=5 // pred_check_branch
        %434 = sbr.rel (%p432) target = $region64
      $region63: #{tpu_custom_call.1} parent=5 // pred_region
        // Predicated region
        $region65: #{tpu_custom_call.1} parent=63 // pred_check
          %p435 = pneg %p44
        $region66: #{tpu_custom_call.1} parent=63 // pred_check_branch
          %437 = sbr.rel (%p435) target = $region68
        $region67: #{tpu_custom_call.1} parent=63 // pred_region
          %p438 = scmp.lt.s32.totalorder %s24, 1
          %s439 = scalar_select %p438, %s24, 1
          %s440 = smul.addr %s439, 32
          %s441 = smul.addr %s440, 8
          %s442 = scalar_lea.vmem %s0, %s441
        $region68: #{tpu_custom_call.1} parent=63 // pred_fallthru
          _
        // Predicated region
        $region69: #{tpu_custom_call.1} parent=63 // pred_check
          %p443 = pneg %p70
        $region70: #{tpu_custom_call.1} parent=63 // pred_check_branch
          %445 = sbr.rel (%p443) target = $region72
        $region71: #{tpu_custom_call.1} parent=63 // pred_region
          %p446 = scmp.lt.s32.totalorder %s24, 1
          %s447 = scalar_select %p446, %s24, 1
          %s448 = smul.addr %s447, 8
          %s449 = smul.addr %s448, 8
          %s450 = scalar_lea.vmem %s1, %s449
        $region72: #{tpu_custom_call.1} parent=63 // pred_fallthru
          _
        // Predicated region
        $region73: #{tpu_custom_call.1} parent=63 // pred_check
          %p451 = pneg %p96
        $region74: #{tpu_custom_call.1} parent=63 // pred_check_branch
          %453 = sbr.rel (%p451) target = $region76
        $region75: #{tpu_custom_call.1} parent=63 // pred_region
          %p454 = scmp.lt.s32.totalorder %s24, 1
          %s455 = scalar_select %p454, %s24, 1
          %s456 = smul.addr %s455, 8
          %s457 = smul.addr %s456, 8
          %s458 = scalar_lea.vmem %s2, %s457
        $region76: #{tpu_custom_call.1} parent=63 // pred_fallthru
          _
      $region64: #{tpu_custom_call.1} parent=5 // pred_fallthru
        _
      %p459 = scmp.le.s32.totalorder 1, %s24
      %p460 = scmp.lt.s32.totalorder %s24, 3
      %p461 = pnand %p459, %p460
      %p462 = pneg %p461
      // Predicated region
      $region77: #{tpu_custom_call.1} parent=5 // pred_check
        _
      $region78: #{tpu_custom_call.1} parent=5 // pred_check_branch
        %464 = sbr.rel (%p461) target = $region80
      $region79: #{tpu_custom_call.1} parent=5 // pred_region
        %s465 = ssub.s32 %s24, 1
        %p466 = scmp.lt.s32.totalorder %s29, 1
        %s467 = scalar_select %p466, %s29, 1
        %s468 = smul.addr %s467, 32
        %s469 = smul.addr %s468, 8
        %s470 = scalar_lea.vmem %s0, %s469
        %p471 = pneg %p50
        %p472 = pneg %p47
        %p473 = scmp.lt.s32.totalorder %s29, 1
        %s474 = scalar_select %p473, %s29, 1
        %s475 = smul.addr %s474, 8
        %s476 = smul.addr %s475, 8
        %s477 = scalar_lea.vmem %s1, %s476
        %p478 = pneg %p76
        %p479 = pneg %p73
        %p480 = scmp.lt.s32.totalorder %s29, 1
        %s481 = scalar_select %p480, %s29, 1
        %s482 = smul.addr %s481, 8
        %s483 = smul.addr %s482, 8
        %s484 = scalar_lea.vmem %s2, %s483
        %p485 = pneg %p102
        %p486 = pneg %p99
        %p487 = pneg %p123
        %p488 = pneg %p120
        %p489 = pneg %p144
        %p490 = pneg %p141
        %p491 = pneg %p165
        %p492 = pneg %p162
        %p493 = pneg %p186
        %p494 = pneg %p183
        %p495 = pneg %p207
        %p496 = pneg %p204
        %p497 = pneg %p228
        %p498 = pneg %p225
        %p499 = pneg %p249
        %p500 = pneg %p246
        %p501 = pneg %p270
        %p502 = pneg %p267
        %p503 = pneg %p291
        %p504 = pneg %p288
        %p505 = pneg %p312
        %p506 = pneg %p309
        %p507 = pneg %p333
        %p508 = pneg %p330
        %p509 = pneg %p354
        %p510 = pneg %p351
        %p511 = pneg %p380
        %p512 = pneg %p377
        %s513 = sand.u32 %s367, 1
        %s514 = scalar_lea.sflag [#allocation3], %s513
        %s515 = sand.u32 %s367, 1
        %s516 = smul.addr %s515, 64
        %s517 = scalar_lea.vmem [#allocation2], %s516
        %p518 = scmp.lt.s32.totalorder %s29, 1
        %s519 = scalar_select %p518, %s29, 1
        %s520 = smul.addr %s519, 32
        %s521 = smul.addr %s520, 8
        %s522 = scalar_lea.vmem %s0, %s521
        %p523 = scmp.lt.s32.totalorder %s29, 1
        %s524 = scalar_select %p523, %s29, 1
        %s525 = smul.addr %s524, 8
        %s526 = smul.addr %s525, 8
        %s527 = scalar_lea.vmem %s1, %s526
        %p528 = scmp.lt.s32.totalorder %s29, 1
        %s529 = scalar_select %p528, %s29, 1
        %s530 = smul.addr %s529, 8
        %s531 = smul.addr %s530, 8
        %s532 = scalar_lea.vmem %s2, %s531
        %v534 = vld [vmem:[%s522] sm:$0xff]
        %v535 = vld [vmem:[%s522 + $0x8] sm:$0xff]
        %v536 = vld [vmem:[%s522 + $0x10] sm:$0xff]
        %v537 = vld [vmem:[%s522 + $0x18] sm:$0xff]
        %v538 = vld [vmem:[%s522 + $0x20] sm:$0xff]
        %v539 = vld [vmem:[%s522 + $0x28] sm:$0xff]
        %v540 = vld [vmem:[%s522 + $0x30] sm:$0xff]
        %v541 = vld [vmem:[%s522 + $0x38] sm:$0xff]
        %v542 = vld [vmem:[%s522 + $0x40] sm:$0xff]
        %v543 = vld [vmem:[%s522 + $0x48] sm:$0xff]
        %v544 = vld [vmem:[%s522 + $0x50] sm:$0xff]
        %v545 = vld [vmem:[%s522 + $0x58] sm:$0xff]
        %v546 = vld [vmem:[%s522 + $0x60] sm:$0xff]
        %v547 = vld [vmem:[%s522 + $0x68] sm:$0xff]
        %v548 = vld [vmem:[%s522 + $0x70] sm:$0xff]
        %v549 = vld [vmem:[%s522 + $0x78] sm:$0xff]
        %v550 = vld [vmem:[%s522 + $0x80] sm:$0xff]
        %v551 = vld [vmem:[%s522 + $0x88] sm:$0xff]
        %v552 = vld [vmem:[%s522 + $0x90] sm:$0xff]
        %v553 = vld [vmem:[%s522 + $0x98] sm:$0xff]
        %v554 = vld [vmem:[%s522 + $0xa0] sm:$0xff]
        %v555 = vld [vmem:[%s522 + $0xa8] sm:$0xff]
        %v556 = vld [vmem:[%s522 + $0xb0] sm:$0xff]
        %v557 = vld [vmem:[%s522 + $0xb8] sm:$0xff]
        %v558 = vld [vmem:[%s522 + $0xc0] sm:$0xff]
        %v559 = vld [vmem:[%s522 + $0xc8] sm:$0xff]
        %v560 = vld [vmem:[%s522 + $0xd0] sm:$0xff]
        %v561 = vld [vmem:[%s522 + $0xd8] sm:$0xff]
        %v562 = vld [vmem:[%s522 + $0xe0] sm:$0xff]
        %v563 = vld [vmem:[%s522 + $0xe8] sm:$0xff]
        %v564 = vld [vmem:[%s522 + $0xf0] sm:$0xff]
        %v565 = vld [vmem:[%s522 + $0xf8] sm:$0xff]
        %v566 = vpack.c.bf16 %v535, %v534
        %v567 = vpack.c.bf16 %v537, %v536
        %v568 = vpack.c.bf16 %v539, %v538
        %v569 = vpack.c.bf16 %v541, %v540
        %v570 = vpack.c.bf16 %v543, %v542
        %v571 = vpack.c.bf16 %v545, %v544
        %v572 = vpack.c.bf16 %v547, %v546
        %v573 = vpack.c.bf16 %v549, %v548
        %v574 = vpack.c.bf16 %v551, %v550
        %v575 = vpack.c.bf16 %v553, %v552
        %v576 = vpack.c.bf16 %v555, %v554
        %v577 = vpack.c.bf16 %v557, %v556
        %v578 = vpack.c.bf16 %v559, %v558
        %v579 = vpack.c.bf16 %v561, %v560
        %v580 = vpack.c.bf16 %v563, %v562
        %v581 = vpack.c.bf16 %v565, %v564
        %v582 = vld [vmem:[%s3] sm:$0xf]
        %v583 = vld [vmem:[%s3 + $0x4] sm:$0xf]
        %v584 = vld [vmem:[%s3 + $0x8] sm:$0xf]
        %v585 = vld [vmem:[%s3 + $0xc] sm:$0xf]
        %v586 = vld [vmem:[%s3 + $0x10] sm:$0xf]
        %v587 = vld [vmem:[%s3 + $0x14] sm:$0xf]
        %v588 = vld [vmem:[%s3 + $0x18] sm:$0xf]
        %v589 = vld [vmem:[%s3 + $0x1c] sm:$0xf]
        %v590 = vld [vmem:[%s4] sm:$0x1]
        %v592 = vlaneseq
        %v593 = vshrl.u32 %v592, 7
        %v594 = vsub.s32 0, %v593
        %v595 = vrot.slane %v590, %v594
        %v605 = vunpack.c.l.b16 %v582
        %v606 = vunpack.c.l.b16 %v583
        %v607 = vunpack.c.l.b16 %v584
        %v608 = vunpack.c.l.b16 %v585
        %v609 = vunpack.c.l.b16 %v586
        %v610 = vunpack.c.l.b16 %v587
        %v611 = vunpack.c.l.b16 %v588
        %v612 = vunpack.c.l.b16 %v589
        %v613 = vpack.c.b16 %v606, %v605
        %v614 = vpack.c.b16 %v608, %v607
        %v615 = vpack.c.b16 %v610, %v609
        %v616 = vpack.c.b16 %v612, %v611
        %vm621 = vcmask 523264
        %v623 = vsel %vm621, %v566, 0
        %v626 = vsel %vm621, %v567, 0
        %v629 = vsel %vm621, %v568, 0
        %v632 = vsel %vm621, %v569, 0
        %v635 = vsel %vm621, %v570, 0
        %v638 = vsel %vm621, %v571, 0
        %v641 = vsel %vm621, %v572, 0
        %v644 = vsel %vm621, %v573, 0
        %v647 = vsel %vm621, %v574, 0
        %v650 = vsel %vm621, %v575, 0
        %v653 = vsel %vm621, %v576, 0
        %v656 = vsel %vm621, %v577, 0
        %v659 = vsel %vm621, %v578, 0
        %v662 = vsel %vm621, %v579, 0
        %v665 = vsel %vm621, %v580, 0
        %v668 = vsel %vm621, %v581, 0
        %670 = vmatprep.subr.bf16.mxu0 0
        %671 = vmatpush1.bf16.msra.mxu0 %v613
        %672 = vmatprep.subr.bf16.mxu0 0
        %673 = vmatpush1.bf16.msra.mxu0 %v614
        %674 = vmatprep.subr.bf16.mxu0 0
        %675 = vmatpush1.bf16.msra.mxu0 %v615
        %676 = vmatprep.subr.bf16.mxu0 0
        %677 = vmatpush1.bf16.msra.mxu0 %v616
        %678 = vmatprep.subr.bf16.mxu0 0
        %679 = vmatpush1.bf16.msra.mxu0 0
        %680 = vmatprep.subr.bf16.mxu0 0
        %681 = vmatpush1.bf16.msra.mxu0 0
        %682 = vmatprep.subr.bf16.mxu0 0
        %683 = vmatpush1.bf16.msra.mxu0 0
        %684 = vmatprep.subr.bf16.mxu0 0
        %685 = vmatpush1.bf16.msra.mxu0 0
        %686 = vmatprep.subr.bf16.mxu0 0
        %687 = vmatpush1.bf16.msra.mxu0 0
        %688 = vmatprep.subr.bf16.mxu0 0
        %689 = vmatpush1.bf16.msra.mxu0 0
        %690 = vmatprep.subr.bf16.mxu0 0
        %691 = vmatpush1.bf16.msra.mxu0 0
        %692 = vmatprep.subr.bf16.mxu0 0
        %693 = vmatpush1.bf16.msra.mxu0 0
        %694 = vmatprep.subr.bf16.mxu0 0
        %695 = vmatpush1.bf16.msra.mxu0 0
        %696 = vmatprep.subr.bf16.mxu0 0
        %697 = vmatpush1.bf16.msra.mxu0 0
        %698 = vmatprep.subr.bf16.mxu0 0
        %699 = vmatpush1.bf16.msra.mxu0 0
        %700 = vmatprep.subr.bf16.mxu0 0
        %701 = vmatpush1.bf16.msra.mxu0 0
        %702 = vmatprep.mubr.bf16.mxu0 0
        %703 = vmatmul.mubr.bf16.gmra.mrb[0].mxu0 %v623
        %v704 = vpop.f32.mrb[0].mxu0
        %v705 = vadd.f32 %v595, %v704
        %v706 = vpop.f32.mrb[0].mxu0
        %v707 = vpop.f32.mrb[0].mxu0
        %v708 = vadd.f32 %v595, %v707
        %v709 = vpop.f32.mrb[0].mxu0
        %710 = vmatprep.mubr.bf16.mxu0 0
        %711 = vmatmul.mubr.bf16.gmra.mrb[0].mxu0 %v626
        %v712 = vpop.f32.mrb[0].mxu0
        %v713 = vadd.f32 %v595, %v712
        %v714 = vpop.f32.mrb[0].mxu0
        %v715 = vpop.f32.mrb[0].mxu0
        %v716 = vadd.f32 %v595, %v715
        %v717 = vpop.f32.mrb[0].mxu0
        %718 = vmatprep.mubr.bf16.mxu0 0
        %719 = vmatmul.mubr.bf16.gmra.mrb[0].mxu0 %v629
        %v720 = vpop.f32.mrb[0].mxu0
        %v721 = vadd.f32 %v595, %v720
        %v722 = vpop.f32.mrb[0].mxu0
        %v723 = vpop.f32.mrb[0].mxu0
        %v724 = vadd.f32 %v595, %v723
        %v725 = vpop.f32.mrb[0].mxu0
        %726 = vmatprep.mubr.bf16.mxu0 0
        %727 = vmatmul.mubr.bf16.gmra.mrb[0].mxu0 %v632
        %v728 = vpop.f32.mrb[0].mxu0
        %v729 = vadd.f32 %v595, %v728
        %v730 = vpop.f32.mrb[0].mxu0
        %v731 = vpop.f32.mrb[0].mxu0
        %v732 = vadd.f32 %v595, %v731
        %v733 = vpop.f32.mrb[0].mxu0
        %734 = vmatprep.mubr.bf16.mxu0 0
        %735 = vmatmul.mubr.bf16.gmra.mrb[0].mxu0 %v635
        %v736 = vpop.f32.mrb[0].mxu0
        %v737 = vadd.f32 %v595, %v736
        %v738 = vpop.f32.mrb[0].mxu0
        %v739 = vpop.f32.mrb[0].mxu0
        %v740 = vadd.f32 %v595, %v739
        %v741 = vpop.f32.mrb[0].mxu0
        %742 = vmatprep.mubr.bf16.mxu0 0
        %743 = vmatmul.mubr.bf16.gmra.mrb[0].mxu0 %v638
        %v744 = vpop.f32.mrb[0].mxu0
        %v745 = vadd.f32 %v595, %v744
        %v746 = vpop.f32.mrb[0].mxu0
        %v747 = vpop.f32.mrb[0].mxu0
        %v748 = vadd.f32 %v595, %v747
        %v749 = vpop.f32.mrb[0].mxu0
        %750 = vmatprep.mubr.bf16.mxu0 0
        %751 = vmatmul.mubr.bf16.gmra.mrb[0].mxu0 %v641
        %v752 = vpop.f32.mrb[0].mxu0
        %v753 = vadd.f32 %v595, %v752
        %v754 = vpop.f32.mrb[0].mxu0
        %v755 = vpop.f32.mrb[0].mxu0
        %v756 = vadd.f32 %v595, %v755
        %v757 = vpop.f32.mrb[0].mxu0
        %758 = vmatprep.mubr.bf16.mxu0 0
        %759 = vmatmul.mubr.bf16.gmra.mrb[0].mxu0 %v644
        %v760 = vpop.f32.mrb[0].mxu0
        %v761 = vadd.f32 %v595, %v760
        %v762 = vpop.f32.mrb[0].mxu0
        %v763 = vpop.f32.mrb[0].mxu0
        %v764 = vadd.f32 %v595, %v763
        %v765 = vpop.f32.mrb[0].mxu0
        %766 = vmatprep.mubr.bf16.mxu0 0
        %767 = vmatmul.mubr.bf16.gmra.mrb[0].mxu0 %v647
        %v768 = vpop.f32.mrb[0].mxu0
        %v769 = vadd.f32 %v595, %v768
        %v770 = vpop.f32.mrb[0].mxu0
        %v771 = vpop.f32.mrb[0].mxu0
        %v772 = vadd.f32 %v595, %v771
        %v773 = vpop.f32.mrb[0].mxu0
        %774 = vmatprep.mubr.bf16.mxu0 0
        %775 = vmatmul.mubr.bf16.gmra.mrb[0].mxu0 %v650
        %v776 = vpop.f32.mrb[0].mxu0
        %v777 = vadd.f32 %v595, %v776
        %v778 = vpop.f32.mrb[0].mxu0
        %v779 = vpop.f32.mrb[0].mxu0
        %v780 = vadd.f32 %v595, %v779
        %v781 = vpop.f32.mrb[0].mxu0
        %782 = vmatprep.mubr.bf16.mxu0 0
        %783 = vmatmul.mubr.bf16.gmra.mrb[0].mxu0 %v653
        %v784 = vpop.f32.mrb[0].mxu0
        %v785 = vadd.f32 %v595, %v784
        %v786 = vpop.f32.mrb[0].mxu0
        %v787 = vpop.f32.mrb[0].mxu0
        %v788 = vadd.f32 %v595, %v787
        %v789 = vpop.f32.mrb[0].mxu0
        %790 = vmatprep.mubr.bf16.mxu0 0
        %791 = vmatmul.mubr.bf16.gmra.mrb[0].mxu0 %v656
        %v792 = vpop.f32.mrb[0].mxu0
        %v793 = vadd.f32 %v595, %v792
        %v794 = vpop.f32.mrb[0].mxu0
        %v795 = vpop.f32.mrb[0].mxu0
        %v796 = vadd.f32 %v595, %v795
        %v797 = vpop.f32.mrb[0].mxu0
        %798 = vmatprep.mubr.bf16.mxu0 0
        %799 = vmatmul.mubr.bf16.gmra.mrb[0].mxu0 %v659
        %v800 = vpop.f32.mrb[0].mxu0
        %v801 = vadd.f32 %v595, %v800
        %v802 = vpop.f32.mrb[0].mxu0
        %v803 = vpop.f32.mrb[0].mxu0
        %v804 = vadd.f32 %v595, %v803
        %v805 = vpop.f32.mrb[0].mxu0
        %806 = vmatprep.mubr.bf16.mxu0 0
        %807 = vmatmul.mubr.bf16.gmra.mrb[0].mxu0 %v662
        %v808 = vpop.f32.mrb[0].mxu0
        %v809 = vadd.f32 %v595, %v808
        %v810 = vpop.f32.mrb[0].mxu0
        %v811 = vpop.f32.mrb[0].mxu0
        %v812 = vadd.f32 %v595, %v811
        %v813 = vpop.f32.mrb[0].mxu0
        %814 = vmatprep.mubr.bf16.mxu0 0
        %815 = vmatmul.mubr.bf16.gmra.mrb[0].mxu0 %v665
        %v816 = vpop.f32.mrb[0].mxu0
        %v817 = vadd.f32 %v595, %v816
        %v818 = vpop.f32.mrb[0].mxu0
        %v819 = vpop.f32.mrb[0].mxu0
        %v820 = vadd.f32 %v595, %v819
        %v821 = vpop.f32.mrb[0].mxu0
        %822 = vmatprep.mubr.bf16.mxu0 0
        %823 = vmatmul.mubr.bf16.gmra.mrb[0].mxu0 %v668
        %v824 = vpop.f32.mrb[0].mxu0
        %v825 = vadd.f32 %v595, %v824
        %v826 = vpop.f32.mrb[0].mxu0
        %v827 = vpop.f32.mrb[0].mxu0
        %v828 = vadd.f32 %v595, %v827
        %v829 = vpop.f32.mrb[0].mxu0
        %830 = vdwg.mxu0
        %v831 = vmax.f32 %v705, 0.0
        %v832 = vmax.f32 %v708, 0.0
        %v833 = vmax.f32 %v713, 0.0
        %v834 = vmax.f32 %v716, 0.0
        %v835 = vmax.f32 %v721, 0.0
        %v836 = vmax.f32 %v724, 0.0
        %v837 = vmax.f32 %v729, 0.0
        %v838 = vmax.f32 %v732, 0.0
        %v839 = vmax.f32 %v737, 0.0
        %v840 = vmax.f32 %v740, 0.0
        %v841 = vmax.f32 %v745, 0.0
        %v842 = vmax.f32 %v748, 0.0
        %v843 = vmax.f32 %v753, 0.0
        %v844 = vmax.f32 %v756, 0.0
        %v845 = vmax.f32 %v761, 0.0
        %v846 = vmax.f32 %v764, 0.0
        %v847 = vmax.f32 %v769, 0.0
        %v848 = vmax.f32 %v772, 0.0
        %v849 = vmax.f32 %v777, 0.0
        %v850 = vmax.f32 %v780, 0.0
        %v851 = vmax.f32 %v785, 0.0
        %v852 = vmax.f32 %v788, 0.0
        %v853 = vmax.f32 %v793, 0.0
        %v854 = vmax.f32 %v796, 0.0
        %v855 = vmax.f32 %v801, 0.0
        %v856 = vmax.f32 %v804, 0.0
        %v857 = vmax.f32 %v809, 0.0
        %v858 = vmax.f32 %v812, 0.0
        %v859 = vmax.f32 %v817, 0.0
        %v860 = vmax.f32 %v820, 0.0
        %v861 = vmax.f32 %v825, 0.0
        %v862 = vmax.f32 %v828, 0.0
        %v863 = vld [vmem:[%s5] sm:$0xff]
        %v864 = vld [vmem:[%s5 + $0x8] sm:$0xff]
        %v865 = vld [vmem:[%s5 + $0x10] sm:$0xff]
        %v866 = vld [vmem:[%s5 + $0x18] sm:$0xff]
        %v867 = vld [vmem:[%s5 + $0x20] sm:$0xff]
        %v868 = vld [vmem:[%s5 + $0x28] sm:$0xff]
        %v869 = vld [vmem:[%s5 + $0x30] sm:$0xff]
        %v870 = vld [vmem:[%s5 + $0x38] sm:$0xff]
        %v871 = vld [vmem:[%s5 + $0x40] sm:$0xff]
        %v872 = vld [vmem:[%s5 + $0x48] sm:$0xff]
        %v873 = vld [vmem:[%s5 + $0x50] sm:$0xff]
        %v874 = vld [vmem:[%s5 + $0x58] sm:$0xff]
        %v875 = vld [vmem:[%s5 + $0x60] sm:$0xff]
        %v876 = vld [vmem:[%s5 + $0x68] sm:$0xff]
        %v877 = vld [vmem:[%s5 + $0x70] sm:$0xff]
        %v878 = vld [vmem:[%s5 + $0x78] sm:$0xff]
        %v879 = vld [vmem:[%s5 + $0x80] sm:$0xff]
        %v880 = vld [vmem:[%s5 + $0x88] sm:$0xff]
        %v881 = vld [vmem:[%s5 + $0x90] sm:$0xff]
        %v882 = vld [vmem:[%s5 + $0x98] sm:$0xff]
        %v883 = vld [vmem:[%s5 + $0xa0] sm:$0xff]
        %v884 = vld [vmem:[%s5 + $0xa8] sm:$0xff]
        %v885 = vld [vmem:[%s5 + $0xb0] sm:$0xff]
        %v886 = vld [vmem:[%s5 + $0xb8] sm:$0xff]
        %v887 = vld [vmem:[%s5 + $0xc0] sm:$0xff]
        %v888 = vld [vmem:[%s5 + $0xc8] sm:$0xff]
        %v889 = vld [vmem:[%s5 + $0xd0] sm:$0xff]
        %v890 = vld [vmem:[%s5 + $0xd8] sm:$0xff]
        %v891 = vld [vmem:[%s5 + $0xe0] sm:$0xff]
        %v892 = vld [vmem:[%s5 + $0xe8] sm:$0xff]
        %v893 = vld [vmem:[%s5 + $0xf0] sm:$0xff]
        %v894 = vld [vmem:[%s5 + $0xf8] sm:$0xff]
        %v895 = vld [vmem:[%s5 + $0x100] sm:$0xff]
        %v896 = vld [vmem:[%s5 + $0x108] sm:$0xff]
        %v897 = vld [vmem:[%s5 + $0x110] sm:$0xff]
        %v898 = vld [vmem:[%s5 + $0x118] sm:$0xff]
        %v899 = vld [vmem:[%s5 + $0x120] sm:$0xff]
        %v900 = vld [vmem:[%s5 + $0x128] sm:$0xff]
        %v901 = vld [vmem:[%s5 + $0x130] sm:$0xff]
        %v902 = vld [vmem:[%s5 + $0x138] sm:$0xff]
        %v903 = vld [vmem:[%s5 + $0x140] sm:$0xff]
        %v904 = vld [vmem:[%s5 + $0x148] sm:$0xff]
        %v905 = vld [vmem:[%s5 + $0x150] sm:$0xff]
        %v906 = vld [vmem:[%s5 + $0x158] sm:$0xff]
        %v907 = vld [vmem:[%s5 + $0x160] sm:$0xff]
        %v908 = vld [vmem:[%s5 + $0x168] sm:$0xff]
        %v909 = vld [vmem:[%s5 + $0x170] sm:$0xff]
        %v910 = vld [vmem:[%s5 + $0x178] sm:$0xff]
        %v911 = vld [vmem:[%s5 + $0x180] sm:$0xff]
        %v912 = vld [vmem:[%s5 + $0x188] sm:$0xff]
        %v913 = vld [vmem:[%s5 + $0x190] sm:$0xff]
        %v914 = vld [vmem:[%s5 + $0x198] sm:$0xff]
        %v915 = vld [vmem:[%s5 + $0x1a0] sm:$0xff]
        %v916 = vld [vmem:[%s5 + $0x1a8] sm:$0xff]
        %v917 = vld [vmem:[%s5 + $0x1b0] sm:$0xff]
        %v918 = vld [vmem:[%s5 + $0x1b8] sm:$0xff]
        %v919 = vld [vmem:[%s5 + $0x1c0] sm:$0xff]
        %v920 = vld [vmem:[%s5 + $0x1c8] sm:$0xff]
        %v921 = vld [vmem:[%s5 + $0x1d0] sm:$0xff]
        %v922 = vld [vmem:[%s5 + $0x1d8] sm:$0xff]
        %v923 = vld [vmem:[%s5 + $0x1e0] sm:$0xff]
        %v924 = vld [vmem:[%s5 + $0x1e8] sm:$0xff]
        %v925 = vld [vmem:[%s5 + $0x1f0] sm:$0xff]
        %v926 = vld [vmem:[%s5 + $0x1f8] sm:$0xff]
        %v927 = vld [vmem:[%s5 + $0x200] sm:$0xff]
        %v928 = vld [vmem:[%s5 + $0x208] sm:$0xff]
        %v929 = vld [vmem:[%s5 + $0x210] sm:$0xff]
        %v930 = vld [vmem:[%s5 + $0x218] sm:$0xff]
        %v931 = vld [vmem:[%s5 + $0x220] sm:$0xff]
        %v932 = vld [vmem:[%s5 + $0x228] sm:$0xff]
        %v933 = vld [vmem:[%s5 + $0x230] sm:$0xff]
        %v934 = vld [vmem:[%s5 + $0x238] sm:$0xff]
        %v935 = vpack.c.bf16 %v832, %v831
        %v936 = vpack.c.bf16 %v834, %v833
        %v937 = vpack.c.bf16 %v836, %v835
        %v938 = vpack.c.bf16 %v838, %v837
        %v939 = vpack.c.bf16 %v840, %v839
        %v940 = vpack.c.bf16 %v842, %v841
        %v941 = vpack.c.bf16 %v844, %v843
        %v942 = vpack.c.bf16 %v846, %v845
        %v943 = vpack.c.bf16 %v848, %v847
        %v944 = vpack.c.bf16 %v850, %v849
        %v945 = vpack.c.bf16 %v852, %v851
        %v946 = vpack.c.bf16 %v854, %v853
        %v947 = vpack.c.bf16 %v856, %v855
        %v948 = vpack.c.bf16 %v858, %v857
        %v949 = vpack.c.bf16 %v860, %v859
        %v950 = vpack.c.bf16 %v862, %v861
        %v1023 = vunpack.c.l.b16 %v863
        %v1024 = vunpack.c.h.b16 %v863
        %v1025 = vunpack.c.l.b16 %v864
        %v1026 = vunpack.c.h.b16 %v864
        %v1027 = vunpack.c.l.b16 %v865
        %v1028 = vunpack.c.h.b16 %v865
        %v1029 = vunpack.c.l.b16 %v866
        %v1030 = vunpack.c.h.b16 %v866
        %v1031 = vunpack.c.l.b16 %v867
        %v1032 = vunpack.c.h.b16 %v867
        %v1033 = vunpack.c.l.b16 %v868
        %v1034 = vunpack.c.h.b16 %v868
        %v1035 = vunpack.c.l.b16 %v869
        %v1036 = vunpack.c.h.b16 %v869
        %v1037 = vunpack.c.l.b16 %v870
        %v1038 = vunpack.c.h.b16 %v870
        %v1039 = vunpack.c.l.b16 %v871
        %v1040 = vunpack.c.h.b16 %v871
        %v1041 = vunpack.c.l.b16 %v872
        %v1042 = vunpack.c.h.b16 %v872
        %v1043 = vunpack.c.l.b16 %v873
        %v1044 = vunpack.c.h.b16 %v873
        %v1045 = vunpack.c.l.b16 %v874
        %v1046 = vunpack.c.h.b16 %v874
        %v1047 = vunpack.c.l.b16 %v875
        %v1048 = vunpack.c.h.b16 %v875
        %v1049 = vunpack.c.l.b16 %v876
        %v1050 = vunpack.c.h.b16 %v876
        %v1051 = vunpack.c.l.b16 %v877
        %v1052 = vunpack.c.h.b16 %v877
        %v1053 = vunpack.c.l.b16 %v878
        %v1054 = vunpack.c.h.b16 %v878
        %v1055 = vunpack.c.l.b16 %v879
        %v1056 = vunpack.c.h.b16 %v879
        %v1057 = vunpack.c.l.b16 %v880
        %v1058 = vunpack.c.h.b16 %v880
        %v1059 = vunpack.c.l.b16 %v881
        %v1060 = vunpack.c.h.b16 %v881
        %v1061 = vunpack.c.l.b16 %v882
        %v1062 = vunpack.c.h.b16 %v882
        %v1063 = vunpack.c.l.b16 %v883
        %v1064 = vunpack.c.h.b16 %v883
        %v1065 = vunpack.c.l.b16 %v884
        %v1066 = vunpack.c.h.b16 %v884
        %v1067 = vunpack.c.l.b16 %v885
        %v1068 = vunpack.c.h.b16 %v885
        %v1069 = vunpack.c.l.b16 %v886
        %v1070 = vunpack.c.h.b16 %v886
        %v1071 = vunpack.c.l.b16 %v887
        %v1072 = vunpack.c.h.b16 %v887
        %v1073 = vunpack.c.l.b16 %v888
        %v1074 = vunpack.c.h.b16 %v888
        %v1075 = vunpack.c.l.b16 %v889
        %v1076 = vunpack.c.h.b16 %v889
        %v1077 = vunpack.c.l.b16 %v890
        %v1078 = vunpack.c.h.b16 %v890
        %v1079 = vunpack.c.l.b16 %v891
        %v1080 = vunpack.c.h.b16 %v891
        %v1081 = vunpack.c.l.b16 %v892
        %v1082 = vunpack.c.h.b16 %v892
        %v1083 = vunpack.c.l.b16 %v893
        %v1084 = vunpack.c.h.b16 %v893
        %v1085 = vunpack.c.l.b16 %v894
        %v1086 = vunpack.c.h.b16 %v894
        %v1087 = vunpack.c.l.b16 %v895
        %v1088 = vunpack.c.h.b16 %v895
        %v1089 = vunpack.c.l.b16 %v896
        %v1090 = vunpack.c.h.b16 %v896
        %v1091 = vunpack.c.l.b16 %v897
        %v1092 = vunpack.c.h.b16 %v897
        %v1093 = vunpack.c.l.b16 %v898
        %v1094 = vunpack.c.h.b16 %v898
        %v1095 = vunpack.c.l.b16 %v899
        %v1096 = vunpack.c.h.b16 %v899
        %v1097 = vunpack.c.l.b16 %v900
        %v1098 = vunpack.c.h.b16 %v900
        %v1099 = vunpack.c.l.b16 %v901
        %v1100 = vunpack.c.h.b16 %v901
        %v1101 = vunpack.c.l.b16 %v902
        %v1102 = vunpack.c.h.b16 %v902
        %v1103 = vunpack.c.l.b16 %v903
        %v1104 = vunpack.c.h.b16 %v903
        %v1105 = vunpack.c.l.b16 %v904
        %v1106 = vunpack.c.h.b16 %v904
        %v1107 = vunpack.c.l.b16 %v905
        %v1108 = vunpack.c.h.b16 %v905
        %v1109 = vunpack.c.l.b16 %v906
        %v1110 = vunpack.c.h.b16 %v906
        %v1111 = vunpack.c.l.b16 %v907
        %v1112 = vunpack.c.h.b16 %v907
        %v1113 = vunpack.c.l.b16 %v908
        %v1114 = vunpack.c.h.b16 %v908
        %v1115 = vunpack.c.l.b16 %v909
        %v1116 = vunpack.c.h.b16 %v909
        %v1117 = vunpack.c.l.b16 %v910
        %v1118 = vunpack.c.h.b16 %v910
        %v1119 = vunpack.c.l.b16 %v911
        %v1120 = vunpack.c.h.b16 %v911
        %v1121 = vunpack.c.l.b16 %v912
        %v1122 = vunpack.c.h.b16 %v912
        %v1123 = vunpack.c.l.b16 %v913
        %v1124 = vunpack.c.h.b16 %v913
        %v1125 = vunpack.c.l.b16 %v914
        %v1126 = vunpack.c.h.b16 %v914
        %v1127 = vunpack.c.l.b16 %v915
        %v1128 = vunpack.c.h.b16 %v915
        %v1129 = vunpack.c.l.b16 %v916
        %v1130 = vunpack.c.h.b16 %v916
        %v1131 = vunpack.c.l.b16 %v917
        %v1132 = vunpack.c.h.b16 %v917
        %v1133 = vunpack.c.l.b16 %v918
        %v1134 = vunpack.c.h.b16 %v918
        %v1135 = vunpack.c.l.b16 %v919
        %v1136 = vunpack.c.h.b16 %v919
        %v1137 = vunpack.c.l.b16 %v920
        %v1138 = vunpack.c.h.b16 %v920
        %v1139 = vunpack.c.l.b16 %v921
        %v1140 = vunpack.c.h.b16 %v921
        %v1141 = vunpack.c.l.b16 %v922
        %v1142 = vunpack.c.h.b16 %v922
        %v1143 = vunpack.c.l.b16 %v923
        %v1144 = vunpack.c.h.b16 %v923
        %v1145 = vunpack.c.l.b16 %v924
        %v1146 = vunpack.c.h.b16 %v924
        %v1147 = vunpack.c.l.b16 %v925
        %v1148 = vunpack.c.h.b16 %v925
        %v1149 = vunpack.c.l.b16 %v926
        %v1150 = vunpack.c.h.b16 %v926
        %v1151 = vunpack.c.l.b16 %v927
        %v1152 = vunpack.c.h.b16 %v927
        %v1153 = vunpack.c.l.b16 %v928
        %v1154 = vunpack.c.h.b16 %v928
        %v1155 = vunpack.c.l.b16 %v929
        %v1156 = vunpack.c.h.b16 %v929
        %v1157 = vunpack.c.l.b16 %v930
        %v1158 = vunpack.c.h.b16 %v930
        %v1159 = vunpack.c.l.b16 %v931
        %v1160 = vunpack.c.h.b16 %v931
        %v1161 = vunpack.c.l.b16 %v932
        %v1162 = vunpack.c.h.b16 %v932
        %v1163 = vunpack.c.l.b16 %v933
        %v1164 = vunpack.c.h.b16 %v933
        %v1165 = vunpack.c.l.b16 %v934
        %v1166 = vunpack.c.h.b16 %v934
        %v1167 = vpack.c.b16 %v1025, %v1023
        %v1168 = vpack.c.b16 %v1026, %v1024
        %v1169 = vpack.c.b16 %v1029, %v1027
        %v1170 = vpack.c.b16 %v1030, %v1028
        %v1171 = vpack.c.b16 %v1033, %v1031
        %v1172 = vpack.c.b16 %v1034, %v1032
        %v1173 = vpack.c.b16 %v1037, %v1035
        %v1174 = vpack.c.b16 %v1038, %v1036
        %v1175 = vpack.c.b16 %v1041, %v1039
        %v1176 = vpack.c.b16 %v1042, %v1040
        %v1177 = vpack.c.b16 %v1045, %v1043
        %v1178 = vpack.c.b16 %v1046, %v1044
        %v1179 = vpack.c.b16 %v1049, %v1047
        %v1180 = vpack.c.b16 %v1050, %v1048
        %v1181 = vpack.c.b16 %v1053, %v1051
        %v1182 = vpack.c.b16 %v1054, %v1052
        %v1183 = vpack.c.b16 %v1057, %v1055
        %v1184 = vpack.c.b16 %v1058, %v1056
        %v1185 = vpack.c.b16 %v1061, %v1059
        %v1186 = vpack.c.b16 %v1062, %v1060
        %v1187 = vpack.c.b16 %v1065, %v1063
        %v1188 = vpack.c.b16 %v1066, %v1064
        %v1189 = vpack.c.b16 %v1069, %v1067
        %v1190 = vpack.c.b16 %v1070, %v1068
        %v1191 = vpack.c.b16 %v1073, %v1071
        %v1192 = vpack.c.b16 %v1074, %v1072
        %v1193 = vpack.c.b16 %v1077, %v1075
        %v1194 = vpack.c.b16 %v1078, %v1076
        %v1195 = vpack.c.b16 %v1081, %v1079
        %v1196 = vpack.c.b16 %v1082, %v1080
        %v1197 = vpack.c.b16 %v1085, %v1083
        %v1198 = vpack.c.b16 %v1086, %v1084
        %v1199 = vpack.c.b16 %v1089, %v1087
        %v1200 = vpack.c.b16 %v1090, %v1088
        %v1201 = vpack.c.b16 %v1093, %v1091
        %v1202 = vpack.c.b16 %v1094, %v1092
        %v1203 = vpack.c.b16 %v1097, %v1095
        %v1204 = vpack.c.b16 %v1098, %v1096
        %v1205 = vpack.c.b16 %v1101, %v1099
        %v1206 = vpack.c.b16 %v1102, %v1100
        %v1207 = vpack.c.b16 %v1105, %v1103
        %v1208 = vpack.c.b16 %v1106, %v1104
        %v1209 = vpack.c.b16 %v1109, %v1107
        %v1210 = vpack.c.b16 %v1110, %v1108
        %v1211 = vpack.c.b16 %v1113, %v1111
        %v1212 = vpack.c.b16 %v1114, %v1112
        %v1213 = vpack.c.b16 %v1117, %v1115
        %v1214 = vpack.c.b16 %v1118, %v1116
        %v1215 = vpack.c.b16 %v1121, %v1119
        %v1216 = vpack.c.b16 %v1122, %v1120
        %v1217 = vpack.c.b16 %v1125, %v1123
        %v1218 = vpack.c.b16 %v1126, %v1124
        %v1219 = vpack.c.b16 %v1129, %v1127
        %v1220 = vpack.c.b16 %v1130, %v1128
        %v1221 = vpack.c.b16 %v1133, %v1131
        %v1222 = vpack.c.b16 %v1134, %v1132
        %v1223 = vpack.c.b16 %v1137, %v1135
        %v1224 = vpack.c.b16 %v1138, %v1136
        %v1225 = vpack.c.b16 %v1141, %v1139
        %v1226 = vpack.c.b16 %v1142, %v1140
        %v1227 = vpack.c.b16 %v1145, %v1143
        %v1228 = vpack.c.b16 %v1146, %v1144
        %v1229 = vpack.c.b16 %v1149, %v1147
        %v1230 = vpack.c.b16 %v1150, %v1148
        %v1231 = vpack.c.b16 %v1153, %v1151
        %v1232 = vpack.c.b16 %v1154, %v1152
        %v1233 = vpack.c.b16 %v1157, %v1155
        %v1234 = vpack.c.b16 %v1158, %v1156
        %v1235 = vpack.c.b16 %v1161, %v1159
        %v1236 = vpack.c.b16 %v1162, %v1160
        %v1237 = vpack.c.b16 %v1165, %v1163
        %v1238 = vpack.c.b16 %v1166, %v1164
        %1311 = vmatprep.subr.bf16.mxu0 0
        %1312 = vmatpush1.bf16.msra.mxu0 %v935
        %1313 = vmatprep.subr.bf16.mxu0 0
        %1314 = vmatpush1.bf16.msra.mxu0 %v936
        %1315 = vmatprep.subr.bf16.mxu0 0
        %1316 = vmatpush1.bf16.msra.mxu0 %v937
        %1317 = vmatprep.subr.bf16.mxu0 0
        %1318 = vmatpush1.bf16.msra.mxu0 %v938
        %1319 = vmatprep.subr.bf16.mxu0 0
        %1320 = vmatpush1.bf16.msra.mxu0 %v939
        %1321 = vmatprep.subr.bf16.mxu0 0
        %1322 = vmatpush1.bf16.msra.mxu0 %v940
        %1323 = vmatprep.subr.bf16.mxu0 0
        %1324 = vmatpush1.bf16.msra.mxu0 %v941
        %1325 = vmatprep.subr.bf16.mxu0 0
        %1326 = vmatpush1.bf16.msra.mxu0 %v942
        %1327 = vmatprep.subr.bf16.mxu0 0
        %1328 = vmatpush1.bf16.msra.mxu0 %v943
        %1329 = vmatprep.subr.bf16.mxu0 0
        %1330 = vmatpush1.bf16.msra.mxu0 %v944
        %1331 = vmatprep.subr.bf16.mxu0 0
        %1332 = vmatpush1.bf16.msra.mxu0 %v945
        %1333 = vmatprep.subr.bf16.mxu0 0
        %1334 = vmatpush1.bf16.msra.mxu0 %v946
        %1335 = vmatprep.subr.bf16.mxu0 0
        %1336 = vmatpush1.bf16.msra.mxu0 %v947
        %1337 = vmatprep.subr.bf16.mxu0 0
        %1338 = vmatpush1.bf16.msra.mxu0 %v948
        %1339 = vmatprep.subr.bf16.mxu0 0
        %1340 = vmatpush1.bf16.msra.mxu0 %v949
        %1341 = vmatprep.subr.bf16.mxu0 0
        %1342 = vmatpush1.bf16.msra.mxu0 %v950
        %1343 = vmatprep.mubr.bf16.mxu0 %v1168
        %1344 = vmatmul.mubr.bf16.gmra.mrb[0].mxu0 %v1167
        %v1345 = vpop.f32.mrb[0].mxu0
        %v1346 = vadd.f32 0.0, %v1345
        %v1347 = vpop.f32.mrb[0].mxu0
        %v1348 = vpop.f32.mrb[0].mxu0
        %v1349 = vadd.f32 0.0, %v1348
        %v1350 = vpop.f32.mrb[0].mxu0
        %1351 = vmatprep.mubr.bf16.mxu0 %v1170
        %1352 = vmatmul.mubr.bf16.gmra.mrb[0].mxu0 %v1169
        %v1353 = vpop.f32.mrb[0].mxu0
        %v1354 = vadd.f32 0.0, %v1353
        %v1355 = vpop.f32.mrb[0].mxu0
        %v1356 = vpop.f32.mrb[0].mxu0
        %v1357 = vadd.f32 0.0, %v1356
        %v1358 = vpop.f32.mrb[0].mxu0
        %1359 = vmatprep.mubr.bf16.mxu0 %v1172
        %1360 = vmatmul.mubr.bf16.gmra.mrb[0].mxu0 %v1171
        %v1361 = vpop.f32.mrb[0].mxu0
        %v1362 = vadd.f32 0.0, %v1361
        %v1363 = vpop.f32.mrb[0].mxu0
        %v1364 = vpop.f32.mrb[0].mxu0
        %v1365 = vadd.f32 0.0, %v1364
        %v1366 = vpop.f32.mrb[0].mxu0
        %1367 = vmatprep.mubr.bf16.mxu0 %v1174
        %1368 = vmatmul.mubr.bf16.gmra.mrb[0].mxu0 %v1173
        %v1369 = vpop.f32.mrb[0].mxu0
        %v1370 = vadd.f32 0.0, %v1369
        %v1371 = vpop.f32.mrb[0].mxu0
        %v1372 = vpop.f32.mrb[0].mxu0
        %v1373 = vadd.f32 0.0, %v1372
        %v1374 = vpop.f32.mrb[0].mxu0
        %1375 = vmatprep.mubr.bf16.mxu0 %v1176
        %1376 = vmatmul.mubr.bf16.gmra.mrb[0].mxu0 %v1175
        %v1377 = vpop.f32.mrb[0].mxu0
        %v1378 = vadd.f32 0.0, %v1377
        %v1379 = vpop.f32.mrb[0].mxu0
        %v1380 = vpop.f32.mrb[0].mxu0
        %v1381 = vadd.f32 0.0, %v1380
        %v1382 = vpop.f32.mrb[0].mxu0
        %1383 = vmatprep.mubr.bf16.mxu0 %v1178
        %1384 = vmatmul.mubr.bf16.gmra.mrb[0].mxu0 %v1177
        %v1385 = vpop.f32.mrb[0].mxu0
        %v1386 = vadd.f32 0.0, %v1385
        %v1387 = vpop.f32.mrb[0].mxu0
        %v1388 = vpop.f32.mrb[0].mxu0
        %v1389 = vadd.f32 0.0, %v1388
        %v1390 = vpop.f32.mrb[0].mxu0
        %1391 = vmatprep.mubr.bf16.mxu0 %v1180
        %1392 = vmatmul.mubr.bf16.gmra.mrb[0].mxu0 %v1179
        %v1393 = vpop.f32.mrb[0].mxu0
        %v1394 = vadd.f32 0.0, %v1393
        %v1395 = vpop.f32.mrb[0].mxu0
        %v1396 = vpop.f32.mrb[0].mxu0
        %v1397 = vadd.f32 0.0, %v1396
        %v1398 = vpop.f32.mrb[0].mxu0
        %1399 = vmatprep.mubr.bf16.mxu0 %v1182
        %1400 = vmatmul.mubr.bf16.gmra.mrb[0].mxu0 %v1181
        %v1401 = vpop.f32.mrb[0].mxu0
        %v1402 = vadd.f32 0.0, %v1401
        %v1403 = vpop.f32.mrb[0].mxu0
        %v1404 = vpop.f32.mrb[0].mxu0
        %v1405 = vadd.f32 0.0, %v1404
        %v1406 = vpop.f32.mrb[0].mxu0
        %1407 = vmatprep.mubr.bf16.mxu0 %v1184
        %1408 = vmatmul.mubr.bf16.gmra.mrb[0].mxu0 %v1183
        %v1409 = vpop.f32.mrb[0].mxu0
        %v1410 = vadd.f32 0.0, %v1409
        %v1411 = vpop.f32.mrb[0].mxu0
        %v1412 = vpop.f32.mrb[0].mxu0
        %v1413 = vadd.f32 0.0, %v1412
        %v1414 = vpop.f32.mrb[0].mxu0
        %1415 = vmatprep.mubr.bf16.mxu0 %v1186
        %1416 = vmatmul.mubr.bf16.gmra.mrb[0].mxu0 %v1185
        %v1417 = vpop.f32.mrb[0].mxu0
        %v1418 = vadd.f32 0.0, %v1417
        %v1419 = vpop.f32.mrb[0].mxu0
        %v1420 = vpop.f32.mrb[0].mxu0
        %v1421 = vadd.f32 0.0, %v1420
        %v1422 = vpop.f32.mrb[0].mxu0
        %1423 = vmatprep.mubr.bf16.mxu0 %v1188
        %1424 = vmatmul.mubr.bf16.gmra.mrb[0].mxu0 %v1187
        %v1425 = vpop.f32.mrb[0].mxu0
        %v1426 = vadd.f32 0.0, %v1425
        %v1427 = vpop.f32.mrb[0].mxu0
        %v1428 = vpop.f32.mrb[0].mxu0
        %v1429 = vadd.f32 0.0, %v1428
        %v1430 = vpop.f32.mrb[0].mxu0
        %1431 = vmatprep.mubr.bf16.mxu0 %v1190
        %1432 = vmatmul.mubr.bf16.gmra.mrb[0].mxu0 %v1189
        %v1433 = vpop.f32.mrb[0].mxu0
        %v1434 = vadd.f32 0.0, %v1433
        %v1435 = vpop.f32.mrb[0].mxu0
        %v1436 = vpop.f32.mrb[0].mxu0
        %v1437 = vadd.f32 0.0, %v1436
        %v1438 = vpop.f32.mrb[0].mxu0
        %1439 = vmatprep.mubr.bf16.mxu0 %v1192
        %1440 = vmatmul.mubr.bf16.gmra.mrb[0].mxu0 %v1191
        %v1441 = vpop.f32.mrb[0].mxu0
        %v1442 = vadd.f32 0.0, %v1441
        %v1443 = vpop.f32.mrb[0].mxu0
        %v1444 = vpop.f32.mrb[0].mxu0
        %v1445 = vadd.f32 0.0, %v1444
        %v1446 = vpop.f32.mrb[0].mxu0
        %1447 = vmatprep.mubr.bf16.mxu0 %v1194
        %1448 = vmatmul.mubr.bf16.gmra.mrb[0].mxu0 %v1193
        %v1449 = vpop.f32.mrb[0].mxu0
        %v1450 = vadd.f32 0.0, %v1449
        %v1451 = vpop.f32.mrb[0].mxu0
        %v1452 = vpop.f32.mrb[0].mxu0
        %v1453 = vadd.f32 0.0, %v1452
        %v1454 = vpop.f32.mrb[0].mxu0
        %1455 = vmatprep.mubr.bf16.mxu0 %v1196
        %1456 = vmatmul.mubr.bf16.gmra.mrb[0].mxu0 %v1195
        %v1457 = vpop.f32.mrb[0].mxu0
        %v1458 = vadd.f32 0.0, %v1457
        %v1459 = vpop.f32.mrb[0].mxu0
        %v1460 = vpop.f32.mrb[0].mxu0
        %v1461 = vadd.f32 0.0, %v1460
        %v1462 = vpop.f32.mrb[0].mxu0
        %1463 = vmatprep.mubr.bf16.mxu0 %v1198
        %1464 = vmatmul.mubr.bf16.gmra.mrb[0].mxu0 %v1197
        %v1465 = vpop.f32.mrb[0].mxu0
        %v1466 = vadd.f32 0.0, %v1465
        %v1467 = vpop.f32.mrb[0].mxu0
        %v1468 = vpop.f32.mrb[0].mxu0
        %v1469 = vadd.f32 0.0, %v1468
        %v1470 = vpop.f32.mrb[0].mxu0
        %1471 = vmatprep.mubr.bf16.mxu0 %v1200
        %1472 = vmatmul.mubr.bf16.gmra.mrb[0].mxu0 %v1199
        %v1473 = vpop.f32.mrb[0].mxu0
        %v1474 = vadd.f32 0.0, %v1473
        %v1475 = vpop.f32.mrb[0].mxu0
        %v1476 = vpop.f32.mrb[0].mxu0
        %v1477 = vadd.f32 0.0, %v1476
        %v1478 = vpop.f32.mrb[0].mxu0
        %1479 = vmatprep.mubr.bf16.mxu0 %v1202
        %1480 = vmatmul.mubr.bf16.gmra.mrb[0].mxu0 %v1201
        %v1481 = vpop.f32.mrb[0].mxu0
        %v1482 = vadd.f32 0.0, %v1481
        %v1483 = vpop.f32.mrb[0].mxu0
        %v1484 = vpop.f32.mrb[0].mxu0
        %v1485 = vadd.f32 0.0, %v1484
        %v1486 = vpop.f32.mrb[0].mxu0
        %1487 = vmatprep.mubr.bf16.mxu0 %v1204
        %1488 = vmatmul.mubr.bf16.gmra.mrb[0].mxu0 %v1203
        %v1489 = vpop.f32.mrb[0].mxu0
        %v1490 = vadd.f32 0.0, %v1489
        %v1491 = vpop.f32.mrb[0].mxu0
        %v1492 = vpop.f32.mrb[0].mxu0
        %v1493 = vadd.f32 0.0, %v1492
        %v1494 = vpop.f32.mrb[0].mxu0
        %1495 = vmatprep.mubr.bf16.mxu0 %v1206
        %1496 = vmatmul.mubr.bf16.gmra.mrb[0].mxu0 %v1205
        %v1497 = vpop.f32.mrb[0].mxu0
        %v1498 = vadd.f32 0.0, %v1497
        %v1499 = vpop.f32.mrb[0].mxu0
        %v1500 = vpop.f32.mrb[0].mxu0
        %v1501 = vadd.f32 0.0, %v1500
        %v1502 = vpop.f32.mrb[0].mxu0
        %1503 = vmatprep.mubr.bf16.mxu0 %v1208
        %1504 = vmatmul.mubr.bf16.gmra.mrb[0].mxu0 %v1207
        %v1505 = vpop.f32.mrb[0].mxu0
        %v1506 = vadd.f32 0.0, %v1505
        %v1507 = vpop.f32.mrb[0].mxu0
        %v1508 = vpop.f32.mrb[0].mxu0
        %v1509 = vadd.f32 0.0, %v1508
        %v1510 = vpop.f32.mrb[0].mxu0
        %1511 = vmatprep.mubr.bf16.mxu0 %v1210
        %1512 = vmatmul.mubr.bf16.gmra.mrb[0].mxu0 %v1209
        %v1513 = vpop.f32.mrb[0].mxu0
        %v1514 = vadd.f32 0.0, %v1513
        %v1515 = vpop.f32.mrb[0].mxu0
        %v1516 = vpop.f32.mrb[0].mxu0
        %v1517 = vadd.f32 0.0, %v1516
        %v1518 = vpop.f32.mrb[0].mxu0
        %1519 = vmatprep.mubr.bf16.mxu0 %v1212
        %1520 = vmatmul.mubr.bf16.gmra.mrb[0].mxu0 %v1211
        %v1521 = vpop.f32.mrb[0].mxu0
        %v1522 = vadd.f32 0.0, %v1521
        %v1523 = vpop.f32.mrb[0].mxu0
        %v1524 = vpop.f32.mrb[0].mxu0
        %v1525 = vadd.f32 0.0, %v1524
        %v1526 = vpop.f32.mrb[0].mxu0
        %1527 = vmatprep.mubr.bf16.mxu0 %v1214
        %1528 = vmatmul.mubr.bf16.gmra.mrb[0].mxu0 %v1213
        %v1529 = vpop.f32.mrb[0].mxu0
        %v1530 = vadd.f32 0.0, %v1529
        %v1531 = vpop.f32.mrb[0].mxu0
        %v1532 = vpop.f32.mrb[0].mxu0
        %v1533 = vadd.f32 0.0, %v1532
        %v1534 = vpop.f32.mrb[0].mxu0
        %1535 = vmatprep.mubr.bf16.mxu0 %v1216
        %1536 = vmatmul.mubr.bf16.gmra.mrb[0].mxu0 %v1215
        %v1537 = vpop.f32.mrb[0].mxu0
        %v1538 = vadd.f32 0.0, %v1537
        %v1539 = vpop.f32.mrb[0].mxu0
        %v1540 = vpop.f32.mrb[0].mxu0
        %v1541 = vadd.f32 0.0, %v1540
        %v1542 = vpop.f32.mrb[0].mxu0
        %1543 = vmatprep.mubr.bf16.mxu0 %v1218
        %1544 = vmatmul.mubr.bf16.gmra.mrb[0].mxu0 %v1217
        %v1545 = vpop.f32.mrb[0].mxu0
        %v1546 = vadd.f32 0.0, %v1545
        %v1547 = vpop.f32.mrb[0].mxu0
        %v1548 = vpop.f32.mrb[0].mxu0
        %v1549 = vadd.f32 0.0, %v1548
        %v1550 = vpop.f32.mrb[0].mxu0
        %1551 = vmatprep.mubr.bf16.mxu0 %v1220
        %1552 = vmatmul.mubr.bf16.gmra.mrb[0].mxu0 %v1219
        %v1553 = vpop.f32.mrb[0].mxu0
        %v1554 = vadd.f32 0.0, %v1553
        %v1555 = vpop.f32.mrb[0].mxu0
        %v1556 = vpop.f32.mrb[0].mxu0
        %v1557 = vadd.f32 0.0, %v1556
        %v1558 = vpop.f32.mrb[0].mxu0
        %1559 = vmatprep.mubr.bf16.mxu0 %v1222
        %1560 = vmatmul.mubr.bf16.gmra.mrb[0].mxu0 %v1221
        %v1561 = vpop.f32.mrb[0].mxu0
        %v1562 = vadd.f32 0.0, %v1561
        %v1563 = vpop.f32.mrb[0].mxu0
        %v1564 = vpop.f32.mrb[0].mxu0
        %v1565 = vadd.f32 0.0, %v1564
        %v1566 = vpop.f32.mrb[0].mxu0
        %1567 = vmatprep.mubr.bf16.mxu0 %v1224
        %1568 = vmatmul.mubr.bf16.gmra.mrb[0].mxu0 %v1223
        %v1569 = vpop.f32.mrb[0].mxu0
        %v1570 = vadd.f32 0.0, %v1569
        %v1571 = vpop.f32.mrb[0].mxu0
        %v1572 = vpop.f32.mrb[0].mxu0
        %v1573 = vadd.f32 0.0, %v1572
        %v1574 = vpop.f32.mrb[0].mxu0
        %1575 = vmatprep.mubr.bf16.mxu0 %v1226
        %1576 = vmatmul.mubr.bf16.gmra.mrb[0].mxu0 %v1225
        %v1577 = vpop.f32.mrb[0].mxu0
        %v1578 = vadd.f32 0.0, %v1577
        %v1579 = vpop.f32.mrb[0].mxu0
        %v1580 = vpop.f32.mrb[0].mxu0
        %v1581 = vadd.f32 0.0, %v1580
        %v1582 = vpop.f32.mrb[0].mxu0
        %1583 = vmatprep.mubr.bf16.mxu0 %v1228
        %1584 = vmatmul.mubr.bf16.gmra.mrb[0].mxu0 %v1227
        %v1585 = vpop.f32.mrb[0].mxu0
        %v1586 = vadd.f32 0.0, %v1585
        %v1587 = vpop.f32.mrb[0].mxu0
        %v1588 = vpop.f32.mrb[0].mxu0
        %v1589 = vadd.f32 0.0, %v1588
        %v1590 = vpop.f32.mrb[0].mxu0
        %1591 = vmatprep.mubr.bf16.mxu0 %v1230
        %1592 = vmatmul.mubr.bf16.gmra.mrb[0].mxu0 %v1229
        %v1593 = vpop.f32.mrb[0].mxu0
        %v1594 = vadd.f32 0.0, %v1593
        %v1595 = vpop.f32.mrb[0].mxu0
        %v1596 = vpop.f32.mrb[0].mxu0
        %v1597 = vadd.f32 0.0, %v1596
        %v1598 = vpop.f32.mrb[0].mxu0
        %1599 = vmatprep.mubr.bf16.mxu0 %v1232
        %1600 = vmatmul.mubr.bf16.gmra.mrb[0].mxu0 %v1231
        %v1601 = vpop.f32.mrb[0].mxu0
        %v1602 = vadd.f32 0.0, %v1601
        %v1603 = vpop.f32.mrb[0].mxu0
        %v1604 = vpop.f32.mrb[0].mxu0
        %v1605 = vadd.f32 0.0, %v1604
        %v1606 = vpop.f32.mrb[0].mxu0
        %1607 = vmatprep.mubr.bf16.mxu0 %v1234
        %1608 = vmatmul.mubr.bf16.gmra.mrb[0].mxu0 %v1233
        %v1609 = vpop.f32.mrb[0].mxu0
        %v1610 = vadd.f32 0.0, %v1609
        %v1611 = vpop.f32.mrb[0].mxu0
        %v1612 = vpop.f32.mrb[0].mxu0
        %v1613 = vadd.f32 0.0, %v1612
        %v1614 = vpop.f32.mrb[0].mxu0
        %1615 = vmatprep.mubr.bf16.mxu0 %v1236
        %1616 = vmatmul.mubr.bf16.gmra.mrb[0].mxu0 %v1235
        %v1617 = vpop.f32.mrb[0].mxu0
        %v1618 = vadd.f32 0.0, %v1617
        %v1619 = vpop.f32.mrb[0].mxu0
        %v1620 = vpop.f32.mrb[0].mxu0
        %v1621 = vadd.f32 0.0, %v1620
        %v1622 = vpop.f32.mrb[0].mxu0
        %1623 = vmatprep.mubr.bf16.mxu0 %v1238
        %1624 = vmatmul.mubr.bf16.gmra.mrb[0].mxu0 %v1237
        %v1625 = vpop.f32.mrb[0].mxu0
        %v1626 = vadd.f32 0.0, %v1625
        %v1627 = vpop.f32.mrb[0].mxu0
        %v1628 = vpop.f32.mrb[0].mxu0
        %v1629 = vadd.f32 0.0, %v1628
        %v1630 = vpop.f32.mrb[0].mxu0
        %1631 = vdwg.mxu0
        %v1632 = vpack.c.bf16 %v1349, %v1346
        %v1633 = vpack.c.bf16 %v1357, %v1354
        %v1634 = vpack.c.bf16 %v1365, %v1362
        %v1635 = vpack.c.bf16 %v1373, %v1370
        %v1636 = vld [vmem:[%s6] sm:$0xf]
        %v1637 = vld [vmem:[%s6 + $0x4] sm:$0xf]
        %v1638 = vpack.c.bf16 %v1381, %v1378
        %v1639 = vpack.c.bf16 %v1389, %v1386
        %v1640 = vpack.c.bf16 %v1397, %v1394
        %v1641 = vpack.c.bf16 %v1405, %v1402
        %s1642 = scalar_lea.vmem %s6, 8
        %v1643 = vld [vmem:[%s1642] sm:$0xf]
        %v1644 = vld [vmem:[%s1642 + $0x4] sm:$0xf]
        %v1647 = vunpack.c.l.b16 %v1643
        %v1648 = vunpack.c.l.b16 %v1644
        %v1649 = vpack.c.b16 %v1648, %v1647
        %vm1651 = vcmask 130048
        %v1653 = vsel %vm1651, %v1638, 0
        %v1656 = vsel %vm1651, %v1639, 0
        %v1659 = vsel %vm1651, %v1640, 0
        %v1662 = vsel %vm1651, %v1641, 0
        %1664 = vmatprep.subr.bf16.mxu0 0
        %1665 = vmatpush1.bf16.msra.mxu0 %v1649
        %1666 = vmatprep.subr.bf16.mxu0 0
        %1667 = vmatpush1.bf16.msra.mxu0 0
        %1668 = vmatprep.subr.bf16.mxu0 0
        %1669 = vmatpush1.bf16.msra.mxu0 0
        %1670 = vmatprep.subr.bf16.mxu0 0
        %1671 = vmatpush1.bf16.msra.mxu0 0
        %1672 = vmatprep.subr.bf16.mxu0 0
        %1673 = vmatpush1.bf16.msra.mxu0 0
        %1674 = vmatprep.subr.bf16.mxu0 0
        %1675 = vmatpush1.bf16.msra.mxu0 0
        %1676 = vmatprep.subr.bf16.mxu0 0
        %1677 = vmatpush1.bf16.msra.mxu0 0
        %1678 = vmatprep.subr.bf16.mxu0 0
        %1679 = vmatpush1.bf16.msra.mxu0 0
        %1680 = vmatprep.subr.bf16.mxu0 0
        %1681 = vmatpush1.bf16.msra.mxu0 0
        %1682 = vmatprep.subr.bf16.mxu0 0
        %1683 = vmatpush1.bf16.msra.mxu0 0
        %1684 = vmatprep.subr.bf16.mxu0 0
        %1685 = vmatpush1.bf16.msra.mxu0 0
        %1686 = vmatprep.subr.bf16.mxu0 0
        %1687 = vmatpush1.bf16.msra.mxu0 0
        %1688 = vmatprep.subr.bf16.mxu0 0
        %1689 = vmatpush1.bf16.msra.mxu0 0
        %1690 = vmatprep.subr.bf16.mxu0 0
        %1691 = vmatpush1.bf16.msra.mxu0 0
        %1692 = vmatprep.subr.bf16.mxu0 0
        %1693 = vmatpush1.bf16.msra.mxu0 0
        %1694 = vmatprep.subr.bf16.mxu0 0
        %1695 = vmatpush1.bf16.msra.mxu0 0
        %1696 = vmatprep.mubr.bf16.mxu0 0
        %1697 = vmatmul.mubr.bf16.gmra.mrb[0].mxu0 %v1653
        %v1698 = vpop.f32.mrb[0].mxu0
        %v1699 = vadd.f32 0.0, %v1698
        %v1700 = vpop.f32.mrb[0].mxu0
        %v1701 = vpop.f32.mrb[0].mxu0
        %v1702 = vadd.f32 0.0, %v1701
        %v1703 = vpop.f32.mrb[0].mxu0
        %1704 = vmatprep.mubr.bf16.mxu0 0
        %1705 = vmatmul.mubr.bf16.gmra.mrb[0].mxu0 %v1656
        %v1706 = vpop.f32.mrb[0].mxu0
        %v1707 = vadd.f32 0.0, %v1706
        %v1708 = vpop.f32.mrb[0].mxu0
        %v1709 = vpop.f32.mrb[0].mxu0
        %v1710 = vadd.f32 0.0, %v1709
        %v1711 = vpop.f32.mrb[0].mxu0
        %1712 = vmatprep.mubr.bf16.mxu0 0
        %1713 = vmatmul.mubr.bf16.gmra.mrb[0].mxu0 %v1659
        %v1714 = vpop.f32.mrb[0].mxu0
        %v1715 = vadd.f32 0.0, %v1714
        %v1716 = vpop.f32.mrb[0].mxu0
        %v1717 = vpop.f32.mrb[0].mxu0
        %v1718 = vadd.f32 0.0, %v1717
        %v1719 = vpop.f32.mrb[0].mxu0
        %1720 = vmatprep.mubr.bf16.mxu0 0
        %1721 = vmatmul.mubr.bf16.gmra.mrb[0].mxu0 %v1662
        %v1722 = vpop.f32.mrb[0].mxu0
        %v1723 = vadd.f32 0.0, %v1722
        %v1724 = vpop.f32.mrb[0].mxu0
        %v1725 = vpop.f32.mrb[0].mxu0
        %v1726 = vadd.f32 0.0, %v1725
        %v1727 = vpop.f32.mrb[0].mxu0
        %1728 = vdwg.mxu0
        %v1731 = vunpack.c.l.b16 %v1636
        %v1732 = vunpack.c.l.b16 %v1637
        %v1733 = vpack.c.b16 %v1732, %v1731
        %v1736 = vsel %vm1651, %v1632, 0
        %v1739 = vsel %vm1651, %v1633, 0
        %v1742 = vsel %vm1651, %v1634, 0
        %v1745 = vsel %vm1651, %v1635, 0
        %1747 = vmatprep.subr.bf16.mxu0 0
        %1748 = vmatpush1.bf16.msra.mxu0 %v1733
        %1749 = vmatprep.subr.bf16.mxu0 0
        %1750 = vmatpush1.bf16.msra.mxu0 0
        %1751 = vmatprep.subr.bf16.mxu0 0
        %1752 = vmatpush1.bf16.msra.mxu0 0
        %1753 = vmatprep.subr.bf16.mxu0 0
        %1754 = vmatpush1.bf16.msra.mxu0 0
        %1755 = vmatprep.subr.bf16.mxu0 0
        %1756 = vmatpush1.bf16.msra.mxu0 0
        %1757 = vmatprep.subr.bf16.mxu0 0
        %1758 = vmatpush1.bf16.msra.mxu0 0
        %1759 = vmatprep.subr.bf16.mxu0 0
        %1760 = vmatpush1.bf16.msra.mxu0 0
        %1761 = vmatprep.subr.bf16.mxu0 0
        %1762 = vmatpush1.bf16.msra.mxu0 0
        %1763 = vmatprep.subr.bf16.mxu0 0
        %1764 = vmatpush1.bf16.msra.mxu0 0
        %1765 = vmatprep.subr.bf16.mxu0 0
        %1766 = vmatpush1.bf16.msra.mxu0 0
        %1767 = vmatprep.subr.bf16.mxu0 0
        %1768 = vmatpush1.bf16.msra.mxu0 0
        %1769 = vmatprep.subr.bf16.mxu0 0
        %1770 = vmatpush1.bf16.msra.mxu0 0
        %1771 = vmatprep.subr.bf16.mxu0 0
        %1772 = vmatpush1.bf16.msra.mxu0 0
        %1773 = vmatprep.subr.bf16.mxu0 0
        %1774 = vmatpush1.bf16.msra.mxu0 0
        %1775 = vmatprep.subr.bf16.mxu0 0
        %1776 = vmatpush1.bf16.msra.mxu0 0
        %1777 = vmatprep.subr.bf16.mxu0 0
        %1778 = vmatpush1.bf16.msra.mxu0 0
        %1779 = vmatprep.mubr.bf16.mxu0 0
        %1780 = vmatmul.mubr.bf16.gmra.mrb[0].mxu0 %v1736
        %v1781 = vpop.f32.mrb[0].mxu0
        %v1782 = vadd.f32 %v1699, %v1781
        %v1783 = vpop.f32.mrb[0].mxu0
        %v1784 = vpop.f32.mrb[0].mxu0
        %v1785 = vadd.f32 %v1702, %v1784
        %v1786 = vpop.f32.mrb[0].mxu0
        %1787 = vmatprep.mubr.bf16.mxu0 0
        %1788 = vmatmul.mubr.bf16.gmra.mrb[0].mxu0 %v1739
        %v1789 = vpop.f32.mrb[0].mxu0
        %v1790 = vadd.f32 %v1707, %v1789
        %v1791 = vpop.f32.mrb[0].mxu0
        %v1792 = vpop.f32.mrb[0].mxu0
        %v1793 = vadd.f32 %v1710, %v1792
        %v1794 = vpop.f32.mrb[0].mxu0
        %1795 = vmatprep.mubr.bf16.mxu0 0
        %1796 = vmatmul.mubr.bf16.gmra.mrb[0].mxu0 %v1742
        %v1797 = vpop.f32.mrb[0].mxu0
        %v1798 = vadd.f32 %v1715, %v1797
        %v1799 = vpop.f32.mrb[0].mxu0
        %v1800 = vpop.f32.mrb[0].mxu0
        %v1801 = vadd.f32 %v1718, %v1800
        %v1802 = vpop.f32.mrb[0].mxu0
        %1803 = vmatprep.mubr.bf16.mxu0 0
        %1804 = vmatmul.mubr.bf16.gmra.mrb[0].mxu0 %v1745
        %v1805 = vpop.f32.mrb[0].mxu0
        %v1806 = vadd.f32 %v1723, %v1805
        %v1807 = vpop.f32.mrb[0].mxu0
        %v1808 = vpop.f32.mrb[0].mxu0
        %v1809 = vadd.f32 %v1726, %v1808
        %v1810 = vpop.f32.mrb[0].mxu0
        %1811 = vdwg.mxu0
        %v1812 = vpack.c.bf16 %v1413, %v1410
        %v1813 = vpack.c.bf16 %v1421, %v1418
        %v1814 = vpack.c.bf16 %v1429, %v1426
        %v1815 = vpack.c.bf16 %v1437, %v1434
        %s1816 = scalar_lea.vmem %s6, 16
        %v1817 = vld [vmem:[%s1816] sm:$0xf]
        %v1818 = vld [vmem:[%s1816 + $0x4] sm:$0xf]
        %v1821 = vunpack.c.l.b16 %v1817
        %v1822 = vunpack.c.l.b16 %v1818
        %v1823 = vpack.c.b16 %v1822, %v1821
        %v1826 = vsel %vm1651, %v1812, 0
        %v1829 = vsel %vm1651, %v1813, 0
        %v1832 = vsel %vm1651, %v1814, 0
        %v1835 = vsel %vm1651, %v1815, 0
        %1837 = vmatprep.subr.bf16.mxu0 0
        %1838 = vmatpush1.bf16.msra.mxu0 %v1823
        %1839 = vmatprep.subr.bf16.mxu0 0
        %1840 = vmatpush1.bf16.msra.mxu0 0
        %1841 = vmatprep.subr.bf16.mxu0 0
        %1842 = vmatpush1.bf16.msra.mxu0 0
        %1843 = vmatprep.subr.bf16.mxu0 0
        %1844 = vmatpush1.bf16.msra.mxu0 0
        %1845 = vmatprep.subr.bf16.mxu0 0
        %1846 = vmatpush1.bf16.msra.mxu0 0
        %1847 = vmatprep.subr.bf16.mxu0 0
        %1848 = vmatpush1.bf16.msra.mxu0 0
        %1849 = vmatprep.subr.bf16.mxu0 0
        %1850 = vmatpush1.bf16.msra.mxu0 0
        %1851 = vmatprep.subr.bf16.mxu0 0
        %1852 = vmatpush1.bf16.msra.mxu0 0
        %1853 = vmatprep.subr.bf16.mxu0 0
        %1854 = vmatpush1.bf16.msra.mxu0 0
        %1855 = vmatprep.subr.bf16.mxu0 0
        %1856 = vmatpush1.bf16.msra.mxu0 0
        %1857 = vmatprep.subr.bf16.mxu0 0
        %1858 = vmatpush1.bf16.msra.mxu0 0
        %1859 = vmatprep.subr.bf16.mxu0 0
        %1860 = vmatpush1.bf16.msra.mxu0 0
        %1861 = vmatprep.subr.bf16.mxu0 0
        %1862 = vmatpush1.bf16.msra.mxu0 0
        %1863 = vmatprep.subr.bf16.mxu0 0
        %1864 = vmatpush1.bf16.msra.mxu0 0
        %1865 = vmatprep.subr.bf16.mxu0 0
        %1866 = vmatpush1.bf16.msra.mxu0 0
        %1867 = vmatprep.subr.bf16.mxu0 0
        %1868 = vmatpush1.bf16.msra.mxu0 0
        %1869 = vmatprep.mubr.bf16.mxu0 0
        %1870 = vmatmul.mubr.bf16.gmra.mrb[0].mxu0 %v1826
        %v1871 = vpop.f32.mrb[0].mxu0
        %v1872 = vadd.f32 0.0, %v1871
        %v1873 = vpop.f32.mrb[0].mxu0
        %v1874 = vpop.f32.mrb[0].mxu0
        %v1875 = vadd.f32 0.0, %v1874
        %v1876 = vpop.f32.mrb[0].mxu0
        %1877 = vmatprep.mubr.bf16.mxu0 0
        %1878 = vmatmul.mubr.bf16.gmra.mrb[0].mxu0 %v1829
        %v1879 = vpop.f32.mrb[0].mxu0
        %v1880 = vadd.f32 0.0, %v1879
        %v1881 = vpop.f32.mrb[0].mxu0
        %v1882 = vpop.f32.mrb[0].mxu0
        %v1883 = vadd.f32 0.0, %v1882
        %v1884 = vpop.f32.mrb[0].mxu0
        %1885 = vmatprep.mubr.bf16.mxu0 0
        %1886 = vmatmul.mubr.bf16.gmra.mrb[0].mxu0 %v1832
        %v1887 = vpop.f32.mrb[0].mxu0
        %v1888 = vadd.f32 0.0, %v1887
        %v1889 = vpop.f32.mrb[0].mxu0
        %v1890 = vpop.f32.mrb[0].mxu0
        %v1891 = vadd.f32 0.0, %v1890
        %v1892 = vpop.f32.mrb[0].mxu0
        %1893 = vmatprep.mubr.bf16.mxu0 0
        %1894 = vmatmul.mubr.bf16.gmra.mrb[0].mxu0 %v1835
        %v1895 = vpop.f32.mrb[0].mxu0
        %v1896 = vadd.f32 0.0, %v1895
        %v1897 = vpop.f32.mrb[0].mxu0
        %v1898 = vpop.f32.mrb[0].mxu0
        %v1899 = vadd.f32 0.0, %v1898
        %v1900 = vpop.f32.mrb[0].mxu0
        %1901 = vdwg.mxu0
        %v1902 = vadd.f32 %v1782, %v1872
        %v1903 = vadd.f32 %v1785, %v1875
        %v1904 = vadd.f32 %v1790, %v1880
        %v1905 = vadd.f32 %v1793, %v1883
        %v1906 = vadd.f32 %v1798, %v1888
        %v1907 = vadd.f32 %v1801, %v1891
        %v1908 = vadd.f32 %v1806, %v1896
        %v1909 = vadd.f32 %v1809, %v1899
        %v1910 = vpack.c.bf16 %v1445, %v1442
        %v1911 = vpack.c.bf16 %v1453, %v1450
        %v1912 = vpack.c.bf16 %v1461, %v1458
        %v1913 = vpack.c.bf16 %v1469, %v1466
        %s1914 = scalar_lea.vmem %s6, 24
        %v1915 = vld [vmem:[%s1914] sm:$0xf]
        %v1916 = vld [vmem:[%s1914 + $0x4] sm:$0xf]
        %v1919 = vunpack.c.l.b16 %v1915
        %v1920 = vunpack.c.l.b16 %v1916
        %v1921 = vpack.c.b16 %v1920, %v1919
        %v1924 = vsel %vm1651, %v1910, 0
        %v1927 = vsel %vm1651, %v1911, 0
        %v1930 = vsel %vm1651, %v1912, 0
        %v1933 = vsel %vm1651, %v1913, 0
        %1935 = vmatprep.subr.bf16.mxu0 0
        %1936 = vmatpush1.bf16.msra.mxu0 %v1921
        %1937 = vmatprep.subr.bf16.mxu0 0
        %1938 = vmatpush1.bf16.msra.mxu0 0
        %1939 = vmatprep.subr.bf16.mxu0 0
        %1940 = vmatpush1.bf16.msra.mxu0 0
        %1941 = vmatprep.subr.bf16.mxu0 0
        %1942 = vmatpush1.bf16.msra.mxu0 0
        %1943 = vmatprep.subr.bf16.mxu0 0
        %1944 = vmatpush1.bf16.msra.mxu0 0
        %1945 = vmatprep.subr.bf16.mxu0 0
        %1946 = vmatpush1.bf16.msra.mxu0 0
        %1947 = vmatprep.subr.bf16.mxu0 0
        %1948 = vmatpush1.bf16.msra.mxu0 0
        %1949 = vmatprep.subr.bf16.mxu0 0
        %1950 = vmatpush1.bf16.msra.mxu0 0
        %1951 = vmatprep.subr.bf16.mxu0 0
        %1952 = vmatpush1.bf16.msra.mxu0 0
        %1953 = vmatprep.subr.bf16.mxu0 0
        %1954 = vmatpush1.bf16.msra.mxu0 0
        %1955 = vmatprep.subr.bf16.mxu0 0
        %1956 = vmatpush1.bf16.msra.mxu0 0
        %1957 = vmatprep.subr.bf16.mxu0 0
        %1958 = vmatpush1.bf16.msra.mxu0 0
        %1959 = vmatprep.subr.bf16.mxu0 0
        %1960 = vmatpush1.bf16.msra.mxu0 0
        %1961 = vmatprep.subr.bf16.mxu0 0
        %1962 = vmatpush1.bf16.msra.mxu0 0
        %1963 = vmatprep.subr.bf16.mxu0 0
        %1964 = vmatpush1.bf16.msra.mxu0 0
        %1965 = vmatprep.subr.bf16.mxu0 0
        %1966 = vmatpush1.bf16.msra.mxu0 0
        %1967 = vmatprep.mubr.bf16.mxu0 0
        %1968 = vmatmul.mubr.bf16.gmra.mrb[0].mxu0 %v1924
        %v1969 = vpop.f32.mrb[0].mxu0
        %v1970 = vadd.f32 0.0, %v1969
        %v1971 = vpop.f32.mrb[0].mxu0
        %v1972 = vpop.f32.mrb[0].mxu0
        %v1973 = vadd.f32 0.0, %v1972
        %v1974 = vpop.f32.mrb[0].mxu0
        %1975 = vmatprep.mubr.bf16.mxu0 0
        %1976 = vmatmul.mubr.bf16.gmra.mrb[0].mxu0 %v1927
        %v1977 = vpop.f32.mrb[0].mxu0
        %v1978 = vadd.f32 0.0, %v1977
        %v1979 = vpop.f32.mrb[0].mxu0
        %v1980 = vpop.f32.mrb[0].mxu0
        %v1981 = vadd.f32 0.0, %v1980
        %v1982 = vpop.f32.mrb[0].mxu0
        %1983 = vmatprep.mubr.bf16.mxu0 0
        %1984 = vmatmul.mubr.bf16.gmra.mrb[0].mxu0 %v1930
        %v1985 = vpop.f32.mrb[0].mxu0
        %v1986 = vadd.f32 0.0, %v1985
        %v1987 = vpop.f32.mrb[0].mxu0
        %v1988 = vpop.f32.mrb[0].mxu0
        %v1989 = vadd.f32 0.0, %v1988
        %v1990 = vpop.f32.mrb[0].mxu0
        %1991 = vmatprep.mubr.bf16.mxu0 0
        %1992 = vmatmul.mubr.bf16.gmra.mrb[0].mxu0 %v1933
        %v1993 = vpop.f32.mrb[0].mxu0
        %v1994 = vadd.f32 0.0, %v1993
        %v1995 = vpop.f32.mrb[0].mxu0
        %v1996 = vpop.f32.mrb[0].mxu0
        %v1997 = vadd.f32 0.0, %v1996
        %v1998 = vpop.f32.mrb[0].mxu0
        %1999 = vdwg.mxu0
        %v2000 = vadd.f32 %v1902, %v1970
        %v2001 = vadd.f32 %v1903, %v1973
        %v2002 = vadd.f32 %v1904, %v1978
        %v2003 = vadd.f32 %v1905, %v1981
        %v2004 = vadd.f32 %v1906, %v1986
        %v2005 = vadd.f32 %v1907, %v1989
        %v2006 = vadd.f32 %v1908, %v1994
        %v2007 = vadd.f32 %v1909, %v1997
        %v2008 = vpack.c.bf16 %v1477, %v1474
        %v2009 = vpack.c.bf16 %v1485, %v1482
        %v2010 = vpack.c.bf16 %v1493, %v1490
        %v2011 = vpack.c.bf16 %v1501, %v1498
        %s2012 = scalar_lea.vmem %s6, 32
        %v2013 = vld [vmem:[%s2012] sm:$0xf]
        %v2014 = vld [vmem:[%s2012 + $0x4] sm:$0xf]
        %v2017 = vunpack.c.l.b16 %v2013
        %v2018 = vunpack.c.l.b16 %v2014
        %v2019 = vpack.c.b16 %v2018, %v2017
        %v2022 = vsel %vm1651, %v2008, 0
        %v2025 = vsel %vm1651, %v2009, 0
        %v2028 = vsel %vm1651, %v2010, 0
        %v2031 = vsel %vm1651, %v2011, 0
        %2033 = vmatprep.subr.bf16.mxu0 0
        %2034 = vmatpush1.bf16.msra.mxu0 %v2019
        %2035 = vmatprep.subr.bf16.mxu0 0
        %2036 = vmatpush1.bf16.msra.mxu0 0
        %2037 = vmatprep.subr.bf16.mxu0 0
        %2038 = vmatpush1.bf16.msra.mxu0 0
        %2039 = vmatprep.subr.bf16.mxu0 0
        %2040 = vmatpush1.bf16.msra.mxu0 0
        %2041 = vmatprep.subr.bf16.mxu0 0
        %2042 = vmatpush1.bf16.msra.mxu0 0
        %2043 = vmatprep.subr.bf16.mxu0 0
        %2044 = vmatpush1.bf16.msra.mxu0 0
        %2045 = vmatprep.subr.bf16.mxu0 0
        %2046 = vmatpush1.bf16.msra.mxu0 0
        %2047 = vmatprep.subr.bf16.mxu0 0
        %2048 = vmatpush1.bf16.msra.mxu0 0
        %2049 = vmatprep.subr.bf16.mxu0 0
        %2050 = vmatpush1.bf16.msra.mxu0 0
        %2051 = vmatprep.subr.bf16.mxu0 0
        %2052 = vmatpush1.bf16.msra.mxu0 0
        %2053 = vmatprep.subr.bf16.mxu0 0
        %2054 = vmatpush1.bf16.msra.mxu0 0
        %2055 = vmatprep.subr.bf16.mxu0 0
        %2056 = vmatpush1.bf16.msra.mxu0 0
        %2057 = vmatprep.subr.bf16.mxu0 0
        %2058 = vmatpush1.bf16.msra.mxu0 0
        %2059 = vmatprep.subr.bf16.mxu0 0
        %2060 = vmatpush1.bf16.msra.mxu0 0
        %2061 = vmatprep.subr.bf16.mxu0 0
        %2062 = vmatpush1.bf16.msra.mxu0 0
        %2063 = vmatprep.subr.bf16.mxu0 0
        %2064 = vmatpush1.bf16.msra.mxu0 0
        %2065 = vmatprep.mubr.bf16.mxu0 0
        %2066 = vmatmul.mubr.bf16.gmra.mrb[0].mxu0 %v2022
        %v2067 = vpop.f32.mrb[0].mxu0
        %v2068 = vadd.f32 0.0, %v2067
        %v2069 = vpop.f32.mrb[0].mxu0
        %v2070 = vpop.f32.mrb[0].mxu0
        %v2071 = vadd.f32 0.0, %v2070
        %v2072 = vpop.f32.mrb[0].mxu0
        %2073 = vmatprep.mubr.bf16.mxu0 0
        %2074 = vmatmul.mubr.bf16.gmra.mrb[0].mxu0 %v2025
        %v2075 = vpop.f32.mrb[0].mxu0
        %v2076 = vadd.f32 0.0, %v2075
        %v2077 = vpop.f32.mrb[0].mxu0
        %v2078 = vpop.f32.mrb[0].mxu0
        %v2079 = vadd.f32 0.0, %v2078
        %v2080 = vpop.f32.mrb[0].mxu0
        %2081 = vmatprep.mubr.bf16.mxu0 0
        %2082 = vmatmul.mubr.bf16.gmra.mrb[0].mxu0 %v2028
        %v2083 = vpop.f32.mrb[0].mxu0
        %v2084 = vadd.f32 0.0, %v2083
        %v2085 = vpop.f32.mrb[0].mxu0
        %v2086 = vpop.f32.mrb[0].mxu0
        %v2087 = vadd.f32 0.0, %v2086
        %v2088 = vpop.f32.mrb[0].mxu0
        %2089 = vmatprep.mubr.bf16.mxu0 0
        %2090 = vmatmul.mubr.bf16.gmra.mrb[0].mxu0 %v2031
        %v2091 = vpop.f32.mrb[0].mxu0
        %v2092 = vadd.f32 0.0, %v2091
        %v2093 = vpop.f32.mrb[0].mxu0
        %v2094 = vpop.f32.mrb[0].mxu0
        %v2095 = vadd.f32 0.0, %v2094
        %v2096 = vpop.f32.mrb[0].mxu0
        %2097 = vdwg.mxu0
        %v2098 = vadd.f32 %v2000, %v2068
        %v2099 = vadd.f32 %v2001, %v2071
        %v2100 = vadd.f32 %v2002, %v2076
        %v2101 = vadd.f32 %v2003, %v2079
        %v2102 = vadd.f32 %v2004, %v2084
        %v2103 = vadd.f32 %v2005, %v2087
        %v2104 = vadd.f32 %v2006, %v2092
        %v2105 = vadd.f32 %v2007, %v2095
        %v2106 = vpack.c.bf16 %v1509, %v1506
        %v2107 = vpack.c.bf16 %v1517, %v1514
        %v2108 = vpack.c.bf16 %v1525, %v1522
        %v2109 = vpack.c.bf16 %v1533, %v1530
        %s2110 = scalar_lea.vmem %s6, 40
        %v2111 = vld [vmem:[%s2110] sm:$0xf]
        %v2112 = vld [vmem:[%s2110 + $0x4] sm:$0xf]
        %v2115 = vunpack.c.l.b16 %v2111
        %v2116 = vunpack.c.l.b16 %v2112
        %v2117 = vpack.c.b16 %v2116, %v2115
        %v2120 = vsel %vm1651, %v2106, 0
        %v2123 = vsel %vm1651, %v2107, 0
        %v2126 = vsel %vm1651, %v2108, 0
        %v2129 = vsel %vm1651, %v2109, 0
        %2131 = vmatprep.subr.bf16.mxu0 0
        %2132 = vmatpush1.bf16.msra.mxu0 %v2117
        %2133 = vmatprep.subr.bf16.mxu0 0
        %2134 = vmatpush1.bf16.msra.mxu0 0
        %2135 = vmatprep.subr.bf16.mxu0 0
        %2136 = vmatpush1.bf16.msra.mxu0 0
        %2137 = vmatprep.subr.bf16.mxu0 0
        %2138 = vmatpush1.bf16.msra.mxu0 0
        %2139 = vmatprep.subr.bf16.mxu0 0
        %2140 = vmatpush1.bf16.msra.mxu0 0
        %2141 = vmatprep.subr.bf16.mxu0 0
        %2142 = vmatpush1.bf16.msra.mxu0 0
        %2143 = vmatprep.subr.bf16.mxu0 0
        %2144 = vmatpush1.bf16.msra.mxu0 0
        %2145 = vmatprep.subr.bf16.mxu0 0
        %2146 = vmatpush1.bf16.msra.mxu0 0
        %2147 = vmatprep.subr.bf16.mxu0 0
        %2148 = vmatpush1.bf16.msra.mxu0 0
        %2149 = vmatprep.subr.bf16.mxu0 0
        %2150 = vmatpush1.bf16.msra.mxu0 0
        %2151 = vmatprep.subr.bf16.mxu0 0
        %2152 = vmatpush1.bf16.msra.mxu0 0
        %2153 = vmatprep.subr.bf16.mxu0 0
        %2154 = vmatpush1.bf16.msra.mxu0 0
        %2155 = vmatprep.subr.bf16.mxu0 0
        %2156 = vmatpush1.bf16.msra.mxu0 0
        %2157 = vmatprep.subr.bf16.mxu0 0
        %2158 = vmatpush1.bf16.msra.mxu0 0
        %2159 = vmatprep.subr.bf16.mxu0 0
        %2160 = vmatpush1.bf16.msra.mxu0 0
        %2161 = vmatprep.subr.bf16.mxu0 0
        %2162 = vmatpush1.bf16.msra.mxu0 0
        %2163 = vmatprep.mubr.bf16.mxu0 0
        %2164 = vmatmul.mubr.bf16.gmra.mrb[0].mxu0 %v2120
        %v2165 = vpop.f32.mrb[0].mxu0
        %v2166 = vadd.f32 0.0, %v2165
        %v2167 = vpop.f32.mrb[0].mxu0
        %v2168 = vpop.f32.mrb[0].mxu0
        %v2169 = vadd.f32 0.0, %v2168
        %v2170 = vpop.f32.mrb[0].mxu0
        %2171 = vmatprep.mubr.bf16.mxu0 0
        %2172 = vmatmul.mubr.bf16.gmra.mrb[0].mxu0 %v2123
        %v2173 = vpop.f32.mrb[0].mxu0
        %v2174 = vadd.f32 0.0, %v2173
        %v2175 = vpop.f32.mrb[0].mxu0
        %v2176 = vpop.f32.mrb[0].mxu0
        %v2177 = vadd.f32 0.0, %v2176
        %v2178 = vpop.f32.mrb[0].mxu0
        %2179 = vmatprep.mubr.bf16.mxu0 0
        %2180 = vmatmul.mubr.bf16.gmra.mrb[0].mxu0 %v2126
        %v2181 = vpop.f32.mrb[0].mxu0
        %v2182 = vadd.f32 0.0, %v2181
        %v2183 = vpop.f32.mrb[0].mxu0
        %v2184 = vpop.f32.mrb[0].mxu0
        %v2185 = vadd.f32 0.0, %v2184
        %v2186 = vpop.f32.mrb[0].mxu0
        %2187 = vmatprep.mubr.bf16.mxu0 0
        %2188 = vmatmul.mubr.bf16.gmra.mrb[0].mxu0 %v2129
        %v2189 = vpop.f32.mrb[0].mxu0
        %v2190 = vadd.f32 0.0, %v2189
        %v2191 = vpop.f32.mrb[0].mxu0
        %v2192 = vpop.f32.mrb[0].mxu0
        %v2193 = vadd.f32 0.0, %v2192
        %v2194 = vpop.f32.mrb[0].mxu0
        %2195 = vdwg.mxu0
        %v2196 = vadd.f32 %v2098, %v2166
        %v2197 = vadd.f32 %v2099, %v2169
        %v2198 = vadd.f32 %v2100, %v2174
        %v2199 = vadd.f32 %v2101, %v2177
        %v2200 = vadd.f32 %v2102, %v2182
        %v2201 = vadd.f32 %v2103, %v2185
        %v2202 = vadd.f32 %v2104, %v2190
        %v2203 = vadd.f32 %v2105, %v2193
        %v2204 = vpack.c.bf16 %v1541, %v1538
        %v2205 = vpack.c.bf16 %v1549, %v1546
        %v2206 = vpack.c.bf16 %v1557, %v1554
        %v2207 = vpack.c.bf16 %v1565, %v1562
        %s2208 = scalar_lea.vmem %s6, 48
        %v2209 = vld [vmem:[%s2208] sm:$0xf]
        %v2210 = vld [vmem:[%s2208 + $0x4] sm:$0xf]
        %v2213 = vunpack.c.l.b16 %v2209
        %v2214 = vunpack.c.l.b16 %v2210
        %v2215 = vpack.c.b16 %v2214, %v2213
        %v2218 = vsel %vm1651, %v2204, 0
        %v2221 = vsel %vm1651, %v2205, 0
        %v2224 = vsel %vm1651, %v2206, 0
        %v2227 = vsel %vm1651, %v2207, 0
        %2229 = vmatprep.subr.bf16.mxu0 0
        %2230 = vmatpush1.bf16.msra.mxu0 %v2215
        %2231 = vmatprep.subr.bf16.mxu0 0
        %2232 = vmatpush1.bf16.msra.mxu0 0
        %2233 = vmatprep.subr.bf16.mxu0 0
        %2234 = vmatpush1.bf16.msra.mxu0 0
        %2235 = vmatprep.subr.bf16.mxu0 0
        %2236 = vmatpush1.bf16.msra.mxu0 0
        %2237 = vmatprep.subr.bf16.mxu0 0
        %2238 = vmatpush1.bf16.msra.mxu0 0
        %2239 = vmatprep.subr.bf16.mxu0 0
        %2240 = vmatpush1.bf16.msra.mxu0 0
        %2241 = vmatprep.subr.bf16.mxu0 0
        %2242 = vmatpush1.bf16.msra.mxu0 0
        %2243 = vmatprep.subr.bf16.mxu0 0
        %2244 = vmatpush1.bf16.msra.mxu0 0
        %2245 = vmatprep.subr.bf16.mxu0 0
        %2246 = vmatpush1.bf16.msra.mxu0 0
        %2247 = vmatprep.subr.bf16.mxu0 0
        %2248 = vmatpush1.bf16.msra.mxu0 0
        %2249 = vmatprep.subr.bf16.mxu0 0
        %2250 = vmatpush1.bf16.msra.mxu0 0
        %2251 = vmatprep.subr.bf16.mxu0 0
        %2252 = vmatpush1.bf16.msra.mxu0 0
        %2253 = vmatprep.subr.bf16.mxu0 0
        %2254 = vmatpush1.bf16.msra.mxu0 0
        %2255 = vmatprep.subr.bf16.mxu0 0
        %2256 = vmatpush1.bf16.msra.mxu0 0
        %2257 = vmatprep.subr.bf16.mxu0 0
        %2258 = vmatpush1.bf16.msra.mxu0 0
        %2259 = vmatprep.subr.bf16.mxu0 0
        %2260 = vmatpush1.bf16.msra.mxu0 0
        %2261 = vmatprep.mubr.bf16.mxu0 0
        %2262 = vmatmul.mubr.bf16.gmra.mrb[0].mxu0 %v2218
        %v2263 = vpop.f32.mrb[0].mxu0
        %v2264 = vadd.f32 0.0, %v2263
        %v2265 = vpop.f32.mrb[0].mxu0
        %v2266 = vpop.f32.mrb[0].mxu0
        %v2267 = vadd.f32 0.0, %v2266
        %v2268 = vpop.f32.mrb[0].mxu0
        %2269 = vmatprep.mubr.bf16.mxu0 0
        %2270 = vmatmul.mubr.bf16.gmra.mrb[0].mxu0 %v2221
        %v2271 = vpop.f32.mrb[0].mxu0
        %v2272 = vadd.f32 0.0, %v2271
        %v2273 = vpop.f32.mrb[0].mxu0
        %v2274 = vpop.f32.mrb[0].mxu0
        %v2275 = vadd.f32 0.0, %v2274
        %v2276 = vpop.f32.mrb[0].mxu0
        %2277 = vmatprep.mubr.bf16.mxu0 0
        %2278 = vmatmul.mubr.bf16.gmra.mrb[0].mxu0 %v2224
        %v2279 = vpop.f32.mrb[0].mxu0
        %v2280 = vadd.f32 0.0, %v2279
        %v2281 = vpop.f32.mrb[0].mxu0
        %v2282 = vpop.f32.mrb[0].mxu0
        %v2283 = vadd.f32 0.0, %v2282
        %v2284 = vpop.f32.mrb[0].mxu0
        %2285 = vmatprep.mubr.bf16.mxu0 0
        %2286 = vmatmul.mubr.bf16.gmra.mrb[0].mxu0 %v2227
        %v2287 = vpop.f32.mrb[0].mxu0
        %v2288 = vadd.f32 0.0, %v2287
        %v2289 = vpop.f32.mrb[0].mxu0
        %v2290 = vpop.f32.mrb[0].mxu0
        %v2291 = vadd.f32 0.0, %v2290
        %v2292 = vpop.f32.mrb[0].mxu0
        %2293 = vdwg.mxu0
        %v2294 = vadd.f32 %v2196, %v2264
        %v2295 = vadd.f32 %v2197, %v2267
        %v2296 = vadd.f32 %v2198, %v2272
        %v2297 = vadd.f32 %v2199, %v2275
        %v2298 = vadd.f32 %v2200, %v2280
        %v2299 = vadd.f32 %v2201, %v2283
        %v2300 = vadd.f32 %v2202, %v2288
        %v2301 = vadd.f32 %v2203, %v2291
        %v2302 = vpack.c.bf16 %v1573, %v1570
        %v2303 = vpack.c.bf16 %v1581, %v1578
        %v2304 = vpack.c.bf16 %v1589, %v1586
        %v2305 = vpack.c.bf16 %v1597, %v1594
        %s2306 = scalar_lea.vmem %s6, 56
        %v2307 = vld [vmem:[%s2306] sm:$0xf]
        %v2308 = vld [vmem:[%s2306 + $0x4] sm:$0xf]
        %v2311 = vunpack.c.l.b16 %v2307
        %v2312 = vunpack.c.l.b16 %v2308
        %v2313 = vpack.c.b16 %v2312, %v2311
        %v2316 = vsel %vm1651, %v2302, 0
        %v2319 = vsel %vm1651, %v2303, 0
        %v2322 = vsel %vm1651, %v2304, 0
        %v2325 = vsel %vm1651, %v2305, 0
        %2327 = vmatprep.subr.bf16.mxu0 0
        %2328 = vmatpush1.bf16.msra.mxu0 %v2313
        %2329 = vmatprep.subr.bf16.mxu0 0
        %2330 = vmatpush1.bf16.msra.mxu0 0
        %2331 = vmatprep.subr.bf16.mxu0 0
        %2332 = vmatpush1.bf16.msra.mxu0 0
        %2333 = vmatprep.subr.bf16.mxu0 0
        %2334 = vmatpush1.bf16.msra.mxu0 0
        %2335 = vmatprep.subr.bf16.mxu0 0
        %2336 = vmatpush1.bf16.msra.mxu0 0
        %2337 = vmatprep.subr.bf16.mxu0 0
        %2338 = vmatpush1.bf16.msra.mxu0 0
        %2339 = vmatprep.subr.bf16.mxu0 0
        %2340 = vmatpush1.bf16.msra.mxu0 0
        %2341 = vmatprep.subr.bf16.mxu0 0
        %2342 = vmatpush1.bf16.msra.mxu0 0
        %2343 = vmatprep.subr.bf16.mxu0 0
        %2344 = vmatpush1.bf16.msra.mxu0 0
        %2345 = vmatprep.subr.bf16.mxu0 0
        %2346 = vmatpush1.bf16.msra.mxu0 0
        %2347 = vmatprep.subr.bf16.mxu0 0
        %2348 = vmatpush1.bf16.msra.mxu0 0
        %2349 = vmatprep.subr.bf16.mxu0 0
        %2350 = vmatpush1.bf16.msra.mxu0 0
        %2351 = vmatprep.subr.bf16.mxu0 0
        %2352 = vmatpush1.bf16.msra.mxu0 0
        %2353 = vmatprep.subr.bf16.mxu0 0
        %2354 = vmatpush1.bf16.msra.mxu0 0
        %2355 = vmatprep.subr.bf16.mxu0 0
        %2356 = vmatpush1.bf16.msra.mxu0 0
        %2357 = vmatprep.subr.bf16.mxu0 0
        %2358 = vmatpush1.bf16.msra.mxu0 0
        %2359 = vmatprep.mubr.bf16.mxu0 0
        %2360 = vmatmul.mubr.bf16.gmra.mrb[0].mxu0 %v2316
        %v2361 = vpop.f32.mrb[0].mxu0
        %v2362 = vadd.f32 0.0, %v2361
        %v2363 = vpop.f32.mrb[0].mxu0
        %v2364 = vpop.f32.mrb[0].mxu0
        %v2365 = vadd.f32 0.0, %v2364
        %v2366 = vpop.f32.mrb[0].mxu0
        %2367 = vmatprep.mubr.bf16.mxu0 0
        %2368 = vmatmul.mubr.bf16.gmra.mrb[0].mxu0 %v2319
        %v2369 = vpop.f32.mrb[0].mxu0
        %v2370 = vadd.f32 0.0, %v2369
        %v2371 = vpop.f32.mrb[0].mxu0
        %v2372 = vpop.f32.mrb[0].mxu0
        %v2373 = vadd.f32 0.0, %v2372
        %v2374 = vpop.f32.mrb[0].mxu0
        %2375 = vmatprep.mubr.bf16.mxu0 0
        %2376 = vmatmul.mubr.bf16.gmra.mrb[0].mxu0 %v2322
        %v2377 = vpop.f32.mrb[0].mxu0
        %v2378 = vadd.f32 0.0, %v2377
        %v2379 = vpop.f32.mrb[0].mxu0
        %v2380 = vpop.f32.mrb[0].mxu0
        %v2381 = vadd.f32 0.0, %v2380
        %v2382 = vpop.f32.mrb[0].mxu0
        %2383 = vmatprep.mubr.bf16.mxu0 0
        %2384 = vmatmul.mubr.bf16.gmra.mrb[0].mxu0 %v2325
        %v2385 = vpop.f32.mrb[0].mxu0
        %v2386 = vadd.f32 0.0, %v2385
        %v2387 = vpop.f32.mrb[0].mxu0
        %v2388 = vpop.f32.mrb[0].mxu0
        %v2389 = vadd.f32 0.0, %v2388
        %v2390 = vpop.f32.mrb[0].mxu0
        %2391 = vdwg.mxu0
        %v2392 = vadd.f32 %v2294, %v2362
        %v2393 = vadd.f32 %v2295, %v2365
        %v2394 = vadd.f32 %v2296, %v2370
        %v2395 = vadd.f32 %v2297, %v2373
        %v2396 = vadd.f32 %v2298, %v2378
        %v2397 = vadd.f32 %v2299, %v2381
        %v2398 = vadd.f32 %v2300, %v2386
        %v2399 = vadd.f32 %v2301, %v2389
        %v2400 = vpack.c.bf16 %v1605, %v1602
        %v2401 = vpack.c.bf16 %v1613, %v1610
        %v2402 = vpack.c.bf16 %v1621, %v1618
        %v2403 = vpack.c.bf16 %v1629, %v1626
        %s2404 = scalar_lea.vmem %s6, 64
        %v2405 = vld [vmem:[%s2404] sm:$0xf]
        %v2406 = vld [vmem:[%s2404 + $0x4] sm:$0xf]
        %v2409 = vunpack.c.l.b16 %v2405
        %v2410 = vunpack.c.l.b16 %v2406
        %v2411 = vpack.c.b16 %v2410, %v2409
        %v2414 = vsel %vm1651, %v2400, 0
        %v2417 = vsel %vm1651, %v2401, 0
        %v2420 = vsel %vm1651, %v2402, 0
        %v2423 = vsel %vm1651, %v2403, 0
        %2425 = vmatprep.subr.bf16.mxu0 0
        %2426 = vmatpush1.bf16.msra.mxu0 %v2411
        %2427 = vmatprep.subr.bf16.mxu0 0
        %2428 = vmatpush1.bf16.msra.mxu0 0
        %2429 = vmatprep.subr.bf16.mxu0 0
        %2430 = vmatpush1.bf16.msra.mxu0 0
        %2431 = vmatprep.subr.bf16.mxu0 0
        %2432 = vmatpush1.bf16.msra.mxu0 0
        %2433 = vmatprep.subr.bf16.mxu0 0
        %2434 = vmatpush1.bf16.msra.mxu0 0
        %2435 = vmatprep.subr.bf16.mxu0 0
        %2436 = vmatpush1.bf16.msra.mxu0 0
        %2437 = vmatprep.subr.bf16.mxu0 0
        %2438 = vmatpush1.bf16.msra.mxu0 0
        %2439 = vmatprep.subr.bf16.mxu0 0
        %2440 = vmatpush1.bf16.msra.mxu0 0
        %2441 = vmatprep.subr.bf16.mxu0 0
        %2442 = vmatpush1.bf16.msra.mxu0 0
        %2443 = vmatprep.subr.bf16.mxu0 0
        %2444 = vmatpush1.bf16.msra.mxu0 0
        %2445 = vmatprep.subr.bf16.mxu0 0
        %2446 = vmatpush1.bf16.msra.mxu0 0
        %2447 = vmatprep.subr.bf16.mxu0 0
        %2448 = vmatpush1.bf16.msra.mxu0 0
        %2449 = vmatprep.subr.bf16.mxu0 0
        %2450 = vmatpush1.bf16.msra.mxu0 0
        %2451 = vmatprep.subr.bf16.mxu0 0
        %2452 = vmatpush1.bf16.msra.mxu0 0
        %2453 = vmatprep.subr.bf16.mxu0 0
        %2454 = vmatpush1.bf16.msra.mxu0 0
        %2455 = vmatprep.subr.bf16.mxu0 0
        %2456 = vmatpush1.bf16.msra.mxu0 0
        %2457 = vmatprep.mubr.bf16.mxu0 0
        %2458 = vmatmul.mubr.bf16.gmra.mrb[0].mxu0 %v2414
        %v2459 = vpop.f32.mrb[0].mxu0
        %v2460 = vadd.f32 0.0, %v2459
        %v2461 = vpop.f32.mrb[0].mxu0
        %v2462 = vpop.f32.mrb[0].mxu0
        %v2463 = vadd.f32 0.0, %v2462
        %v2464 = vpop.f32.mrb[0].mxu0
        %2465 = vmatprep.mubr.bf16.mxu0 0
        %2466 = vmatmul.mubr.bf16.gmra.mrb[0].mxu0 %v2417
        %v2467 = vpop.f32.mrb[0].mxu0
        %v2468 = vadd.f32 0.0, %v2467
        %v2469 = vpop.f32.mrb[0].mxu0
        %v2470 = vpop.f32.mrb[0].mxu0
        %v2471 = vadd.f32 0.0, %v2470
        %v2472 = vpop.f32.mrb[0].mxu0
        %2473 = vmatprep.mubr.bf16.mxu0 0
        %2474 = vmatmul.mubr.bf16.gmra.mrb[0].mxu0 %v2420
        %v2475 = vpop.f32.mrb[0].mxu0
        %v2476 = vadd.f32 0.0, %v2475
        %v2477 = vpop.f32.mrb[0].mxu0
        %v2478 = vpop.f32.mrb[0].mxu0
        %v2479 = vadd.f32 0.0, %v2478
        %v2480 = vpop.f32.mrb[0].mxu0
        %2481 = vmatprep.mubr.bf16.mxu0 0
        %2482 = vmatmul.mubr.bf16.gmra.mrb[0].mxu0 %v2423
        %v2483 = vpop.f32.mrb[0].mxu0
        %v2484 = vadd.f32 0.0, %v2483
        %v2485 = vpop.f32.mrb[0].mxu0
        %v2486 = vpop.f32.mrb[0].mxu0
        %v2487 = vadd.f32 0.0, %v2486
        %v2488 = vpop.f32.mrb[0].mxu0
        %2489 = vdwg.mxu0
        %v2490 = vadd.f32 %v2392, %v2460
        %v2491 = vadd.f32 %v2393, %v2463
        %v2492 = vadd.f32 %v2394, %v2468
        %v2493 = vadd.f32 %v2395, %v2471
        %v2494 = vadd.f32 %v2396, %v2476
        %v2495 = vadd.f32 %v2397, %v2479
        %v2496 = vadd.f32 %v2398, %v2484
        %v2497 = vadd.f32 %v2399, %v2487
        %v2498 = vld [vmem:[%s7] sm:$0x1]
        %v2500 = vlaneseq
        %v2501 = vshrl.u32 %v2500, 7
        %v2502 = vsub.s32 0, %v2501
        %v2503 = vrot.slane %v2498, %v2502
        %v2505 = vadd.f32 %v2490, %v2503
        %v2506 = vadd.f32 %v2491, %v2503
        %v2507 = vadd.f32 %v2492, %v2503
        %v2508 = vadd.f32 %v2493, %v2503
        %v2509 = vadd.f32 %v2494, %v2503
        %v2510 = vadd.f32 %v2495, %v2503
        %v2511 = vadd.f32 %v2496, %v2503
        %v2512 = vadd.f32 %v2497, %v2503
        %v2513 = vmax.f32 %v2505, 0.0
        %v2514 = vmax.f32 %v2506, 0.0
        %v2515 = vmax.f32 %v2507, 0.0
        %v2516 = vmax.f32 %v2508, 0.0
        %v2517 = vmax.f32 %v2509, 0.0
        %v2518 = vmax.f32 %v2510, 0.0
        %v2519 = vmax.f32 %v2511, 0.0
        %v2520 = vmax.f32 %v2512, 0.0
        %v2521 = vpack.c.bf16 %v2514, %v2513
        %v2522 = vpack.c.bf16 %v2516, %v2515
        %v2523 = vpack.c.bf16 %v2518, %v2517
        %v2524 = vpack.c.bf16 %v2520, %v2519
        %v2525 = vld [vmem:[%s8] sm:$0xf]
        %v2526 = vld [vmem:[%s8 + $0x4] sm:$0xf]
        %v2527 = vld [vmem:[%s9] sm:$0x1]
        %v2529 = vlaneseq
        %v2530 = vshrl.u32 %v2529, 7
        %v2531 = vsub.s32 0, %v2530
        %v2532 = vrot.slane %v2527, %v2531
        %v2536 = vunpack.c.l.b16 %v2525
        %v2537 = vunpack.c.l.b16 %v2526
        %v2538 = vpack.c.b16 %v2537, %v2536
        %v2541 = vsel %vm1651, %v2521, 0
        %v2544 = vsel %vm1651, %v2522, 0
        %v2547 = vsel %vm1651, %v2523, 0
        %v2550 = vsel %vm1651, %v2524, 0
        %2552 = vmatprep.subr.bf16.mxu0 0
        %2553 = vmatpush1.bf16.msra.mxu0 %v2538
        %2554 = vmatprep.subr.bf16.mxu0 0
        %2555 = vmatpush1.bf16.msra.mxu0 0
        %2556 = vmatprep.subr.bf16.mxu0 0
        %2557 = vmatpush1.bf16.msra.mxu0 0
        %2558 = vmatprep.subr.bf16.mxu0 0
        %2559 = vmatpush1.bf16.msra.mxu0 0
        %2560 = vmatprep.subr.bf16.mxu0 0
        %2561 = vmatpush1.bf16.msra.mxu0 0
        %2562 = vmatprep.subr.bf16.mxu0 0
        %2563 = vmatpush1.bf16.msra.mxu0 0
        %2564 = vmatprep.subr.bf16.mxu0 0
        %2565 = vmatpush1.bf16.msra.mxu0 0
        %2566 = vmatprep.subr.bf16.mxu0 0
        %2567 = vmatpush1.bf16.msra.mxu0 0
        %2568 = vmatprep.subr.bf16.mxu0 0
        %2569 = vmatpush1.bf16.msra.mxu0 0
        %2570 = vmatprep.subr.bf16.mxu0 0
        %2571 = vmatpush1.bf16.msra.mxu0 0
        %2572 = vmatprep.subr.bf16.mxu0 0
        %2573 = vmatpush1.bf16.msra.mxu0 0
        %2574 = vmatprep.subr.bf16.mxu0 0
        %2575 = vmatpush1.bf16.msra.mxu0 0
        %2576 = vmatprep.subr.bf16.mxu0 0
        %2577 = vmatpush1.bf16.msra.mxu0 0
        %2578 = vmatprep.subr.bf16.mxu0 0
        %2579 = vmatpush1.bf16.msra.mxu0 0
        %2580 = vmatprep.subr.bf16.mxu0 0
        %2581 = vmatpush1.bf16.msra.mxu0 0
        %2582 = vmatprep.subr.bf16.mxu0 0
        %2583 = vmatpush1.bf16.msra.mxu0 0
        %2584 = vmatprep.mubr.bf16.mxu0 0
        %2585 = vmatmul.mubr.bf16.gmra.mrb[0].mxu0 %v2541
        %v2586 = vpop.f32.mrb[0].mxu0
        %v2587 = vadd.f32 %v2532, %v2586
        %v2588 = vpop.f32.mrb[0].mxu0
        %v2589 = vpop.f32.mrb[0].mxu0
        %v2590 = vadd.f32 %v2532, %v2589
        %v2591 = vpop.f32.mrb[0].mxu0
        %2592 = vmatprep.mubr.bf16.mxu0 0
        %2593 = vmatmul.mubr.bf16.gmra.mrb[0].mxu0 %v2544
        %v2594 = vpop.f32.mrb[0].mxu0
        %v2595 = vadd.f32 %v2532, %v2594
        %v2596 = vpop.f32.mrb[0].mxu0
        %v2597 = vpop.f32.mrb[0].mxu0
        %v2598 = vadd.f32 %v2532, %v2597
        %v2599 = vpop.f32.mrb[0].mxu0
        %2600 = vmatprep.mubr.bf16.mxu0 0
        %2601 = vmatmul.mubr.bf16.gmra.mrb[0].mxu0 %v2547
        %v2602 = vpop.f32.mrb[0].mxu0
        %v2603 = vadd.f32 %v2532, %v2602
        %v2604 = vpop.f32.mrb[0].mxu0
        %v2605 = vpop.f32.mrb[0].mxu0
        %v2606 = vadd.f32 %v2532, %v2605
        %v2607 = vpop.f32.mrb[0].mxu0
        %2608 = vmatprep.mubr.bf16.mxu0 0
        %2609 = vmatmul.mubr.bf16.gmra.mrb[0].mxu0 %v2550
        %v2610 = vpop.f32.mrb[0].mxu0
        %v2611 = vadd.f32 %v2532, %v2610
        %v2612 = vpop.f32.mrb[0].mxu0
        %v2613 = vpop.f32.mrb[0].mxu0
        %v2614 = vadd.f32 %v2532, %v2613
        %v2615 = vpop.f32.mrb[0].mxu0
        %2616 = vdwg.mxu0
        %v2617 = vsel %vm621, %v2587, 0.0
        %v2618 = vsel %vm621, %v2590, 0.0
        %v2619 = vadd.f32 %v2617, %v2618
        %v2620 = vsel %vm621, %v2595, 0.0
        %v2621 = vadd.f32 %v2619, %v2620
        %v2622 = vsel %vm621, %v2598, 0.0
        %v2623 = vadd.f32 %v2621, %v2622
        %v2624 = vsel %vm621, %v2603, 0.0
        %v2625 = vadd.f32 %v2623, %v2624
        %v2626 = vsel %vm621, %v2606, 0.0
        %v2627 = vadd.f32 %v2625, %v2626
        %v2628 = vsel %vm621, %v2611, 0.0
        %v2629 = vadd.f32 %v2627, %v2628
        %v2630 = vsel %vm621, %v2614, 0.0
        %v2631 = vadd.f32 %v2629, %v2630
        %v2632 = vrot.slane %v2631, 4
        %v2633 = vadd.f32 %v2631, %v2632
        %v2634 = vrot.slane %v2633, 2
        %v2635 = vadd.f32 %v2633, %v2634
        %v2636 = vrot.slane %v2635, 1
        %v2637 = vadd.f32 %v2635, %v2636
        %v2638 = vrcp.pop 64.0
        %v2639 = vmul.f32 %v2637, %v2638
        %v2640 = vsel %vm621, %v2587, -inf
        %v2641 = vsel %vm621, %v2590, -inf
        %v2642 = vsel %vm621, %v2595, -inf
        %v2643 = vsel %vm621, %v2598, -inf
        %v2644 = vsel %vm621, %v2603, -inf
        %v2645 = vmax.f32 %v2640, %v2644
        %v2646 = vsel %vm621, %v2606, -inf
        %v2647 = vmax.f32 %v2641, %v2646
        %v2648 = vsel %vm621, %v2611, -inf
        %v2649 = vmax.f32 %v2642, %v2648
        %v2650 = vsel %vm621, %v2614, -inf
        %v2651 = vmax.f32 %v2643, %v2650
        %v2652 = vmax.f32 %v2645, %v2647
        %v2653 = vmax.f32 %v2649, %v2651
        %v2654 = vmax.f32 %v2652, %v2653
        %v2655 = vrot.slane %v2654, 4
        %v2656 = vmax.f32 %v2654, %v2655
        %v2657 = vrot.slane %v2656, 2
        %v2658 = vmax.f32 %v2656, %v2657
        %v2659 = vrot.slane %v2658, 1
        %v2660 = vmax.f32 %v2658, %v2659
        %v2661 = vpack.c.bf16 %v2639, %v2639
        %v2662 = vld [vmem:[%s10] sm:$0xf]
        %v2663 = vld [vmem:[%s10 + $0x4] sm:$0xf]
        %v2664 = vld [vmem:[%s10 + $0x8] sm:$0xf]
        %v2665 = vld [vmem:[%s10 + $0xc] sm:$0xf]
        %v2666 = vld [vmem:[%s10 + $0x10] sm:$0xf]
        %v2667 = vld [vmem:[%s10 + $0x14] sm:$0xf]
        %v2668 = vld [vmem:[%s10 + $0x18] sm:$0xf]
        %v2669 = vld [vmem:[%s10 + $0x1c] sm:$0xf]
        %v2678 = vunpack.c.l.b16 %v2662
        %v2679 = vunpack.c.l.b16 %v2663
        %v2680 = vunpack.c.l.b16 %v2664
        %v2681 = vunpack.c.l.b16 %v2665
        %v2682 = vunpack.c.l.b16 %v2666
        %v2683 = vunpack.c.l.b16 %v2667
        %v2684 = vunpack.c.l.b16 %v2668
        %v2685 = vunpack.c.l.b16 %v2669
        %v2686 = vpack.c.b16 %v2679, %v2678
        %v2687 = vpack.c.b16 %v2681, %v2680
        %v2688 = vpack.c.b16 %v2683, %v2682
        %v2689 = vpack.c.b16 %v2685, %v2684
        %v2695 = vsel %vm621, %v2661, 0
        %2697 = vmatprep.subr.bf16.mxu0 0
        %2698 = vmatpush1.bf16.msra.mxu0 %v2686
        %2699 = vmatprep.subr.bf16.mxu0 0
        %2700 = vmatpush1.bf16.msra.mxu0 %v2687
        %2701 = vmatprep.subr.bf16.mxu0 0
        %2702 = vmatpush1.bf16.msra.mxu0 %v2688
        %2703 = vmatprep.subr.bf16.mxu0 0
        %2704 = vmatpush1.bf16.msra.mxu0 %v2689
        %2705 = vmatprep.subr.bf16.mxu0 0
        %2706 = vmatpush1.bf16.msra.mxu0 0
        %2707 = vmatprep.subr.bf16.mxu0 0
        %2708 = vmatpush1.bf16.msra.mxu0 0
        %2709 = vmatprep.subr.bf16.mxu0 0
        %2710 = vmatpush1.bf16.msra.mxu0 0
        %2711 = vmatprep.subr.bf16.mxu0 0
        %2712 = vmatpush1.bf16.msra.mxu0 0
        %2713 = vmatprep.subr.bf16.mxu0 0
        %2714 = vmatpush1.bf16.msra.mxu0 0
        %2715 = vmatprep.subr.bf16.mxu0 0
        %2716 = vmatpush1.bf16.msra.mxu0 0
        %2717 = vmatprep.subr.bf16.mxu0 0
        %2718 = vmatpush1.bf16.msra.mxu0 0
        %2719 = vmatprep.subr.bf16.mxu0 0
        %2720 = vmatpush1.bf16.msra.mxu0 0
        %2721 = vmatprep.subr.bf16.mxu0 0
        %2722 = vmatpush1.bf16.msra.mxu0 0
        %2723 = vmatprep.subr.bf16.mxu0 0
        %2724 = vmatpush1.bf16.msra.mxu0 0
        %2725 = vmatprep.subr.bf16.mxu0 0
        %2726 = vmatpush1.bf16.msra.mxu0 0
        %2727 = vmatprep.subr.bf16.mxu0 0
        %2728 = vmatpush1.bf16.msra.mxu0 0
        %2729 = vmatprep.mubr.bf16.mxu0 0
        %2730 = vmatmul.mubr.bf16.gmra.mrb[0].mxu0 %v2695
        %v2731 = vpop.f32.mrb[0].mxu0
        %v2732 = vadd.f32 0.0, %v2731
        %v2733 = vpop.f32.mrb[0].mxu0
        %v2734 = vpop.f32.mrb[0].mxu0
        %v2735 = vpop.f32.mrb[0].mxu0
        %2736 = vdwg.mxu0
        %v2737 = vmax.f32 %v2732, 0.0
        %v2738 = vpack.c.bf16 %v2737, %v2737
        %v2739 = vld [vmem:[%s11] sm:$0x3]
        %v2740 = vpack.c.bf16 %v2660, %v2660
        %v2742 = vsel %vm621, %v2740, 0
        %2744 = vmatprep.subr.bf16.mxu0 0
        %2745 = vmatpush1.bf16.msra.mxu0 %v2686
        %2746 = vmatprep.subr.bf16.mxu0 0
        %2747 = vmatpush1.bf16.msra.mxu0 %v2687
        %2748 = vmatprep.subr.bf16.mxu0 0
        %2749 = vmatpush1.bf16.msra.mxu0 %v2688
        %2750 = vmatprep.subr.bf16.mxu0 0
        %2751 = vmatpush1.bf16.msra.mxu0 %v2689
        %2752 = vmatprep.subr.bf16.mxu0 0
        %2753 = vmatpush1.bf16.msra.mxu0 0
        %2754 = vmatprep.subr.bf16.mxu0 0
        %2755 = vmatpush1.bf16.msra.mxu0 0
        %2756 = vmatprep.subr.bf16.mxu0 0
        %2757 = vmatpush1.bf16.msra.mxu0 0
        %2758 = vmatprep.subr.bf16.mxu0 0
        %2759 = vmatpush1.bf16.msra.mxu0 0
        %2760 = vmatprep.subr.bf16.mxu0 0
        %2761 = vmatpush1.bf16.msra.mxu0 0
        %2762 = vmatprep.subr.bf16.mxu0 0
        %2763 = vmatpush1.bf16.msra.mxu0 0
        %2764 = vmatprep.subr.bf16.mxu0 0
        %2765 = vmatpush1.bf16.msra.mxu0 0
        %2766 = vmatprep.subr.bf16.mxu0 0
        %2767 = vmatpush1.bf16.msra.mxu0 0
        %2768 = vmatprep.subr.bf16.mxu0 0
        %2769 = vmatpush1.bf16.msra.mxu0 0
        %2770 = vmatprep.subr.bf16.mxu0 0
        %2771 = vmatpush1.bf16.msra.mxu0 0
        %2772 = vmatprep.subr.bf16.mxu0 0
        %2773 = vmatpush1.bf16.msra.mxu0 0
        %2774 = vmatprep.subr.bf16.mxu0 0
        %2775 = vmatpush1.bf16.msra.mxu0 0
        %2776 = vmatprep.mubr.bf16.mxu0 0
        %2777 = vmatmul.mubr.bf16.gmra.mrb[0].mxu0 %v2742
        %v2778 = vpop.f32.mrb[0].mxu0
        %v2779 = vadd.f32 0.0, %v2778
        %v2780 = vpop.f32.mrb[0].mxu0
        %v2781 = vpop.f32.mrb[0].mxu0
        %v2782 = vpop.f32.mrb[0].mxu0
        %2783 = vdwg.mxu0
        %v2784 = vmax.f32 %v2779, 0.0
        %v2785 = vpack.c.bf16 %v2784, %v2784
        %vm2786 = vcmask 31744
        %v2788 = vsel %vm2786, %v2785, 0
        %vm2790 = vcmask 1041408
        %v2792 = vsel %vm2790, %v2739, 0
        %2794 = vmatprep.subr.bf16.mxu0 0
        %2795 = vmatpush1.bf16.msra.mxu0 %v2792
        %2796 = vmatprep.subr.bf16.mxu0 0
        %2797 = vmatpush1.bf16.msra.mxu0 0
        %2798 = vmatprep.subr.bf16.mxu0 0
        %2799 = vmatpush1.bf16.msra.mxu0 0
        %2800 = vmatprep.subr.bf16.mxu0 0
        %2801 = vmatpush1.bf16.msra.mxu0 0
        %2802 = vmatprep.subr.bf16.mxu0 0
        %2803 = vmatpush1.bf16.msra.mxu0 0
        %2804 = vmatprep.subr.bf16.mxu0 0
        %2805 = vmatpush1.bf16.msra.mxu0 0
        %2806 = vmatprep.subr.bf16.mxu0 0
        %2807 = vmatpush1.bf16.msra.mxu0 0
        %2808 = vmatprep.subr.bf16.mxu0 0
        %2809 = vmatpush1.bf16.msra.mxu0 0
        %2810 = vmatprep.subr.bf16.mxu0 0
        %2811 = vmatpush1.bf16.msra.mxu0 0
        %2812 = vmatprep.subr.bf16.mxu0 0
        %2813 = vmatpush1.bf16.msra.mxu0 0
        %2814 = vmatprep.subr.bf16.mxu0 0
        %2815 = vmatpush1.bf16.msra.mxu0 0
        %2816 = vmatprep.subr.bf16.mxu0 0
        %2817 = vmatpush1.bf16.msra.mxu0 0
        %2818 = vmatprep.subr.bf16.mxu0 0
        %2819 = vmatpush1.bf16.msra.mxu0 0
        %2820 = vmatprep.subr.bf16.mxu0 0
        %2821 = vmatpush1.bf16.msra.mxu0 0
        %2822 = vmatprep.subr.bf16.mxu0 0
        %2823 = vmatpush1.bf16.msra.mxu0 0
        %2824 = vmatprep.subr.bf16.mxu0 0
        %2825 = vmatpush1.bf16.msra.mxu0 0
        %2826 = vmatprep.mubr.bf16.mxu0 0
        %2827 = vmatmul.mubr.bf16.gmra.mrb[0].mxu0 %v2788
        %v2828 = vpop.f32.mrb[0].mxu0
        %v2829 = vadd.f32 0.0, %v2828
        %v2830 = vpop.f32.mrb[0].mxu0
        %v2831 = vpop.f32.mrb[0].mxu0
        %v2832 = vpop.f32.mrb[0].mxu0
        %2833 = vdwg.mxu0
        %v2835 = vsel %vm2786, %v2738, 0
        %2837 = vmatprep.subr.bf16.mxu0 0
        %2838 = vmatpush1.bf16.msra.mxu0 %v2792
        %2839 = vmatprep.subr.bf16.mxu0 0
        %2840 = vmatpush1.bf16.msra.mxu0 0
        %2841 = vmatprep.subr.bf16.mxu0 0
        %2842 = vmatpush1.bf16.msra.mxu0 0
        %2843 = vmatprep.subr.bf16.mxu0 0
        %2844 = vmatpush1.bf16.msra.mxu0 0
        %2845 = vmatprep.subr.bf16.mxu0 0
        %2846 = vmatpush1.bf16.msra.mxu0 0
        %2847 = vmatprep.subr.bf16.mxu0 0
        %2848 = vmatpush1.bf16.msra.mxu0 0
        %2849 = vmatprep.subr.bf16.mxu0 0
        %2850 = vmatpush1.bf16.msra.mxu0 0
        %2851 = vmatprep.subr.bf16.mxu0 0
        %2852 = vmatpush1.bf16.msra.mxu0 0
        %2853 = vmatprep.subr.bf16.mxu0 0
        %2854 = vmatpush1.bf16.msra.mxu0 0
        %2855 = vmatprep.subr.bf16.mxu0 0
        %2856 = vmatpush1.bf16.msra.mxu0 0
        %2857 = vmatprep.subr.bf16.mxu0 0
        %2858 = vmatpush1.bf16.msra.mxu0 0
        %2859 = vmatprep.subr.bf16.mxu0 0
        %2860 = vmatpush1.bf16.msra.mxu0 0
        %2861 = vmatprep.subr.bf16.mxu0 0
        %2862 = vmatpush1.bf16.msra.mxu0 0
        %2863 = vmatprep.subr.bf16.mxu0 0
        %2864 = vmatpush1.bf16.msra.mxu0 0
        %2865 = vmatprep.subr.bf16.mxu0 0
        %2866 = vmatpush1.bf16.msra.mxu0 0
        %2867 = vmatprep.subr.bf16.mxu0 0
        %2868 = vmatpush1.bf16.msra.mxu0 0
        %2869 = vmatprep.mubr.bf16.mxu0 0
        %2870 = vmatmul.mubr.bf16.gmra.mrb[0].mxu0 %v2835
        %v2871 = vpop.f32.mrb[0].mxu0
        %v2872 = vadd.f32 %v2829, %v2871
        %v2873 = vpop.f32.mrb[0].mxu0
        %v2874 = vpop.f32.mrb[0].mxu0
        %v2875 = vpop.f32.mrb[0].mxu0
        %2876 = vdwg.mxu0
        %v2877 = vxor.u32 %v2872, 2147483648
        %v2878 = vmul.f32 %v2877, 1.442695
        %v2879 = vpow.pop %v2878
        %v2880 = vadd.f32 %v2879, 1.0
        %v2881 = vrcp.pop %v2880
        %v2882 = vmul.f32 1.0, %v2881
        %v2883 = vlaneseq
        %v2884 = vshrl.u32 %v2883, 7
        %v2885 = vsub.s32 0, %v2884
        %v2886 = vrot.slane %v2882, %v2885
        %v2887 = vmul.f32 %v2587, %v2886
        %v2888 = vmul.f32 %v2590, %v2886
        %v2889 = vmul.f32 %v2595, %v2886
        %v2890 = vmul.f32 %v2598, %v2886
        %v2891 = vmul.f32 %v2603, %v2886
        %v2892 = vmul.f32 %v2606, %v2886
        %v2893 = vmul.f32 %v2611, %v2886
        %v2894 = vmul.f32 %v2614, %v2886
        %v2895 = vsel %vm621, %v2887, 0.0
        %2896 = vadd.xlane.f32.xlu0 %v2895
        %v2897 = vpop.xlane.xlu0 %2896
        %v2898 = vsel %vm621, %v2888, 0.0
        %2899 = vadd.xlane.f32.xlu0 %v2898
        %v2900 = vpop.xlane.xlu0 %2899
        %v2901 = vsel %vm621, %v2889, 0.0
        %2902 = vadd.xlane.f32.xlu0 %v2901
        %v2903 = vpop.xlane.xlu0 %2902
        %v2904 = vsel %vm621, %v2890, 0.0
        %2905 = vadd.xlane.f32.xlu0 %v2904
        %v2906 = vpop.xlane.xlu0 %2905
        %v2907 = vsel %vm621, %v2891, 0.0
        %2908 = vadd.xlane.f32.xlu0 %v2907
        %v2909 = vpop.xlane.xlu0 %2908
        %v2910 = vsel %vm621, %v2892, 0.0
        %2911 = vadd.xlane.f32.xlu0 %v2910
        %v2912 = vpop.xlane.xlu0 %2911
        %v2913 = vsel %vm621, %v2893, 0.0
        %2914 = vadd.xlane.f32.xlu0 %v2913
        %v2915 = vpop.xlane.xlu0 %2914
        %v2916 = vsel %vm621, %v2894, 0.0
        %2917 = vadd.xlane.f32.xlu0 %v2916
        %v2918 = vpop.xlane.xlu0 %2917
        %v2919 = vmul.f32 %v2897, %v2638
        %v2920 = vmul.f32 %v2900, %v2638
        %v2921 = vmul.f32 %v2903, %v2638
        %v2922 = vmul.f32 %v2906, %v2638
        %v2923 = vmul.f32 %v2909, %v2638
        %v2924 = vmul.f32 %v2912, %v2638
        %v2925 = vmul.f32 %v2915, %v2638
        %v2926 = vmul.f32 %v2918, %v2638
        %v2927 = vsel %vm621, %v2887, -inf
        %2928 = vmax.xlane.f32.xlu0 %v2927
        %v2929 = vpop.xlane.xlu0 %2928
        %v2930 = vsel %vm621, %v2888, -inf
        %2931 = vmax.xlane.f32.xlu0 %v2930
        %v2932 = vpop.xlane.xlu0 %2931
        %v2933 = vsel %vm621, %v2889, -inf
        %2934 = vmax.xlane.f32.xlu0 %v2933
        %v2935 = vpop.xlane.xlu0 %2934
        %v2936 = vsel %vm621, %v2890, -inf
        %2937 = vmax.xlane.f32.xlu0 %v2936
        %v2938 = vpop.xlane.xlu0 %2937
        %v2939 = vsel %vm621, %v2891, -inf
        %2940 = vmax.xlane.f32.xlu0 %v2939
        %v2941 = vpop.xlane.xlu0 %2940
        %v2942 = vsel %vm621, %v2892, -inf
        %2943 = vmax.xlane.f32.xlu0 %v2942
        %v2944 = vpop.xlane.xlu0 %2943
        %v2945 = vsel %vm621, %v2893, -inf
        %2946 = vmax.xlane.f32.xlu0 %v2945
        %v2947 = vpop.xlane.xlu0 %2946
        %v2948 = vsel %vm621, %v2894, -inf
        %2949 = vmax.xlane.f32.xlu0 %v2948
        %v2950 = vpop.xlane.xlu0 %2949
        %v2951 = vld [vmem:[%s12] sm:$0xf]
        %v2952 = vld [vmem:[%s12 + $0x4] sm:$0xf]
        %v2953 = vld [vmem:[%s12 + $0x8] sm:$0xf]
        %v2954 = vld [vmem:[%s12 + $0xc] sm:$0xf]
        %v2955 = vld [vmem:[%s12 + $0x10] sm:$0xf]
        %v2956 = vld [vmem:[%s12 + $0x14] sm:$0xf]
        %v2957 = vld [vmem:[%s12 + $0x18] sm:$0xf]
        %v2958 = vld [vmem:[%s12 + $0x1c] sm:$0xf]
        %v2959 = vpack.c.bf16 %v2920, %v2919
        %v2960 = vpack.c.bf16 %v2922, %v2921
        %v2961 = vpack.c.bf16 %v2924, %v2923
        %v2962 = vpack.c.bf16 %v2926, %v2925
        %s2963 = scalar_lea.vmem %s12, 32
        %v2964 = vld [vmem:[%s2963] sm:$0xf]
        %v2965 = vld [vmem:[%s2963 + $0x4] sm:$0xf]
        %v2966 = vld [vmem:[%s2963 + $0x8] sm:$0xf]
        %v2967 = vld [vmem:[%s2963 + $0xc] sm:$0xf]
        %v2968 = vld [vmem:[%s2963 + $0x10] sm:$0xf]
        %v2969 = vld [vmem:[%s2963 + $0x14] sm:$0xf]
        %v2970 = vld [vmem:[%s2963 + $0x18] sm:$0xf]
        %v2971 = vld [vmem:[%s2963 + $0x1c] sm:$0xf]
        %v2972 = vpack.c.bf16 %v2932, %v2929
        %v2973 = vpack.c.bf16 %v2938, %v2935
        %v2974 = vpack.c.bf16 %v2944, %v2941
        %v2975 = vpack.c.bf16 %v2950, %v2947
        %v2984 = vunpack.c.l.b16 %v2964
        %v2985 = vunpack.c.l.b16 %v2965
        %v2986 = vunpack.c.l.b16 %v2966
        %v2987 = vunpack.c.l.b16 %v2967
        %v2988 = vunpack.c.l.b16 %v2968
        %v2989 = vunpack.c.l.b16 %v2969
        %v2990 = vunpack.c.l.b16 %v2970
        %v2991 = vunpack.c.l.b16 %v2971
        %v2992 = vpack.c.b16 %v2985, %v2984
        %v2993 = vpack.c.b16 %v2987, %v2986
        %v2994 = vpack.c.b16 %v2989, %v2988
        %v2995 = vpack.c.b16 %v2991, %v2990
        %v2997 = vsel %vm621, %v2992, 0
        %v3000 = vsel %vm621, %v2993, 0
        %v3003 = vsel %vm621, %v2994, 0
        %v3006 = vsel %vm621, %v2995, 0
        %3008 = vmatprep.subr.bf16.mxu0 0
        %3009 = vmatpush1.bf16.msra.mxu0 %v2972
        %3010 = vmatprep.subr.bf16.mxu0 0
        %3011 = vmatpush1.bf16.msra.mxu0 %v2973
        %3012 = vmatprep.subr.bf16.mxu0 0
        %3013 = vmatpush1.bf16.msra.mxu0 %v2974
        %3014 = vmatprep.subr.bf16.mxu0 0
        %3015 = vmatpush1.bf16.msra.mxu0 %v2975
        %3016 = vmatprep.subr.bf16.mxu0 0
        %3017 = vmatpush1.bf16.msra.mxu0 0
        %3018 = vmatprep.subr.bf16.mxu0 0
        %3019 = vmatpush1.bf16.msra.mxu0 0
        %3020 = vmatprep.subr.bf16.mxu0 0
        %3021 = vmatpush1.bf16.msra.mxu0 0
        %3022 = vmatprep.subr.bf16.mxu0 0
        %3023 = vmatpush1.bf16.msra.mxu0 0
        %3024 = vmatprep.subr.bf16.mxu0 0
        %3025 = vmatpush1.bf16.msra.mxu0 0
        %3026 = vmatprep.subr.bf16.mxu0 0
        %3027 = vmatpush1.bf16.msra.mxu0 0
        %3028 = vmatprep.subr.bf16.mxu0 0
        %3029 = vmatpush1.bf16.msra.mxu0 0
        %3030 = vmatprep.subr.bf16.mxu0 0
        %3031 = vmatpush1.bf16.msra.mxu0 0
        %3032 = vmatprep.subr.bf16.mxu0 0
        %3033 = vmatpush1.bf16.msra.mxu0 0
        %3034 = vmatprep.subr.bf16.mxu0 0
        %3035 = vmatpush1.bf16.msra.mxu0 0
        %3036 = vmatprep.subr.bf16.mxu0 0
        %3037 = vmatpush1.bf16.msra.mxu0 0
        %3038 = vmatprep.subr.bf16.mxu0 0
        %3039 = vmatpush1.bf16.msra.mxu0 0
        %3040 = vmatprep.mubr.bf16.mxu0 0
        %3041 = vmatmul.mubr.bf16.gmra.mrb[0].mxu0 %v2997
        %v3042 = vpop.f32.mrb[0].mxu0
        %v3043 = vadd.f32 0.0, %v3042
        %v3044 = vpop.f32.mrb[0].mxu0
        %v3045 = vpop.f32.mrb[0].mxu0
        %v3046 = vadd.f32 0.0, %v3045
        %v3047 = vpop.f32.mrb[0].mxu0
        %3048 = vmatprep.mubr.bf16.mxu0 0
        %3049 = vmatmul.mubr.bf16.gmra.mrb[0].mxu0 %v3000
        %v3050 = vpop.f32.mrb[0].mxu0
        %v3051 = vadd.f32 0.0, %v3050
        %v3052 = vpop.f32.mrb[0].mxu0
        %v3053 = vpop.f32.mrb[0].mxu0
        %v3054 = vadd.f32 0.0, %v3053
        %v3055 = vpop.f32.mrb[0].mxu0
        %3056 = vmatprep.mubr.bf16.mxu0 0
        %3057 = vmatmul.mubr.bf16.gmra.mrb[0].mxu0 %v3003
        %v3058 = vpop.f32.mrb[0].mxu0
        %v3059 = vadd.f32 0.0, %v3058
        %v3060 = vpop.f32.mrb[0].mxu0
        %v3061 = vpop.f32.mrb[0].mxu0
        %v3062 = vadd.f32 0.0, %v3061
        %v3063 = vpop.f32.mrb[0].mxu0
        %3064 = vmatprep.mubr.bf16.mxu0 0
        %3065 = vmatmul.mubr.bf16.gmra.mrb[0].mxu0 %v3006
        %v3066 = vpop.f32.mrb[0].mxu0
        %v3067 = vadd.f32 0.0, %v3066
        %v3068 = vpop.f32.mrb[0].mxu0
        %v3069 = vpop.f32.mrb[0].mxu0
        %v3070 = vadd.f32 0.0, %v3069
        %v3071 = vpop.f32.mrb[0].mxu0
        %3072 = vdwg.mxu0
        %v3081 = vunpack.c.l.b16 %v2951
        %v3082 = vunpack.c.l.b16 %v2952
        %v3083 = vunpack.c.l.b16 %v2953
        %v3084 = vunpack.c.l.b16 %v2954
        %v3085 = vunpack.c.l.b16 %v2955
        %v3086 = vunpack.c.l.b16 %v2956
        %v3087 = vunpack.c.l.b16 %v2957
        %v3088 = vunpack.c.l.b16 %v2958
        %v3089 = vpack.c.b16 %v3082, %v3081
        %v3090 = vpack.c.b16 %v3084, %v3083
        %v3091 = vpack.c.b16 %v3086, %v3085
        %v3092 = vpack.c.b16 %v3088, %v3087
        %v3094 = vsel %vm621, %v3089, 0
        %v3097 = vsel %vm621, %v3090, 0
        %v3100 = vsel %vm621, %v3091, 0
        %v3103 = vsel %vm621, %v3092, 0
        %3105 = vmatprep.subr.bf16.mxu0 0
        %3106 = vmatpush1.bf16.msra.mxu0 %v2959
        %3107 = vmatprep.subr.bf16.mxu0 0
        %3108 = vmatpush1.bf16.msra.mxu0 %v2960
        %3109 = vmatprep.subr.bf16.mxu0 0
        %3110 = vmatpush1.bf16.msra.mxu0 %v2961
        %3111 = vmatprep.subr.bf16.mxu0 0
        %3112 = vmatpush1.bf16.msra.mxu0 %v2962
        %3113 = vmatprep.subr.bf16.mxu0 0
        %3114 = vmatpush1.bf16.msra.mxu0 0
        %3115 = vmatprep.subr.bf16.mxu0 0
        %3116 = vmatpush1.bf16.msra.mxu0 0
        %3117 = vmatprep.subr.bf16.mxu0 0
        %3118 = vmatpush1.bf16.msra.mxu0 0
        %3119 = vmatprep.subr.bf16.mxu0 0
        %3120 = vmatpush1.bf16.msra.mxu0 0
        %3121 = vmatprep.subr.bf16.mxu0 0
        %3122 = vmatpush1.bf16.msra.mxu0 0
        %3123 = vmatprep.subr.bf16.mxu0 0
        %3124 = vmatpush1.bf16.msra.mxu0 0
        %3125 = vmatprep.subr.bf16.mxu0 0
        %3126 = vmatpush1.bf16.msra.mxu0 0
        %3127 = vmatprep.subr.bf16.mxu0 0
        %3128 = vmatpush1.bf16.msra.mxu0 0
        %3129 = vmatprep.subr.bf16.mxu0 0
        %3130 = vmatpush1.bf16.msra.mxu0 0
        %3131 = vmatprep.subr.bf16.mxu0 0
        %3132 = vmatpush1.bf16.msra.mxu0 0
        %3133 = vmatprep.subr.bf16.mxu0 0
        %3134 = vmatpush1.bf16.msra.mxu0 0
        %3135 = vmatprep.subr.bf16.mxu0 0
        %3136 = vmatpush1.bf16.msra.mxu0 0
        %3137 = vmatprep.mubr.bf16.mxu0 0
        %3138 = vmatmul.mubr.bf16.gmra.mrb[0].mxu0 %v3094
        %v3139 = vpop.f32.mrb[0].mxu0
        %v3140 = vadd.f32 %v3043, %v3139
        %v3141 = vpop.f32.mrb[0].mxu0
        %v3142 = vpop.f32.mrb[0].mxu0
        %v3143 = vadd.f32 %v3046, %v3142
        %v3144 = vpop.f32.mrb[0].mxu0
        %3145 = vmatprep.mubr.bf16.mxu0 0
        %3146 = vmatmul.mubr.bf16.gmra.mrb[0].mxu0 %v3097
        %v3147 = vpop.f32.mrb[0].mxu0
        %v3148 = vadd.f32 %v3051, %v3147
        %v3149 = vpop.f32.mrb[0].mxu0
        %v3150 = vpop.f32.mrb[0].mxu0
        %v3151 = vadd.f32 %v3054, %v3150
        %v3152 = vpop.f32.mrb[0].mxu0
        %3153 = vmatprep.mubr.bf16.mxu0 0
        %3154 = vmatmul.mubr.bf16.gmra.mrb[0].mxu0 %v3100
        %v3155 = vpop.f32.mrb[0].mxu0
        %v3156 = vadd.f32 %v3059, %v3155
        %v3157 = vpop.f32.mrb[0].mxu0
        %v3158 = vpop.f32.mrb[0].mxu0
        %v3159 = vadd.f32 %v3062, %v3158
        %v3160 = vpop.f32.mrb[0].mxu0
        %3161 = vmatprep.mubr.bf16.mxu0 0
        %3162 = vmatmul.mubr.bf16.gmra.mrb[0].mxu0 %v3103
        %v3163 = vpop.f32.mrb[0].mxu0
        %v3164 = vadd.f32 %v3067, %v3163
        %v3165 = vpop.f32.mrb[0].mxu0
        %v3166 = vpop.f32.mrb[0].mxu0
        %v3167 = vadd.f32 %v3070, %v3166
        %v3168 = vpop.f32.mrb[0].mxu0
        %3169 = vdwg.mxu0
        %v3170 = vxor.u32 %v3140, 2147483648
        %v3171 = vxor.u32 %v3143, 2147483648
        %v3172 = vxor.u32 %v3148, 2147483648
        %v3173 = vxor.u32 %v3151, 2147483648
        %v3174 = vxor.u32 %v3156, 2147483648
        %v3175 = vxor.u32 %v3159, 2147483648
        %v3176 = vxor.u32 %v3164, 2147483648
        %v3177 = vxor.u32 %v3167, 2147483648
        %v3178 = vmul.f32 %v3170, 1.442695
        %v3179 = vpow.pop %v3178
        %v3180 = vmul.f32 %v3171, 1.442695
        %v3181 = vpow.pop %v3180
        %v3182 = vmul.f32 %v3172, 1.442695
        %v3183 = vpow.pop %v3182
        %v3184 = vmul.f32 %v3173, 1.442695
        %v3185 = vpow.pop %v3184
        %v3186 = vmul.f32 %v3174, 1.442695
        %v3187 = vpow.pop %v3186
        %v3188 = vmul.f32 %v3175, 1.442695
        %v3189 = vpow.pop %v3188
        %v3190 = vmul.f32 %v3176, 1.442695
        %v3191 = vpow.pop %v3190
        %v3192 = vmul.f32 %v3177, 1.442695
        %v3193 = vpow.pop %v3192
        %v3194 = vadd.f32 %v3179, 1.0
        %v3195 = vadd.f32 %v3181, 1.0
        %v3196 = vadd.f32 %v3183, 1.0
        %v3197 = vadd.f32 %v3185, 1.0
        %v3198 = vadd.f32 %v3187, 1.0
        %v3199 = vadd.f32 %v3189, 1.0
        %v3200 = vadd.f32 %v3191, 1.0
        %v3201 = vadd.f32 %v3193, 1.0
        %v3202 = vrcp.pop %v3194
        %v3203 = vmul.f32 1.0, %v3202
        %v3204 = vrcp.pop %v3195
        %v3205 = vmul.f32 1.0, %v3204
        %v3206 = vrcp.pop %v3196
        %v3207 = vmul.f32 1.0, %v3206
        %v3208 = vrcp.pop %v3197
        %v3209 = vmul.f32 1.0, %v3208
        %v3210 = vrcp.pop %v3198
        %v3211 = vmul.f32 1.0, %v3210
        %v3212 = vrcp.pop %v3199
        %v3213 = vmul.f32 1.0, %v3212
        %v3214 = vrcp.pop %v3200
        %v3215 = vmul.f32 1.0, %v3214
        %v3216 = vrcp.pop %v3201
        %v3217 = vmul.f32 1.0, %v3216
        %v3218 = vld [vmem:[%s532] sm:$0xff]
        %v3219 = vld [vmem:[%s532 + $0x8] sm:$0xff]
        %v3220 = vld [vmem:[%s532 + $0x10] sm:$0xff]
        %v3221 = vld [vmem:[%s532 + $0x18] sm:$0xff]
        %v3222 = vld [vmem:[%s532 + $0x20] sm:$0xff]
        %v3223 = vld [vmem:[%s532 + $0x28] sm:$0xff]
        %v3224 = vld [vmem:[%s532 + $0x30] sm:$0xff]
        %v3225 = vld [vmem:[%s532 + $0x38] sm:$0xff]
        %v3226 = vld [vmem:[%s527] sm:$0xff]
        %v3227 = vld [vmem:[%s527 + $0x8] sm:$0xff]
        %v3228 = vld [vmem:[%s527 + $0x10] sm:$0xff]
        %v3229 = vld [vmem:[%s527 + $0x18] sm:$0xff]
        %v3230 = vld [vmem:[%s527 + $0x20] sm:$0xff]
        %v3231 = vld [vmem:[%s527 + $0x28] sm:$0xff]
        %v3232 = vld [vmem:[%s527 + $0x30] sm:$0xff]
        %v3233 = vld [vmem:[%s527 + $0x38] sm:$0xff]
        %v3234 = vpack.c.bf16 %v3227, %v3226
        %v3235 = vpack.c.bf16 %v3229, %v3228
        %v3236 = vpack.c.bf16 %v3231, %v3230
        %v3237 = vpack.c.bf16 %v3233, %v3232
        %v3238 = vld [vmem:[%s13] sm:$0xf]
        %v3239 = vld [vmem:[%s13 + $0x4] sm:$0xf]
        %v3240 = vld [vmem:[%s13 + $0x8] sm:$0xf]
        %v3241 = vld [vmem:[%s13 + $0xc] sm:$0xf]
        %v3242 = vld [vmem:[%s13 + $0x10] sm:$0xf]
        %v3243 = vld [vmem:[%s13 + $0x14] sm:$0xf]
        %v3244 = vld [vmem:[%s13 + $0x18] sm:$0xf]
        %v3245 = vld [vmem:[%s13 + $0x1c] sm:$0xf]
        %v3246 = vld [vmem:[%s14] sm:$0x1]
        %v3248 = vlaneseq
        %v3249 = vshrl.u32 %v3248, 7
        %v3250 = vsub.s32 0, %v3249
        %v3251 = vrot.slane %v3246, %v3250
        %v3261 = vunpack.c.l.b16 %v3238
        %v3262 = vunpack.c.l.b16 %v3239
        %v3263 = vunpack.c.l.b16 %v3240
        %v3264 = vunpack.c.l.b16 %v3241
        %v3265 = vunpack.c.l.b16 %v3242
        %v3266 = vunpack.c.l.b16 %v3243
        %v3267 = vunpack.c.l.b16 %v3244
        %v3268 = vunpack.c.l.b16 %v3245
        %v3269 = vpack.c.b16 %v3262, %v3261
        %v3270 = vpack.c.b16 %v3264, %v3263
        %v3271 = vpack.c.b16 %v3266, %v3265
        %v3272 = vpack.c.b16 %v3268, %v3267
        %v3278 = vsel %vm621, %v3234, 0
        %v3281 = vsel %vm621, %v3235, 0
        %v3284 = vsel %vm621, %v3236, 0
        %v3287 = vsel %vm621, %v3237, 0
        %3289 = vmatprep.subr.bf16.mxu0 0
        %3290 = vmatpush1.bf16.msra.mxu0 %v3269
        %3291 = vmatprep.subr.bf16.mxu0 0
        %3292 = vmatpush1.bf16.msra.mxu0 %v3270
        %3293 = vmatprep.subr.bf16.mxu0 0
        %3294 = vmatpush1.bf16.msra.mxu0 %v3271
        %3295 = vmatprep.subr.bf16.mxu0 0
        %3296 = vmatpush1.bf16.msra.mxu0 %v3272
        %3297 = vmatprep.subr.bf16.mxu0 0
        %3298 = vmatpush1.bf16.msra.mxu0 0
        %3299 = vmatprep.subr.bf16.mxu0 0
        %3300 = vmatpush1.bf16.msra.mxu0 0
        %3301 = vmatprep.subr.bf16.mxu0 0
        %3302 = vmatpush1.bf16.msra.mxu0 0
        %3303 = vmatprep.subr.bf16.mxu0 0
        %3304 = vmatpush1.bf16.msra.mxu0 0
        %3305 = vmatprep.subr.bf16.mxu0 0
        %3306 = vmatpush1.bf16.msra.mxu0 0
        %3307 = vmatprep.subr.bf16.mxu0 0
        %3308 = vmatpush1.bf16.msra.mxu0 0
        %3309 = vmatprep.subr.bf16.mxu0 0
        %3310 = vmatpush1.bf16.msra.mxu0 0
        %3311 = vmatprep.subr.bf16.mxu0 0
        %3312 = vmatpush1.bf16.msra.mxu0 0
        %3313 = vmatprep.subr.bf16.mxu0 0
        %3314 = vmatpush1.bf16.msra.mxu0 0
        %3315 = vmatprep.subr.bf16.mxu0 0
        %3316 = vmatpush1.bf16.msra.mxu0 0
        %3317 = vmatprep.subr.bf16.mxu0 0
        %3318 = vmatpush1.bf16.msra.mxu0 0
        %3319 = vmatprep.subr.bf16.mxu0 0
        %3320 = vmatpush1.bf16.msra.mxu0 0
        %3321 = vmatprep.mubr.bf16.mxu0 0
        %3322 = vmatmul.mubr.bf16.gmra.mrb[0].mxu0 %v3278
        %v3323 = vpop.f32.mrb[0].mxu0
        %v3324 = vadd.f32 %v3251, %v3323
        %v3325 = vpop.f32.mrb[0].mxu0
        %v3326 = vpop.f32.mrb[0].mxu0
        %v3327 = vadd.f32 %v3251, %v3326
        %v3328 = vpop.f32.mrb[0].mxu0
        %3329 = vmatprep.mubr.bf16.mxu0 0
        %3330 = vmatmul.mubr.bf16.gmra.mrb[0].mxu0 %v3281
        %v3331 = vpop.f32.mrb[0].mxu0
        %v3332 = vadd.f32 %v3251, %v3331
        %v3333 = vpop.f32.mrb[0].mxu0
        %v3334 = vpop.f32.mrb[0].mxu0
        %v3335 = vadd.f32 %v3251, %v3334
        %v3336 = vpop.f32.mrb[0].mxu0
        %3337 = vmatprep.mubr.bf16.mxu0 0
        %3338 = vmatmul.mubr.bf16.gmra.mrb[0].mxu0 %v3284
        %v3339 = vpop.f32.mrb[0].mxu0
        %v3340 = vadd.f32 %v3251, %v3339
        %v3341 = vpop.f32.mrb[0].mxu0
        %v3342 = vpop.f32.mrb[0].mxu0
        %v3343 = vadd.f32 %v3251, %v3342
        %v3344 = vpop.f32.mrb[0].mxu0
        %3345 = vmatprep.mubr.bf16.mxu0 0
        %3346 = vmatmul.mubr.bf16.gmra.mrb[0].mxu0 %v3287
        %v3347 = vpop.f32.mrb[0].mxu0
        %v3348 = vadd.f32 %v3251, %v3347
        %v3349 = vpop.f32.mrb[0].mxu0
        %v3350 = vpop.f32.mrb[0].mxu0
        %v3351 = vadd.f32 %v3251, %v3350
        %v3352 = vpop.f32.mrb[0].mxu0
        %3353 = vdwg.mxu0
        %3355 = vset.pattern.permute.xlu0 0
        %3356 = vperm.xlu0 %3355, %v3203
        %v3357 = vpop.permute.xlu0 %3356
        %3360 = vset.pattern.permute.xlu0 0
        %3361 = vperm.xlu0 %3360, %v3205
        %v3362 = vpop.permute.xlu0 %3361
        %3365 = vset.pattern.permute.xlu0 0
        %3366 = vperm.xlu0 %3365, %v3207
        %v3367 = vpop.permute.xlu0 %3366
        %3370 = vset.pattern.permute.xlu0 0
        %3371 = vperm.xlu0 %3370, %v3209
        %v3372 = vpop.permute.xlu0 %3371
        %3375 = vset.pattern.permute.xlu0 0
        %3376 = vperm.xlu0 %3375, %v3211
        %v3377 = vpop.permute.xlu0 %3376
        %3380 = vset.pattern.permute.xlu0 0
        %3381 = vperm.xlu0 %3380, %v3213
        %v3382 = vpop.permute.xlu0 %3381
        %3385 = vset.pattern.permute.xlu0 0
        %3386 = vperm.xlu0 %3385, %v3215
        %v3387 = vpop.permute.xlu0 %3386
        %3390 = vset.pattern.permute.xlu0 0
        %3391 = vperm.xlu0 %3390, %v3217
        %v3392 = vpop.permute.xlu0 %3391
        %v3394 = vmul.f32 %v2887, %v3357
        %v3395 = vmul.f32 %v2888, %v3362
        %v3396 = vmul.f32 %v2889, %v3367
        %v3397 = vmul.f32 %v2890, %v3372
        %v3398 = vmul.f32 %v2891, %v3377
        %v3399 = vmul.f32 %v2892, %v3382
        %v3400 = vmul.f32 %v2893, %v3387
        %v3401 = vmul.f32 %v2894, %v3392
        %3403 = vset.pattern.permute.xlu0 0
        %3404 = vperm.xlu0 %3403, %v3218
        %v3405 = vpop.permute.xlu0 %3404
        %3408 = vset.pattern.permute.xlu0 0
        %3409 = vperm.xlu0 %3408, %v3219
        %v3410 = vpop.permute.xlu0 %3409
        %3413 = vset.pattern.permute.xlu0 0
        %3414 = vperm.xlu0 %3413, %v3220
        %v3415 = vpop.permute.xlu0 %3414
        %3418 = vset.pattern.permute.xlu0 0
        %3419 = vperm.xlu0 %3418, %v3221
        %v3420 = vpop.permute.xlu0 %3419
        %3423 = vset.pattern.permute.xlu0 0
        %3424 = vperm.xlu0 %3423, %v3222
        %v3425 = vpop.permute.xlu0 %3424
        %3428 = vset.pattern.permute.xlu0 0
        %3429 = vperm.xlu0 %3428, %v3223
        %v3430 = vpop.permute.xlu0 %3429
        %3433 = vset.pattern.permute.xlu0 0
        %3434 = vperm.xlu0 %3433, %v3224
        %v3435 = vpop.permute.xlu0 %3434
        %3438 = vset.pattern.permute.xlu0 0
        %3439 = vperm.xlu0 %3438, %v3225
        %v3440 = vpop.permute.xlu0 %3439
        %v3442 = vmul.f32 %v2887, %v3405
        %v3443 = vmul.f32 %v2888, %v3410
        %v3444 = vmul.f32 %v2889, %v3415
        %v3445 = vmul.f32 %v2890, %v3420
        %v3446 = vmul.f32 %v2891, %v3425
        %v3447 = vmul.f32 %v2892, %v3430
        %v3448 = vmul.f32 %v2893, %v3435
        %v3449 = vmul.f32 %v2894, %v3440
        %3458 = vrot.lane.b32.xlu0 %v3442, 64
        %v3459 = vpop.permute.xlu0 %3458
        %3460 = vrot.lane.b32.xlu0 %v3443, 64
        %v3461 = vpop.permute.xlu0 %3460
        %3462 = vrot.lane.b32.xlu0 %v3444, 64
        %v3463 = vpop.permute.xlu0 %3462
        %3464 = vrot.lane.b32.xlu0 %v3445, 64
        %v3465 = vpop.permute.xlu0 %3464
        %3466 = vrot.lane.b32.xlu0 %v3446, 64
        %v3467 = vpop.permute.xlu0 %3466
        %3468 = vrot.lane.b32.xlu0 %v3447, 64
        %v3469 = vpop.permute.xlu0 %3468
        %3470 = vrot.lane.b32.xlu0 %v3448, 64
        %v3471 = vpop.permute.xlu0 %3470
        %3472 = vrot.lane.b32.xlu0 %v3449, 64
        %v3473 = vpop.permute.xlu0 %3472
        %v3482 = vsel %vm621, %v3394, %v3459
        %v3483 = vsel %vm621, %v3395, %v3461
        %v3484 = vsel %vm621, %v3396, %v3463
        %v3485 = vsel %vm621, %v3397, %v3465
        %v3486 = vsel %vm621, %v3398, %v3467
        %v3487 = vsel %vm621, %v3399, %v3469
        %v3488 = vsel %vm621, %v3400, %v3471
        %v3489 = vsel %vm621, %v3401, %v3473
        %v3490 = vadd.f32 %v3482, %v3324
        %v3491 = vadd.f32 %v3483, %v3327
        %v3492 = vadd.f32 %v3484, %v3332
        %v3493 = vadd.f32 %v3485, %v3335
        %v3494 = vadd.f32 %v3486, %v3340
        %v3495 = vadd.f32 %v3487, %v3343
        %v3496 = vadd.f32 %v3488, %v3348
        %v3497 = vadd.f32 %v3489, %v3351
        %v3498 = vmax.f32 %v3490, 0.0
        %v3499 = vmax.f32 %v3491, 0.0
        %v3500 = vmax.f32 %v3492, 0.0
        %v3501 = vmax.f32 %v3493, 0.0
        %v3502 = vmax.f32 %v3494, 0.0
        %v3503 = vmax.f32 %v3495, 0.0
        %v3504 = vmax.f32 %v3496, 0.0
        %v3505 = vmax.f32 %v3497, 0.0
        %3506 = vst [vmem:[%s517] sm:$0xff] %v3498
        %3507 = vst [vmem:[%s517 + $0x8] sm:$0xff] %v3499
        %3508 = vst [vmem:[%s517 + $0x10] sm:$0xff] %v3500
        %3509 = vst [vmem:[%s517 + $0x18] sm:$0xff] %v3501
        %3510 = vst [vmem:[%s517 + $0x20] sm:$0xff] %v3502
        %3511 = vst [vmem:[%s517 + $0x28] sm:$0xff] %v3503
        %3512 = vst [vmem:[%s517 + $0x30] sm:$0xff] %v3504
        %3513 = vst [vmem:[%s517 + $0x38] sm:$0xff] %v3505
        %s3514 = sand.u32 %s367, 1
        %s3515 = scalar_lea.sflag [#allocation3], %s3514
        %s3516 = sand.u32 %s367, 1
        %s3517 = smul.addr %s3516, 64
        %s3518 = scalar_lea.vmem [#allocation2], %s3517
        // Predicated region
        $region81: #{tpu_custom_call.1} parent=79 // pred_check
          %p3519 = pneg %p377
        $region82: #{tpu_custom_call.1} parent=79 // pred_check_branch
          %3521 = sbr.rel (%p3519) target = $region84
        $region83: #{tpu_custom_call.1} parent=79 // pred_region
          %s3523 = ssub.s32 1024, 1024
          %3524 = vsyncadd %s3515, %s3523
          %s3525 = smul.addr %s29, 8
          %s3526 = smul.addr %s3525, 128
          %s3527 = scalar_lea.hbm %s15, %s3526
          %s3528 = sshll.u32 %s3518, 4
          %s3529 = int_to_ptr.vmem [resolvable:$true] %s3528
          %3534 = dma.vmem_to_hbm [thread:$0]  %s3529, 1024, %s3527, %s3515, 128, 128, 8
        $region84: #{tpu_custom_call.1} parent=79 // pred_fallthru
          _
      $region80: #{tpu_custom_call.1} parent=5 // pred_fallthru
        _
      %p3535 = scmp.le.s32.totalorder 2, %s24
      // Predicated region
      $region85: #{tpu_custom_call.1} parent=5 // pred_check
        %p3536 = pneg %p3535
      $region86: #{tpu_custom_call.1} parent=5 // pred_check_branch
        %3538 = sbr.rel (%p3536) target = $region88
      $region87: #{tpu_custom_call.1} parent=5 // pred_region
        %s3539 = ssub.s32 %s24, 2
        // Predicated region
        $region89: #{tpu_custom_call.1} parent=87 // pred_check
          %p3540 = pneg %p383
        $region90: #{tpu_custom_call.1} parent=87 // pred_check_branch
          %3542 = sbr.rel (%p3540) target = $region92
        $region91: #{tpu_custom_call.1} parent=87 // pred_region
          %s3543 = sand.u32 %s368, 1
          %s3544 = scalar_lea.sflag [#allocation3], %s3543
          %s3545 = sand.u32 %s368, 1
          %s3546 = smul.addr %s3545, 64
          %s3547 = scalar_lea.vmem [#allocation2], %s3546
          %3548 = dma.done %s3544, 1024
        $region92: #{tpu_custom_call.1} parent=87 // pred_fallthru
          _
      $region88: #{tpu_custom_call.1} parent=5 // pred_fallthru
        _
    $region6: #{tpu_custom_call.1} parent=1 // loop_footer
      %s28 = sadd.s32 1, %s24
    $region7: #{tpu_custom_call.1} parent=1 // loop_footer_branch
      %23 = sbr.rel target = $region3
    $region8: #{tpu_custom_call.1} parent=1 // loop_exit
      _
    %3549 = vsyncpa [#allocation3], 1
    %s3550 = scalar_lea.sflag [#allocation3], 1
    %3551 = vsyncpa %s3550, 1

</llo_original>
